<compile_context>
chip_gen: v5e
topology: v5e:2x2
jax: 0.10.0
libtpu: 0.0.40
codegen_flags: <defaults>
</compile_context>

<pallas_src>
import numpy as np
import jax
import jax.numpy as jnp
from jax.experimental import pallas as pl
from jax.experimental.pallas import tpu as pltpu

# ---------------- configuration (small, consistent with the module) ----------------
VOCAB = 50
EMBED_DIM = 32          # Conv1d "length" axis
MAX_LEN = 8             # Conv1d "channel" axis (as in the PyTorch module)
LINEAR_SIZE = 128
WINDOWS = (3, 4, 5)
OUTPUT_SIZE = 4
BATCH = 2

KMAX = max(WINDOWS)                               # widest conv window (5)
NF3 = LINEAR_SIZE * len(WINDOWS)                  # fused filter axis (384) -- lane dense
CK = KMAX * MAX_LEN                               # fused contraction axis (40)
# zero-padded embedding-length rows: must cover EMBED_DIM + KMAX - 1 taps, mult. of 8
L_PAD = ((EMBED_DIM + KMAX - 1 + 7) // 8) * 8     # 40
B_TILE_MAX = 128                                  # VMEM-safe tile on v7x (64 MiB VMEM)


def _round_up(x, m):
    return ((x + m - 1) // m) * m


def _textcnn_kernel(ids_ref, emb_ref, w_ref, b_ref, mask_ref, wdt_ref, bd_ref, out_ref):
    """Fused gather + conv(all windows, 1 matmul) + bias/ReLU + masked max-pool + dense + sigmoid."""
    bt = out_ref.shape[0]                         # batch tile (static)
    rows = ids_ref.shape[0]                       # bt * MAX_LEN

    # ---- 1. embedding gather via one-hot matmul (bf16 operands, batch on sublanes) -
    ids = ids_ref[...]                                                     # (bt*C, 1) int32
    viota = jax.lax.broadcasted_iota(jnp.int32, (rows, VOCAB), 1)
    onehot = (viota == ids).astype(jnp.bfloat16)                           # (bt*C, V)
    g2 = jnp.dot(onehot, emb_ref[...],
                 preferred_element_type=jnp.float32)                       # (bt*C, L_PAD)

    # ---- 2. single relayout + KMAX shifted sublane slices -> im2col LHS ------------
    # g3[b, l, ch] = emb[token(b, ch), l]  (rows l >= EMBED_DIM are zero padding)
    g3 = g2.reshape(bt, MAX_LEN, L_PAD).transpose(0, 2, 1).astype(jnp.bfloat16)
    taps = [g3[:, j:j + EMBED_DIM, :] for j in range(KMAX)]                # KMAX x (bt,32,C)
    lhs = jnp.concatenate(taps, axis=2).reshape(bt * EMBED_DIM, CK)        # (bt*32, CK) bf16

    # ---- 3. one conv matmul for all 3 windows (f32 accumulate), bias + ReLU --------
    conv = jnp.dot(lhs, w_ref[...], preferred_element_type=jnp.float32)    # (bt*32, 3F)
    act = jnp.maximum(conv + b_ref[...], 0.0)

    # ---- 4. zero-mask invalid positions (ReLU>=0 so 0-mask == -inf mask), max-pool -
    act3 = act.reshape(bt, EMBED_DIM, NF3) * mask_ref[...]                 # (bt, 32, 3F)
    pooled = jnp.max(act3, axis=1)                                         # (bt, 3F)

    # ---- 5. dense (pre-transposed weight) + sigmoid --------------------------------
    logits = jnp.dot(pooled.astype(jnp.bfloat16), wdt_ref[...],
                     preferred_element_type=jnp.float32) + bd_ref[...]     # (bt, OUT)
    out_ref[...] = jax.nn.sigmoid(logits).astype(out_ref.dtype)


def _prepare_params(params):
    """One-time parameter re-layout for the kernel (would be folded into param loading)."""
    emb = params["embedding"].astype(jnp.float32)                          # (V, EMBED_DIM)
    emb_pad = jnp.zeros((VOCAB, L_PAD), jnp.float32).at[:, :EMBED_DIM].set(emb)
    emb_pad = emb_pad.astype(jnp.bfloat16)                                 # bf16 gather operand

    w_blocks, b_blocks = [], []
    for k in WINDOWS:
        w = params[f"w{k}"]                                                # (F, C, k)
        w = jnp.pad(w, ((0, 0), (0, 0), (0, KMAX - k)))                    # zero-pad taps to KMAX
        # rows ordered j*C + ch to match the kernel's im2col lane order
        w_blocks.append(jnp.transpose(w, (2, 1, 0)).reshape(CK, LINEAR_SIZE))
        b_blocks.append(params[f"b{k}"])
    w_cat = jnp.concatenate(w_blocks, axis=1).astype(jnp.bfloat16)         # (CK, 3F)
    b_cat = jnp.concatenate(b_blocks, axis=1).astype(jnp.float32)          # (1, 3F)

    # per-window valid-position 0/1 mask for the global max-pool
    pos = np.arange(EMBED_DIM)[:, None]
    vlen = np.concatenate([np.full(LINEAR_SIZE, EMBED_DIM - k + 1) for k in WINDOWS])
    mask = jnp.asarray((pos < vlen[None, :]).astype(np.float32))           # (32, 3F)

    wdt = params["wd"].T.astype(jnp.bfloat16)                              # (3F, OUT)
    bd = params["bd"].astype(jnp.float32)                                  # (1, OUT)
    return emb_pad, w_cat, b_cat, mask, wdt, bd


def textcnn_forward(sentence, params):
    """Fused forward: embedding gather + 3x Conv1d/ReLU + global max-pool + Linear + Sigmoid."""
    emb_pad, w_cat, b_cat, mask, wdt, bd = _prepare_params(params)
    batch = sentence.shape[0]

    # Batch tile: multiple of 16 (so bt*MAX_LEN is a multiple of 128), capped at 128
    # for v7x VMEM headroom (raise to 256-512 on v5e/v6e if desired).  Tail padded
    # with token 0 and sliced off after the call; >=2 parallel steps when batch>=256.
    b_tile = min(B_TILE_MAX, _round_up(batch, 16))
    padded_batch = _round_up(batch, b_tile)
    grid = (padded_batch // b_tile,)

    sent = sentence.astype(jnp.int32)
    if padded_batch != batch:
        sent = jnp.pad(sent, ((0, padded_batch - batch), (0, 0)))
    ids = sent.reshape(padded_batch * MAX_LEN, 1)          # batch-major rows (b*C + ch)

    flops = 2 * padded_batch * (MAX_LEN * VOCAB * L_PAD
                                + EMBED_DIM * CK * NF3
                                + NF3 * OUTPUT_SIZE)
    bytes_accessed = (ids.size * 4 + emb_pad.size * 2 + w_cat.size * 2 + b_cat.size * 4
                      + mask.size * 4 + wdt.size * 2 + bd.size * 4
                      + padded_batch * OUTPUT_SIZE * 4)

    out = pl.pallas_call(
        _textcnn_kernel,
        out_shape=jax.ShapeDtypeStruct((padded_batch, OUTPUT_SIZE), jnp.float32),
        grid=grid,
        in_specs=[
            pl.BlockSpec((b_tile * MAX_LEN, 1), lambda i: (i, 0)),   # token ids (int32)
            pl.BlockSpec((VOCAB, L_PAD), lambda i: (0, 0)),          # emb, zero-padded cols (bf16)
            pl.BlockSpec((CK, NF3), lambda i: (0, 0)),               # fused conv weights (bf16)
            pl.BlockSpec((1, NF3), lambda i: (0, 0)),                # fused conv bias (f32)
            pl.BlockSpec((EMBED_DIM, NF3), lambda i: (0, 0)),        # pool validity mask (f32)
            pl.BlockSpec((NF3, OUTPUT_SIZE), lambda i: (0, 0)),      # dense weight^T (bf16)
            pl.BlockSpec((1, OUTPUT_SIZE), lambda i: (0, 0)),        # dense bias (f32)
        ],
        out_specs=pl.BlockSpec((b_tile, OUTPUT_SIZE), lambda i: (i, 0)),
        compiler_params=pltpu.CompilerParams(
            dimension_semantics=("parallel",),
            vmem_limit_bytes=48 * 1024 * 1024),
        cost_estimate=pl.CostEstimate(flops=flops,
                                      transcendentals=padded_batch * OUTPUT_SIZE,
                                      bytes_accessed=bytes_accessed),
    )(ids, emb_pad, w_cat, b_cat, mask, wdt, bd)
    return out[:batch]


def _init_params(key):
    """Deterministic synthetic parameters, PyTorch-default-ish uniform bounds."""
    ks = jax.random.split(key, 10)
    params = {}
    params["embedding"] = jax.random.normal(ks[0], (VOCAB, EMBED_DIM), jnp.float32)

    for k, kw, kb in zip(WINDOWS, ks[1:4], ks[4:7]):
        bound = 1.0 / np.sqrt(MAX_LEN * k)
        params[f"w{k}"] = jax.random.uniform(
            kw, (LINEAR_SIZE, MAX_LEN, k), jnp.float32, -bound, bound)
        params[f"b{k}"] = jax.random.uniform(
            kb, (1, LINEAR_SIZE), jnp.float32, -bound, bound)

    fan_in = LINEAR_SIZE * len(WINDOWS)
    bound = 1.0 / np.sqrt(fan_in)
    params["wd"] = jax.random.uniform(
        ks[7], (OUTPUT_SIZE, fan_in), jnp.float32, -bound, bound)
    params["bd"] = jax.random.uniform(
        ks[8], (1, OUTPUT_SIZE), jnp.float32, -bound, bound)
    return params


def _reference_forward(sentence, params):
    """Pure-JAX f32 reference mirroring the PyTorch forward exactly."""
    x = params["embedding"][sentence].astype(jnp.float32)   # (B, MAX_LEN, EMBED_DIM)
    pooled = []
    for k in WINDOWS:
        w, b = params[f"w{k}"], params[f"b{k}"]
        l_out = EMBED_DIM - k + 1
        acc = jnp.zeros((x.shape[0], l_out, LINEAR_SIZE), jnp.float32)
        for j in range(k):
            acc = acc + jnp.einsum("bcl,fc->blf", x[:, :, j:j + l_out], w[:, :, j])
        acc = jax.nn.relu(acc + b[:, None, :])
        pooled.append(jnp.max(acc, axis=1))
    dense_in = jnp.concatenate(pooled, axis=1)
    return jax.nn.sigmoid(dense_in @ params["wd"].T + params["bd"])


if __name__ == "__main__":
    key = jax.random.PRNGKey(0)
    k_params, k_sent = jax.random.split(key)
    params = _init_params(k_params)
    sentence = jax.random.randint(k_sent, (BATCH, MAX_LEN), 0, VOCAB, dtype=jnp.int32)

    fwd = jax.jit(textcnn_forward)
    out = jax.block_until_ready(fwd(sentence, params))
    ref = jax.block_until_ready(_reference_forward(sentence, params))

    assert out.shape == (BATCH, OUTPUT_SIZE), out.shape
    # bf16 matmul operands with f32 accumulation -> loosened tolerance vs the f32 reference.
    np.testing.assert_allclose(np.asarray(out), np.asarray(ref), rtol=2e-2, atol=2e-2)
    print("KERNEL_OK")
</pallas_src>

<mosaic_0001>
module attributes {stable_mosaic.version = 11 : i64} {
  func.func @_textcnn_kernel(%arg0: i32, %arg1: memref<128x1xi32, #tpu.memory_space<vmem>>, %arg2: memref<50x40xbf16, #tpu.memory_space<vmem>>, %arg3: memref<40x384xbf16, #tpu.memory_space<vmem>>, %arg4: memref<1x384xf32, #tpu.memory_space<vmem>>, %arg5: memref<32x384xf32, #tpu.memory_space<vmem>>, %arg6: memref<384x4xbf16, #tpu.memory_space<vmem>>, %arg7: memref<1x4xf32, #tpu.memory_space<vmem>>, %arg8: memref<16x4xf32, #tpu.memory_space<vmem>>) attributes {dimension_semantics = [#tpu.dimension_semantics<parallel>], iteration_bounds = array<i64: 1>, scalar_prefetch = 0 : i64, scratch_operands = 0 : i64, tpu.core_type = #tpu.core_type<tc>, window_params = [{transform_indices = @transform_0, window_bounds = array<i64: 128, 1>}, {pipeline_mode = #tpu.pipeline_mode<synchronous>, transform_indices = @transform_1, window_bounds = array<i64: 50, 40>}, {pipeline_mode = #tpu.pipeline_mode<synchronous>, transform_indices = @transform_2, window_bounds = array<i64: 40, 384>}, {pipeline_mode = #tpu.pipeline_mode<synchronous>, transform_indices = @transform_3, window_bounds = array<i64: 1, 384>}, {pipeline_mode = #tpu.pipeline_mode<synchronous>, transform_indices = @transform_4, window_bounds = array<i64: 32, 384>}, {pipeline_mode = #tpu.pipeline_mode<synchronous>, transform_indices = @transform_5, window_bounds = array<i64: 384, 4>}, {pipeline_mode = #tpu.pipeline_mode<synchronous>, transform_indices = @transform_6, window_bounds = array<i64: 1, 4>}, {transform_indices = @transform_7, window_bounds = array<i64: 16, 4>}]} {
    %c0 = arith.constant 0 : index
    %c0_0 = arith.constant 0 : index
    %0 = vector.load %arg1[%c0, %c0_0] : memref<128x1xi32, #tpu.memory_space<vmem>>, vector<128x1xi32>
    %1 = tpu.iota {dimensions = array<i32: 1>} : vector<128x50xi32>
    %2 = vector.broadcast %0 : vector<128x1xi32> to vector<128x50xi32>
    %3 = arith.cmpi eq, %1, %2 : vector<128x50xi32>
    %4 = arith.extui %3 : vector<128x50xi1> to vector<128x50xi32>
    %5 = arith.sitofp %4 : vector<128x50xi32> to vector<128x50xf32>
    %6 = arith.truncf %5 : vector<128x50xf32> to vector<128x50xbf16>
    %c0_1 = arith.constant 0 : index
    %c0_2 = arith.constant 0 : index
    %7 = vector.load %arg2[%c0_1, %c0_2] : memref<50x40xbf16, #tpu.memory_space<vmem>>, vector<50x40xbf16>
    %cst = arith.constant dense<0.000000e+00> : vector<128x40xf32>
    %8 = tpu.matmul %6, %7, %cst {dimension_numbers = #tpu.dot_dimension_numbers<[1], [0], [0], [1], [0, 0, 1, 1], [], []>} : vector<128x50xbf16>, vector<50x40xbf16>, vector<128x40xf32> -> vector<128x40xf32>
    %9 = vector.shape_cast %8 : vector<128x40xf32> to vector<16x8x40xf32>
    %10 = tpu.transpose %9, [0, 2, 1] : vector<16x8x40xf32> -> vector<16x40x8xf32>
    %11 = arith.truncf %10 : vector<16x40x8xf32> to vector<16x40x8xbf16>
    %12 = vector.extract_strided_slice %11 {offsets = [0, 0, 0], sizes = [16, 32, 8], strides = [1, 1, 1]} : vector<16x40x8xbf16> to vector<16x32x8xbf16>
    %13 = vector.extract_strided_slice %11 {offsets = [0, 1, 0], sizes = [16, 32, 8], strides = [1, 1, 1]} : vector<16x40x8xbf16> to vector<16x32x8xbf16>
    %14 = vector.extract_strided_slice %11 {offsets = [0, 2, 0], sizes = [16, 32, 8], strides = [1, 1, 1]} : vector<16x40x8xbf16> to vector<16x32x8xbf16>
    %15 = vector.extract_strided_slice %11 {offsets = [0, 3, 0], sizes = [16, 32, 8], strides = [1, 1, 1]} : vector<16x40x8xbf16> to vector<16x32x8xbf16>
    %16 = vector.extract_strided_slice %11 {offsets = [0, 4, 0], sizes = [16, 32, 8], strides = [1, 1, 1]} : vector<16x40x8xbf16> to vector<16x32x8xbf16>
    %17 = tpu.concatenate %12, %13, %14, %15, %16 in 2 : vector<16x32x8xbf16>, vector<16x32x8xbf16>, vector<16x32x8xbf16>, vector<16x32x8xbf16>, vector<16x32x8xbf16> -> vector<16x32x40xbf16>
    %18 = vector.shape_cast %17 : vector<16x32x40xbf16> to vector<512x40xbf16>
    %c0_3 = arith.constant 0 : index
    %c0_4 = arith.constant 0 : index
    %19 = vector.load %arg3[%c0_3, %c0_4] : memref<40x384xbf16, #tpu.memory_space<vmem>>, vector<40x384xbf16>
    %cst_5 = arith.constant dense<0.000000e+00> : vector<512x384xf32>
    %20 = tpu.matmul %18, %19, %cst_5 {dimension_numbers = #tpu.dot_dimension_numbers<[1], [0], [0], [1], [0, 0, 1, 1], [], []>} : vector<512x40xbf16>, vector<40x384xbf16>, vector<512x384xf32> -> vector<512x384xf32>
    %c0_6 = arith.constant 0 : index
    %c0_7 = arith.constant 0 : index
    %21 = vector.load %arg4[%c0_6, %c0_7] : memref<1x384xf32, #tpu.memory_space<vmem>>, vector<1x384xf32>
    %22 = vector.broadcast %21 : vector<1x384xf32> to vector<512x384xf32>
    %23 = arith.addf %20, %22 : vector<512x384xf32>
    %cst_8 = arith.constant 0.000000e+00 : f32
    %24 = vector.broadcast %cst_8 : f32 to vector<512x384xf32>
    %25 = arith.maximumf %23, %24 : vector<512x384xf32>
    %26 = vector.shape_cast %25 : vector<512x384xf32> to vector<16x32x384xf32>
    %c0_9 = arith.constant 0 : index
    %c0_10 = arith.constant 0 : index
    %27 = vector.load %arg5[%c0_9, %c0_10] : memref<32x384xf32, #tpu.memory_space<vmem>>, vector<32x384xf32>
    %28 = vector.shape_cast %27 : vector<32x384xf32> to vector<1x32x384xf32>
    %29 = vector.broadcast %28 : vector<1x32x384xf32> to vector<16x32x384xf32>
    %30 = arith.mulf %26, %29 : vector<16x32x384xf32>
    %cst_11 = arith.constant dense<0xFF800000> : vector<16x384xf32>
    %31 = vector.multi_reduction <maximumf>, %30, %cst_11 [1] : vector<16x32x384xf32> to vector<16x384xf32>
    %32 = arith.truncf %31 : vector<16x384xf32> to vector<16x384xbf16>
    %c0_12 = arith.constant 0 : index
    %c0_13 = arith.constant 0 : index
    %33 = vector.load %arg6[%c0_12, %c0_13] : memref<384x4xbf16, #tpu.memory_space<vmem>>, vector<384x4xbf16>
    %cst_14 = arith.constant dense<0.000000e+00> : vector<16x4xf32>
    %34 = tpu.matmul %32, %33, %cst_14 {dimension_numbers = #tpu.dot_dimension_numbers<[1], [0], [0], [1], [0, 0, 1, 1], [], []>} : vector<16x384xbf16>, vector<384x4xbf16>, vector<16x4xf32> -> vector<16x4xf32>
    %c0_15 = arith.constant 0 : index
    %c0_16 = arith.constant 0 : index
    %35 = vector.load %arg7[%c0_15, %c0_16] : memref<1x4xf32, #tpu.memory_space<vmem>>, vector<1x4xf32>
    %36 = vector.broadcast %35 : vector<1x4xf32> to vector<16x4xf32>
    %37 = arith.addf %34, %36 : vector<16x4xf32>
    %38 = arith.negf %37 : vector<16x4xf32>
    %39 = math.exp %38 : vector<16x4xf32>
    %cst_17 = arith.constant 1.000000e+00 : f32
    %40 = vector.broadcast %cst_17 : f32 to vector<16x4xf32>
    %41 = arith.addf %40, %39 : vector<16x4xf32>
    %42 = arith.divf %40, %41 : vector<16x4xf32>
    %c0_18 = arith.constant 0 : index
    %c0_19 = arith.constant 0 : index
    %43 = vector.load %arg8[%c0_18, %c0_19] : memref<16x4xf32, #tpu.memory_space<vmem>>, vector<16x4xf32>
    tpu.vector_store %arg8[%c0_18, %c0_19], %42 {strides = array<i32>} : memref<16x4xf32, #tpu.memory_space<vmem>>, vector<16x4xf32>,
    return
  }
  func.func @transform_0(%arg0: i32) -> (i32, i32) {
    %c0_i32 = arith.constant 0 : i32
    %c0_i32_0 = arith.constant 0 : i32
    return %arg0, %c0_i32 : i32, i32
  }
  func.func @transform_1(%arg0: i32) -> (i32, i32) {
    %c0_i32 = arith.constant 0 : i32
    %c0_i32_0 = arith.constant 0 : i32
    %c0_i32_1 = arith.constant 0 : i32
    return %c0_i32, %c0_i32_0 : i32, i32
  }
  func.func @transform_2(%arg0: i32) -> (i32, i32) {
    %c0_i32 = arith.constant 0 : i32
    %c0_i32_0 = arith.constant 0 : i32
    %c0_i32_1 = arith.constant 0 : i32
    return %c0_i32, %c0_i32_0 : i32, i32
  }
  func.func @transform_3(%arg0: i32) -> (i32, i32) {
    %c0_i32 = arith.constant 0 : i32
    %c0_i32_0 = arith.constant 0 : i32
    %c0_i32_1 = arith.constant 0 : i32
    return %c0_i32, %c0_i32_0 : i32, i32
  }
  func.func @transform_4(%arg0: i32) -> (i32, i32) {
    %c0_i32 = arith.constant 0 : i32
    %c0_i32_0 = arith.constant 0 : i32
    %c0_i32_1 = arith.constant 0 : i32
    return %c0_i32, %c0_i32_0 : i32, i32
  }
  func.func @transform_5(%arg0: i32) -> (i32, i32) {
    %c0_i32 = arith.constant 0 : i32
    %c0_i32_0 = arith.constant 0 : i32
    %c0_i32_1 = arith.constant 0 : i32
    return %c0_i32, %c0_i32_0 : i32, i32
  }
  func.func @transform_6(%arg0: i32) -> (i32, i32) {
    %c0_i32 = arith.constant 0 : i32
    %c0_i32_0 = arith.constant 0 : i32
    %c0_i32_1 = arith.constant 0 : i32
    return %c0_i32, %c0_i32_0 : i32, i32
  }
  func.func @transform_7(%arg0: i32) -> (i32, i32) {
    %c0_i32 = arith.constant 0 : i32
    %c0_i32_0 = arith.constant 0 : i32
    return %arg0, %c0_i32 : i32, i32
  }
}

</mosaic_0001>

<llo_original>
// kernel: textcnn_forward.1
$region0: #{textcnn_forward.1}
  #allocation0 [shape = 'u32[]', space=smem, size = 0x4, offset = 0x4, fixed_abs, tag = 'smem constant byte address 0x4 - core index']
  #allocation1 [shape = 'u32[72,128]{1,0:T(1,128)}', space=vmem, size = 0x9000, scoped, tag = 'internal scratch']
  %s0 = inlined_call_operand.vmem [shape: s32[128,1], index: 0, kind: input, shape index: {}]
  %s1 = inlined_call_operand.vmem [shape: bf16[50,40], index: 1, kind: input, shape index: {}]
  %s2 = inlined_call_operand.vmem [shape: bf16[40,384], index: 2, kind: input, shape index: {}]
  %s3 = inlined_call_operand.vmem [shape: f32[1,384], index: 3, kind: input, shape index: {}]
  %s4 = inlined_call_operand.vmem [shape: f32[32,384], index: 4, kind: input, shape index: {}]
  %s5 = inlined_call_operand.vmem [shape: bf16[384,4], index: 5, kind: input, shape index: {}]
  %s6 = inlined_call_operand.vmem [shape: f32[1,4], index: 6, kind: input, shape index: {}]
  %s7 = inlined_call_operand.vmem [shape: f32[16,4], index: 7, kind: output, shape index: {}]
  %s8 = sld [smem:[#allocation0]]
  $region38: #{textcnn_forward.1} parent=0
    _
  %s10 = ssub.s32 1, %s8
  %s11 = scalar_select 0, %s10, %s8
  // Predicated region
  $region2: #{textcnn_forward.1} parent=0 // pred_check
    _
  $region3: #{textcnn_forward.1} parent=0 // pred_check_branch
    %13 = sbr.rel (0) target = $region5
  $region4: #{textcnn_forward.1} parent=0 // pred_region
    _
  $region5: #{textcnn_forward.1} parent=0 // pred_fallthru
    _
  // Predicated region
  $region6: #{textcnn_forward.1} parent=0 // pred_check
    _
  $region7: #{textcnn_forward.1} parent=0 // pred_check_branch
    %15 = sbr.rel (0) target = $region9
  $region8: #{textcnn_forward.1} parent=0 // pred_region
    _
  $region9: #{textcnn_forward.1} parent=0 // pred_fallthru
    _
  // Predicated region
  $region10: #{textcnn_forward.1} parent=0 // pred_check
    _
  $region11: #{textcnn_forward.1} parent=0 // pred_check_branch
    %17 = sbr.rel (0) target = $region13
  $region12: #{textcnn_forward.1} parent=0 // pred_region
    _
  $region13: #{textcnn_forward.1} parent=0 // pred_fallthru
    _
  // Predicated region
  $region14: #{textcnn_forward.1} parent=0 // pred_check
    _
  $region15: #{textcnn_forward.1} parent=0 // pred_check_branch
    %19 = sbr.rel (0) target = $region17
  $region16: #{textcnn_forward.1} parent=0 // pred_region
    _
  $region17: #{textcnn_forward.1} parent=0 // pred_fallthru
    _
  // Predicated region
  $region18: #{textcnn_forward.1} parent=0 // pred_check
    _
  $region19: #{textcnn_forward.1} parent=0 // pred_check_branch
    %21 = sbr.rel (0) target = $region21
  $region20: #{textcnn_forward.1} parent=0 // pred_region
    _
  $region21: #{textcnn_forward.1} parent=0 // pred_fallthru
    _
  // Predicated region
  $region22: #{textcnn_forward.1} parent=0 // pred_check
    _
  $region23: #{textcnn_forward.1} parent=0 // pred_check_branch
    %23 = sbr.rel (0) target = $region25
  $region24: #{textcnn_forward.1} parent=0 // pred_region
    _
  $region25: #{textcnn_forward.1} parent=0 // pred_fallthru
    _
  // Predicated region
  $region26: #{textcnn_forward.1} parent=0 // pred_check
    _
  $region27: #{textcnn_forward.1} parent=0 // pred_check_branch
    %25 = sbr.rel (0) target = $region29
  $region28: #{textcnn_forward.1} parent=0 // pred_region
    _
  $region29: #{textcnn_forward.1} parent=0 // pred_fallthru
    _
  %v27 = vld [vmem:[%s0] sm:$0xff]
  %v28 = vld [vmem:[%s0 + $0x8] sm:$0xff]
  %v29 = vld [vmem:[%s0 + $0x10] sm:$0xff]
  %v30 = vld [vmem:[%s0 + $0x18] sm:$0xff]
  %v31 = vld [vmem:[%s0 + $0x20] sm:$0xff]
  %v32 = vld [vmem:[%s0 + $0x28] sm:$0xff]
  %v33 = vld [vmem:[%s0 + $0x30] sm:$0xff]
  %v34 = vld [vmem:[%s0 + $0x38] sm:$0xff]
  %v35 = vld [vmem:[%s0 + $0x40] sm:$0xff]
  %v36 = vld [vmem:[%s0 + $0x48] sm:$0xff]
  %v37 = vld [vmem:[%s0 + $0x50] sm:$0xff]
  %v38 = vld [vmem:[%s0 + $0x58] sm:$0xff]
  %v39 = vld [vmem:[%s0 + $0x60] sm:$0xff]
  %v40 = vld [vmem:[%s0 + $0x68] sm:$0xff]
  %v41 = vld [vmem:[%s0 + $0x70] sm:$0xff]
  %v42 = vld [vmem:[%s0 + $0x78] sm:$0xff]
  %v43 = vlaneseq
  %v44 = vand.u32 %v43, 127
  %45 = vset.pattern.permute.xlu0 0
  %46 = vperm.xlu0 %45, %v27
  %v47 = vpop.permute.xlu0 %46
  %48 = vset.pattern.permute.xlu0 0
  %49 = vperm.xlu0 %48, %v28
  %v50 = vpop.permute.xlu0 %49
  %51 = vset.pattern.permute.xlu0 0
  %52 = vperm.xlu0 %51, %v29
  %v53 = vpop.permute.xlu0 %52
  %54 = vset.pattern.permute.xlu0 0
  %55 = vperm.xlu0 %54, %v30
  %v56 = vpop.permute.xlu0 %55
  %57 = vset.pattern.permute.xlu0 0
  %58 = vperm.xlu0 %57, %v31
  %v59 = vpop.permute.xlu0 %58
  %60 = vset.pattern.permute.xlu0 0
  %61 = vperm.xlu0 %60, %v32
  %v62 = vpop.permute.xlu0 %61
  %63 = vset.pattern.permute.xlu0 0
  %64 = vperm.xlu0 %63, %v33
  %v65 = vpop.permute.xlu0 %64
  %66 = vset.pattern.permute.xlu0 0
  %67 = vperm.xlu0 %66, %v34
  %v68 = vpop.permute.xlu0 %67
  %69 = vset.pattern.permute.xlu0 0
  %70 = vperm.xlu0 %69, %v35
  %v71 = vpop.permute.xlu0 %70
  %72 = vset.pattern.permute.xlu0 0
  %73 = vperm.xlu0 %72, %v36
  %v74 = vpop.permute.xlu0 %73
  %75 = vset.pattern.permute.xlu0 0
  %76 = vperm.xlu0 %75, %v37
  %v77 = vpop.permute.xlu0 %76
  %78 = vset.pattern.permute.xlu0 0
  %79 = vperm.xlu0 %78, %v38
  %v80 = vpop.permute.xlu0 %79
  %81 = vset.pattern.permute.xlu0 0
  %82 = vperm.xlu0 %81, %v39
  %v83 = vpop.permute.xlu0 %82
  %84 = vset.pattern.permute.xlu0 0
  %85 = vperm.xlu0 %84, %v40
  %v86 = vpop.permute.xlu0 %85
  %87 = vset.pattern.permute.xlu0 0
  %88 = vperm.xlu0 %87, %v41
  %v89 = vpop.permute.xlu0 %88
  %90 = vset.pattern.permute.xlu0 0
  %91 = vperm.xlu0 %90, %v42
  %v92 = vpop.permute.xlu0 %91
  %vm93 = vcmp.eq.s32.totalorder %v44, %v47
  %vm94 = vcmp.eq.s32.totalorder %v44, %v50
  %vm95 = vcmp.eq.s32.totalorder %v44, %v53
  %vm96 = vcmp.eq.s32.totalorder %v44, %v56
  %vm97 = vcmp.eq.s32.totalorder %v44, %v59
  %vm98 = vcmp.eq.s32.totalorder %v44, %v62
  %vm99 = vcmp.eq.s32.totalorder %v44, %v65
  %vm100 = vcmp.eq.s32.totalorder %v44, %v68
  %vm101 = vcmp.eq.s32.totalorder %v44, %v71
  %vm102 = vcmp.eq.s32.totalorder %v44, %v74
  %vm103 = vcmp.eq.s32.totalorder %v44, %v77
  %vm104 = vcmp.eq.s32.totalorder %v44, %v80
  %vm105 = vcmp.eq.s32.totalorder %v44, %v83
  %vm106 = vcmp.eq.s32.totalorder %v44, %v86
  %vm107 = vcmp.eq.s32.totalorder %v44, %v89
  %vm108 = vcmp.eq.s32.totalorder %v44, %v92
  %v109 = vsel %vm93, 1, 0
  %v110 = vsel %vm94, 1, 0
  %v111 = vsel %vm95, 1, 0
  %v112 = vsel %vm96, 1, 0
  %v113 = vsel %vm97, 1, 0
  %v114 = vsel %vm98, 1, 0
  %v115 = vsel %vm99, 1, 0
  %v116 = vsel %vm100, 1, 0
  %v117 = vsel %vm101, 1, 0
  %v118 = vsel %vm102, 1, 0
  %v119 = vsel %vm103, 1, 0
  %v120 = vsel %vm104, 1, 0
  %v121 = vsel %vm105, 1, 0
  %v122 = vsel %vm106, 1, 0
  %v123 = vsel %vm107, 1, 0
  %v124 = vsel %vm108, 1, 0
  %v125 = vcvt.s32.f32 %v109
  %v126 = vcvt.s32.f32 %v110
  %v127 = vcvt.s32.f32 %v111
  %v128 = vcvt.s32.f32 %v112
  %v129 = vcvt.s32.f32 %v113
  %v130 = vcvt.s32.f32 %v114
  %v131 = vcvt.s32.f32 %v115
  %v132 = vcvt.s32.f32 %v116
  %v133 = vcvt.s32.f32 %v117
  %v134 = vcvt.s32.f32 %v118
  %v135 = vcvt.s32.f32 %v119
  %v136 = vcvt.s32.f32 %v120
  %v137 = vcvt.s32.f32 %v121
  %v138 = vcvt.s32.f32 %v122
  %v139 = vcvt.s32.f32 %v123
  %v140 = vcvt.s32.f32 %v124
  %v141 = vpack.c.bf16 %v126, %v125
  %v142 = vpack.c.bf16 %v128, %v127
  %v143 = vpack.c.bf16 %v130, %v129
  %v144 = vpack.c.bf16 %v132, %v131
  %v145 = vpack.c.bf16 %v134, %v133
  %v146 = vpack.c.bf16 %v136, %v135
  %v147 = vpack.c.bf16 %v138, %v137
  %v148 = vpack.c.bf16 %v140, %v139
  %v149 = vld [vmem:[%s1] sm:$0xf]
  %v150 = vld [vmem:[%s1 + $0x4] sm:$0xf]
  %v151 = vld [vmem:[%s1 + $0x8] sm:$0xf]
  %v152 = vld [vmem:[%s1 + $0xc] sm:$0xf]
  %v153 = vld [vmem:[%s1 + $0x10] sm:$0xf]
  %v154 = vld [vmem:[%s1 + $0x14] sm:$0xf]
  %v155 = vld [vmem:[%s1 + $0x18] sm:$0x1]
  %v163 = vunpack.c.l.b16 %v149
  %v164 = vunpack.c.l.b16 %v150
  %v165 = vunpack.c.l.b16 %v151
  %v166 = vunpack.c.l.b16 %v152
  %v167 = vunpack.c.l.b16 %v153
  %v168 = vunpack.c.l.b16 %v154
  %v169 = vunpack.c.l.b16 %v155
  %v170 = vpack.c.b16 %v164, %v163
  %v171 = vpack.c.b16 %v166, %v165
  %v172 = vpack.c.b16 %v168, %v167
  %v173 = vpack.c.b16 %v169, %v169
  %vm177 = vcmask 408576
  %v179 = vsel %vm177, %v141, 0
  %v182 = vsel %vm177, %v142, 0
  %v185 = vsel %vm177, %v143, 0
  %v188 = vsel %vm177, %v144, 0
  %v191 = vsel %vm177, %v145, 0
  %v194 = vsel %vm177, %v146, 0
  %v197 = vsel %vm177, %v147, 0
  %v200 = vsel %vm177, %v148, 0
  %vm202 = vcmask 1040384
  %v204 = vsel %vm202, %v173, 0
  %206 = vmatpush.bf16.msra.mxu0 0
  %207 = vmatpush.bf16.msra.mxu0 0
  %208 = vmatpush.bf16.msra.mxu0 0
  %209 = vmatpush.bf16.msra.mxu0 0
  %210 = vmatpush.bf16.msra.mxu0 %v204
  %211 = vmatpush.bf16.msra.mxu0 %v172
  %212 = vmatpush.bf16.msra.mxu0 %v171
  %213 = vmatpush.bf16.msra.mxu0 %v170
  %214 = vmatmul.bf16.gmra.mxu0 %v179
  %v215 = vpop.f32.mrf.mxu0
  %v216 = vadd.f32 0.0, %v215
  %v217 = vpop.f32.mrf.mxu0
  %v218 = vadd.f32 0.0, %v217
  %219 = vmatmul.bf16.gmra.mxu0 %v182
  %v220 = vpop.f32.mrf.mxu0
  %v221 = vadd.f32 0.0, %v220
  %v222 = vpop.f32.mrf.mxu0
  %v223 = vadd.f32 0.0, %v222
  %224 = vmatmul.bf16.gmra.mxu0 %v185
  %v225 = vpop.f32.mrf.mxu0
  %v226 = vadd.f32 0.0, %v225
  %v227 = vpop.f32.mrf.mxu0
  %v228 = vadd.f32 0.0, %v227
  %229 = vmatmul.bf16.gmra.mxu0 %v188
  %v230 = vpop.f32.mrf.mxu0
  %v231 = vadd.f32 0.0, %v230
  %v232 = vpop.f32.mrf.mxu0
  %v233 = vadd.f32 0.0, %v232
  %234 = vmatmul.bf16.gmra.mxu0 %v191
  %v235 = vpop.f32.mrf.mxu0
  %v236 = vadd.f32 0.0, %v235
  %v237 = vpop.f32.mrf.mxu0
  %v238 = vadd.f32 0.0, %v237
  %239 = vmatmul.bf16.gmra.mxu0 %v194
  %v240 = vpop.f32.mrf.mxu0
  %v241 = vadd.f32 0.0, %v240
  %v242 = vpop.f32.mrf.mxu0
  %v243 = vadd.f32 0.0, %v242
  %244 = vmatmul.bf16.gmra.mxu0 %v197
  %v245 = vpop.f32.mrf.mxu0
  %v246 = vadd.f32 0.0, %v245
  %v247 = vpop.f32.mrf.mxu0
  %v248 = vadd.f32 0.0, %v247
  %249 = vmatmul.bf16.gmra.mxu0 %v200
  %v250 = vpop.f32.mrf.mxu0
  %v251 = vadd.f32 0.0, %v250
  %v252 = vpop.f32.mrf.mxu0
  %v253 = vadd.f32 0.0, %v252
  %254 = vdwg.mxu0
  %255 = vxpose.xlu0.b32.start [1/16] %v216, 128
  %256 = vxpose.xlu0.b32.cont [2/16] 0.0, 128
  %257 = vxpose.xlu0.b32.cont [3/16] 0.0, 128
  %258 = vxpose.xlu0.b32.cont [4/16] 0.0, 128
  %259 = vxpose.xlu0.b32.cont [5/16] 0.0, 128
  %260 = vxpose.xlu0.b32.cont [6/16] 0.0, 128
  %261 = vxpose.xlu0.b32.cont [7/16] 0.0, 128
  %262 = vxpose.xlu0.b32.cont [8/16] 0.0, 128
  %263 = vxpose.xlu0.b32.cont [9/16] 0.0, 128
  %264 = vxpose.xlu0.b32.cont [10/16] 0.0, 128
  %265 = vxpose.xlu0.b32.cont [11/16] 0.0, 128
  %266 = vxpose.xlu0.b32.cont [12/16] 0.0, 128
  %267 = vxpose.xlu0.b32.cont [13/16] 0.0, 128
  %268 = vxpose.xlu0.b32.cont [14/16] 0.0, 128
  %269 = vxpose.xlu0.b32.cont [15/16] 0.0, 128
  %270 = vxpose.xlu0.b32.end [16/16] 0.0, 128
  %v271 = vpop.trf.xlu0
  %v272 = vpop.trf.xlu0
  %v273 = vpop.trf.xlu0
  %v274 = vpop.trf.xlu0
  %v275 = vpop.trf.xlu0
  %v276 = vpop.trf.xlu0
  %v277 = vpop.trf.xlu0
  %v278 = vpop.trf.xlu0
  %v279 = vpop.trf.xlu0
  %v280 = vpop.trf.xlu0
  %v281 = vpop.trf.xlu0
  %v282 = vpop.trf.xlu0
  %v283 = vpop.trf.xlu0
  %v284 = vpop.trf.xlu0
  %v285 = vpop.trf.xlu0
  %v286 = vpop.trf.xlu0
  %287 = vxpose.xlu0.b32.start [1/16] %v218, 128
  %288 = vxpose.xlu0.b32.cont [2/16] 0.0, 128
  %289 = vxpose.xlu0.b32.cont [3/16] 0.0, 128
  %290 = vxpose.xlu0.b32.cont [4/16] 0.0, 128
  %291 = vxpose.xlu0.b32.cont [5/16] 0.0, 128
  %292 = vxpose.xlu0.b32.cont [6/16] 0.0, 128
  %293 = vxpose.xlu0.b32.cont [7/16] 0.0, 128
  %294 = vxpose.xlu0.b32.cont [8/16] 0.0, 128
  %295 = vxpose.xlu0.b32.cont [9/16] 0.0, 128
  %296 = vxpose.xlu0.b32.cont [10/16] 0.0, 128
  %297 = vxpose.xlu0.b32.cont [11/16] 0.0, 128
  %298 = vxpose.xlu0.b32.cont [12/16] 0.0, 128
  %299 = vxpose.xlu0.b32.cont [13/16] 0.0, 128
  %300 = vxpose.xlu0.b32.cont [14/16] 0.0, 128
  %301 = vxpose.xlu0.b32.cont [15/16] 0.0, 128
  %302 = vxpose.xlu0.b32.end [16/16] 0.0, 128
  %v303 = vpop.trf.xlu0
  %v304 = vpop.trf.xlu0
  %v305 = vpop.trf.xlu0
  %v306 = vpop.trf.xlu0
  %v307 = vpop.trf.xlu0
  %v308 = vpop.trf.xlu0
  %v309 = vpop.trf.xlu0
  %v310 = vpop.trf.xlu0
  %v311 = vpop.trf.xlu0
  %v312 = vpop.trf.xlu0
  %v313 = vpop.trf.xlu0
  %v314 = vpop.trf.xlu0
  %v315 = vpop.trf.xlu0
  %v316 = vpop.trf.xlu0
  %v317 = vpop.trf.xlu0
  %v318 = vpop.trf.xlu0
  %319 = vxpose.xlu0.b32.start [1/16] %v221, 128
  %320 = vxpose.xlu0.b32.cont [2/16] 0.0, 128
  %321 = vxpose.xlu0.b32.cont [3/16] 0.0, 128
  %322 = vxpose.xlu0.b32.cont [4/16] 0.0, 128
  %323 = vxpose.xlu0.b32.cont [5/16] 0.0, 128
  %324 = vxpose.xlu0.b32.cont [6/16] 0.0, 128
  %325 = vxpose.xlu0.b32.cont [7/16] 0.0, 128
  %326 = vxpose.xlu0.b32.cont [8/16] 0.0, 128
  %327 = vxpose.xlu0.b32.cont [9/16] 0.0, 128
  %328 = vxpose.xlu0.b32.cont [10/16] 0.0, 128
  %329 = vxpose.xlu0.b32.cont [11/16] 0.0, 128
  %330 = vxpose.xlu0.b32.cont [12/16] 0.0, 128
  %331 = vxpose.xlu0.b32.cont [13/16] 0.0, 128
  %332 = vxpose.xlu0.b32.cont [14/16] 0.0, 128
  %333 = vxpose.xlu0.b32.cont [15/16] 0.0, 128
  %334 = vxpose.xlu0.b32.end [16/16] 0.0, 128
  %v335 = vpop.trf.xlu0
  %v336 = vpop.trf.xlu0
  %v337 = vpop.trf.xlu0
  %v338 = vpop.trf.xlu0
  %v339 = vpop.trf.xlu0
  %v340 = vpop.trf.xlu0
  %v341 = vpop.trf.xlu0
  %v342 = vpop.trf.xlu0
  %v343 = vpop.trf.xlu0
  %v344 = vpop.trf.xlu0
  %v345 = vpop.trf.xlu0
  %v346 = vpop.trf.xlu0
  %v347 = vpop.trf.xlu0
  %v348 = vpop.trf.xlu0
  %v349 = vpop.trf.xlu0
  %v350 = vpop.trf.xlu0
  %351 = vxpose.xlu0.b32.start [1/16] %v223, 128
  %352 = vxpose.xlu0.b32.cont [2/16] 0.0, 128
  %353 = vxpose.xlu0.b32.cont [3/16] 0.0, 128
  %354 = vxpose.xlu0.b32.cont [4/16] 0.0, 128
  %355 = vxpose.xlu0.b32.cont [5/16] 0.0, 128
  %356 = vxpose.xlu0.b32.cont [6/16] 0.0, 128
  %357 = vxpose.xlu0.b32.cont [7/16] 0.0, 128
  %358 = vxpose.xlu0.b32.cont [8/16] 0.0, 128
  %359 = vxpose.xlu0.b32.cont [9/16] 0.0, 128
  %360 = vxpose.xlu0.b32.cont [10/16] 0.0, 128
  %361 = vxpose.xlu0.b32.cont [11/16] 0.0, 128
  %362 = vxpose.xlu0.b32.cont [12/16] 0.0, 128
  %363 = vxpose.xlu0.b32.cont [13/16] 0.0, 128
  %364 = vxpose.xlu0.b32.cont [14/16] 0.0, 128
  %365 = vxpose.xlu0.b32.cont [15/16] 0.0, 128
  %366 = vxpose.xlu0.b32.end [16/16] 0.0, 128
  %v367 = vpop.trf.xlu0
  %v368 = vpop.trf.xlu0
  %v369 = vpop.trf.xlu0
  %v370 = vpop.trf.xlu0
  %v371 = vpop.trf.xlu0
  %v372 = vpop.trf.xlu0
  %v373 = vpop.trf.xlu0
  %v374 = vpop.trf.xlu0
  %v375 = vpop.trf.xlu0
  %v376 = vpop.trf.xlu0
  %v377 = vpop.trf.xlu0
  %v378 = vpop.trf.xlu0
  %v379 = vpop.trf.xlu0
  %v380 = vpop.trf.xlu0
  %v381 = vpop.trf.xlu0
  %v382 = vpop.trf.xlu0
  %383 = vxpose.xlu0.b32.start [1/16] %v226, 128
  %384 = vxpose.xlu0.b32.cont [2/16] 0.0, 128
  %385 = vxpose.xlu0.b32.cont [3/16] 0.0, 128
  %386 = vxpose.xlu0.b32.cont [4/16] 0.0, 128
  %387 = vxpose.xlu0.b32.cont [5/16] 0.0, 128
  %388 = vxpose.xlu0.b32.cont [6/16] 0.0, 128
  %389 = vxpose.xlu0.b32.cont [7/16] 0.0, 128
  %390 = vxpose.xlu0.b32.cont [8/16] 0.0, 128
  %391 = vxpose.xlu0.b32.cont [9/16] 0.0, 128
  %392 = vxpose.xlu0.b32.cont [10/16] 0.0, 128
  %393 = vxpose.xlu0.b32.cont [11/16] 0.0, 128
  %394 = vxpose.xlu0.b32.cont [12/16] 0.0, 128
  %395 = vxpose.xlu0.b32.cont [13/16] 0.0, 128
  %396 = vxpose.xlu0.b32.cont [14/16] 0.0, 128
  %397 = vxpose.xlu0.b32.cont [15/16] 0.0, 128
  %398 = vxpose.xlu0.b32.end [16/16] 0.0, 128
  %v399 = vpop.trf.xlu0
  %v400 = vpop.trf.xlu0
  %v401 = vpop.trf.xlu0
  %v402 = vpop.trf.xlu0
  %v403 = vpop.trf.xlu0
  %v404 = vpop.trf.xlu0
  %v405 = vpop.trf.xlu0
  %v406 = vpop.trf.xlu0
  %v407 = vpop.trf.xlu0
  %v408 = vpop.trf.xlu0
  %v409 = vpop.trf.xlu0
  %v410 = vpop.trf.xlu0
  %v411 = vpop.trf.xlu0
  %v412 = vpop.trf.xlu0
  %v413 = vpop.trf.xlu0
  %v414 = vpop.trf.xlu0
  %415 = vxpose.xlu0.b32.start [1/16] %v228, 128
  %416 = vxpose.xlu0.b32.cont [2/16] 0.0, 128
  %417 = vxpose.xlu0.b32.cont [3/16] 0.0, 128
  %418 = vxpose.xlu0.b32.cont [4/16] 0.0, 128
  %419 = vxpose.xlu0.b32.cont [5/16] 0.0, 128
  %420 = vxpose.xlu0.b32.cont [6/16] 0.0, 128
  %421 = vxpose.xlu0.b32.cont [7/16] 0.0, 128
  %422 = vxpose.xlu0.b32.cont [8/16] 0.0, 128
  %423 = vxpose.xlu0.b32.cont [9/16] 0.0, 128
  %424 = vxpose.xlu0.b32.cont [10/16] 0.0, 128
  %425 = vxpose.xlu0.b32.cont [11/16] 0.0, 128
  %426 = vxpose.xlu0.b32.cont [12/16] 0.0, 128
  %427 = vxpose.xlu0.b32.cont [13/16] 0.0, 128
  %428 = vxpose.xlu0.b32.cont [14/16] 0.0, 128
  %429 = vxpose.xlu0.b32.cont [15/16] 0.0, 128
  %430 = vxpose.xlu0.b32.end [16/16] 0.0, 128
  %v431 = vpop.trf.xlu0
  %v432 = vpop.trf.xlu0
  %v433 = vpop.trf.xlu0
  %v434 = vpop.trf.xlu0
  %v435 = vpop.trf.xlu0
  %v436 = vpop.trf.xlu0
  %v437 = vpop.trf.xlu0
  %v438 = vpop.trf.xlu0
  %v439 = vpop.trf.xlu0
  %v440 = vpop.trf.xlu0
  %v441 = vpop.trf.xlu0
  %v442 = vpop.trf.xlu0
  %v443 = vpop.trf.xlu0
  %v444 = vpop.trf.xlu0
  %v445 = vpop.trf.xlu0
  %v446 = vpop.trf.xlu0
  %447 = vxpose.xlu0.b32.start [1/16] %v231, 128
  %448 = vxpose.xlu0.b32.cont [2/16] 0.0, 128
  %449 = vxpose.xlu0.b32.cont [3/16] 0.0, 128
  %450 = vxpose.xlu0.b32.cont [4/16] 0.0, 128
  %451 = vxpose.xlu0.b32.cont [5/16] 0.0, 128
  %452 = vxpose.xlu0.b32.cont [6/16] 0.0, 128
  %453 = vxpose.xlu0.b32.cont [7/16] 0.0, 128
  %454 = vxpose.xlu0.b32.cont [8/16] 0.0, 128
  %455 = vxpose.xlu0.b32.cont [9/16] 0.0, 128
  %456 = vxpose.xlu0.b32.cont [10/16] 0.0, 128
  %457 = vxpose.xlu0.b32.cont [11/16] 0.0, 128
  %458 = vxpose.xlu0.b32.cont [12/16] 0.0, 128
  %459 = vxpose.xlu0.b32.cont [13/16] 0.0, 128
  %460 = vxpose.xlu0.b32.cont [14/16] 0.0, 128
  %461 = vxpose.xlu0.b32.cont [15/16] 0.0, 128
  %462 = vxpose.xlu0.b32.end [16/16] 0.0, 128
  %v463 = vpop.trf.xlu0
  %v464 = vpop.trf.xlu0
  %v465 = vpop.trf.xlu0
  %v466 = vpop.trf.xlu0
  %v467 = vpop.trf.xlu0
  %v468 = vpop.trf.xlu0
  %v469 = vpop.trf.xlu0
  %v470 = vpop.trf.xlu0
  %v471 = vpop.trf.xlu0
  %v472 = vpop.trf.xlu0
  %v473 = vpop.trf.xlu0
  %v474 = vpop.trf.xlu0
  %v475 = vpop.trf.xlu0
  %v476 = vpop.trf.xlu0
  %v477 = vpop.trf.xlu0
  %v478 = vpop.trf.xlu0
  %479 = vxpose.xlu0.b32.start [1/16] %v233, 128
  %480 = vxpose.xlu0.b32.cont [2/16] 0.0, 128
  %481 = vxpose.xlu0.b32.cont [3/16] 0.0, 128
  %482 = vxpose.xlu0.b32.cont [4/16] 0.0, 128
  %483 = vxpose.xlu0.b32.cont [5/16] 0.0, 128
  %484 = vxpose.xlu0.b32.cont [6/16] 0.0, 128
  %485 = vxpose.xlu0.b32.cont [7/16] 0.0, 128
  %486 = vxpose.xlu0.b32.cont [8/16] 0.0, 128
  %487 = vxpose.xlu0.b32.cont [9/16] 0.0, 128
  %488 = vxpose.xlu0.b32.cont [10/16] 0.0, 128
  %489 = vxpose.xlu0.b32.cont [11/16] 0.0, 128
  %490 = vxpose.xlu0.b32.cont [12/16] 0.0, 128
  %491 = vxpose.xlu0.b32.cont [13/16] 0.0, 128
  %492 = vxpose.xlu0.b32.cont [14/16] 0.0, 128
  %493 = vxpose.xlu0.b32.cont [15/16] 0.0, 128
  %494 = vxpose.xlu0.b32.end [16/16] 0.0, 128
  %v495 = vpop.trf.xlu0
  %v496 = vpop.trf.xlu0
  %v497 = vpop.trf.xlu0
  %v498 = vpop.trf.xlu0
  %v499 = vpop.trf.xlu0
  %v500 = vpop.trf.xlu0
  %v501 = vpop.trf.xlu0
  %v502 = vpop.trf.xlu0
  %v503 = vpop.trf.xlu0
  %v504 = vpop.trf.xlu0
  %v505 = vpop.trf.xlu0
  %v506 = vpop.trf.xlu0
  %v507 = vpop.trf.xlu0
  %v508 = vpop.trf.xlu0
  %v509 = vpop.trf.xlu0
  %v510 = vpop.trf.xlu0
  %511 = vxpose.xlu0.b32.start [1/16] %v236, 128
  %512 = vxpose.xlu0.b32.cont [2/16] 0.0, 128
  %513 = vxpose.xlu0.b32.cont [3/16] 0.0, 128
  %514 = vxpose.xlu0.b32.cont [4/16] 0.0, 128
  %515 = vxpose.xlu0.b32.cont [5/16] 0.0, 128
  %516 = vxpose.xlu0.b32.cont [6/16] 0.0, 128
  %517 = vxpose.xlu0.b32.cont [7/16] 0.0, 128
  %518 = vxpose.xlu0.b32.cont [8/16] 0.0, 128
  %519 = vxpose.xlu0.b32.cont [9/16] 0.0, 128
  %520 = vxpose.xlu0.b32.cont [10/16] 0.0, 128
  %521 = vxpose.xlu0.b32.cont [11/16] 0.0, 128
  %522 = vxpose.xlu0.b32.cont [12/16] 0.0, 128
  %523 = vxpose.xlu0.b32.cont [13/16] 0.0, 128
  %524 = vxpose.xlu0.b32.cont [14/16] 0.0, 128
  %525 = vxpose.xlu0.b32.cont [15/16] 0.0, 128
  %526 = vxpose.xlu0.b32.end [16/16] 0.0, 128
  %v527 = vpop.trf.xlu0
  %v528 = vpop.trf.xlu0
  %v529 = vpop.trf.xlu0
  %v530 = vpop.trf.xlu0
  %v531 = vpop.trf.xlu0
  %v532 = vpop.trf.xlu0
  %v533 = vpop.trf.xlu0
  %v534 = vpop.trf.xlu0
  %v535 = vpop.trf.xlu0
  %v536 = vpop.trf.xlu0
  %v537 = vpop.trf.xlu0
  %v538 = vpop.trf.xlu0
  %v539 = vpop.trf.xlu0
  %v540 = vpop.trf.xlu0
  %v541 = vpop.trf.xlu0
  %v542 = vpop.trf.xlu0
  %543 = vxpose.xlu0.b32.start [1/16] %v238, 128
  %544 = vxpose.xlu0.b32.cont [2/16] 0.0, 128
  %545 = vxpose.xlu0.b32.cont [3/16] 0.0, 128
  %546 = vxpose.xlu0.b32.cont [4/16] 0.0, 128
  %547 = vxpose.xlu0.b32.cont [5/16] 0.0, 128
  %548 = vxpose.xlu0.b32.cont [6/16] 0.0, 128
  %549 = vxpose.xlu0.b32.cont [7/16] 0.0, 128
  %550 = vxpose.xlu0.b32.cont [8/16] 0.0, 128
  %551 = vxpose.xlu0.b32.cont [9/16] 0.0, 128
  %552 = vxpose.xlu0.b32.cont [10/16] 0.0, 128
  %553 = vxpose.xlu0.b32.cont [11/16] 0.0, 128
  %554 = vxpose.xlu0.b32.cont [12/16] 0.0, 128
  %555 = vxpose.xlu0.b32.cont [13/16] 0.0, 128
  %556 = vxpose.xlu0.b32.cont [14/16] 0.0, 128
  %557 = vxpose.xlu0.b32.cont [15/16] 0.0, 128
  %558 = vxpose.xlu0.b32.end [16/16] 0.0, 128
  %v559 = vpop.trf.xlu0
  %v560 = vpop.trf.xlu0
  %v561 = vpop.trf.xlu0
  %v562 = vpop.trf.xlu0
  %v563 = vpop.trf.xlu0
  %v564 = vpop.trf.xlu0
  %v565 = vpop.trf.xlu0
  %v566 = vpop.trf.xlu0
  %v567 = vpop.trf.xlu0
  %v568 = vpop.trf.xlu0
  %v569 = vpop.trf.xlu0
  %v570 = vpop.trf.xlu0
  %v571 = vpop.trf.xlu0
  %v572 = vpop.trf.xlu0
  %v573 = vpop.trf.xlu0
  %v574 = vpop.trf.xlu0
  %575 = vxpose.xlu0.b32.start [1/16] %v241, 128
  %576 = vxpose.xlu0.b32.cont [2/16] 0.0, 128
  %577 = vxpose.xlu0.b32.cont [3/16] 0.0, 128
  %578 = vxpose.xlu0.b32.cont [4/16] 0.0, 128
  %579 = vxpose.xlu0.b32.cont [5/16] 0.0, 128
  %580 = vxpose.xlu0.b32.cont [6/16] 0.0, 128
  %581 = vxpose.xlu0.b32.cont [7/16] 0.0, 128
  %582 = vxpose.xlu0.b32.cont [8/16] 0.0, 128
  %583 = vxpose.xlu0.b32.cont [9/16] 0.0, 128
  %584 = vxpose.xlu0.b32.cont [10/16] 0.0, 128
  %585 = vxpose.xlu0.b32.cont [11/16] 0.0, 128
  %586 = vxpose.xlu0.b32.cont [12/16] 0.0, 128
  %587 = vxpose.xlu0.b32.cont [13/16] 0.0, 128
  %588 = vxpose.xlu0.b32.cont [14/16] 0.0, 128
  %589 = vxpose.xlu0.b32.cont [15/16] 0.0, 128
  %590 = vxpose.xlu0.b32.end [16/16] 0.0, 128
  %v591 = vpop.trf.xlu0
  %v592 = vpop.trf.xlu0
  %v593 = vpop.trf.xlu0
  %v594 = vpop.trf.xlu0
  %v595 = vpop.trf.xlu0
  %v596 = vpop.trf.xlu0
  %v597 = vpop.trf.xlu0
  %v598 = vpop.trf.xlu0
  %v599 = vpop.trf.xlu0
  %v600 = vpop.trf.xlu0
  %v601 = vpop.trf.xlu0
  %v602 = vpop.trf.xlu0
  %v603 = vpop.trf.xlu0
  %v604 = vpop.trf.xlu0
  %v605 = vpop.trf.xlu0
  %v606 = vpop.trf.xlu0
  %607 = vxpose.xlu0.b32.start [1/16] %v243, 128
  %608 = vxpose.xlu0.b32.cont [2/16] 0.0, 128
  %609 = vxpose.xlu0.b32.cont [3/16] 0.0, 128
  %610 = vxpose.xlu0.b32.cont [4/16] 0.0, 128
  %611 = vxpose.xlu0.b32.cont [5/16] 0.0, 128
  %612 = vxpose.xlu0.b32.cont [6/16] 0.0, 128
  %613 = vxpose.xlu0.b32.cont [7/16] 0.0, 128
  %614 = vxpose.xlu0.b32.cont [8/16] 0.0, 128
  %615 = vxpose.xlu0.b32.cont [9/16] 0.0, 128
  %616 = vxpose.xlu0.b32.cont [10/16] 0.0, 128
  %617 = vxpose.xlu0.b32.cont [11/16] 0.0, 128
  %618 = vxpose.xlu0.b32.cont [12/16] 0.0, 128
  %619 = vxpose.xlu0.b32.cont [13/16] 0.0, 128
  %620 = vxpose.xlu0.b32.cont [14/16] 0.0, 128
  %621 = vxpose.xlu0.b32.cont [15/16] 0.0, 128
  %622 = vxpose.xlu0.b32.end [16/16] 0.0, 128
  %v623 = vpop.trf.xlu0
  %v624 = vpop.trf.xlu0
  %v625 = vpop.trf.xlu0
  %v626 = vpop.trf.xlu0
  %v627 = vpop.trf.xlu0
  %v628 = vpop.trf.xlu0
  %v629 = vpop.trf.xlu0
  %v630 = vpop.trf.xlu0
  %v631 = vpop.trf.xlu0
  %v632 = vpop.trf.xlu0
  %v633 = vpop.trf.xlu0
  %v634 = vpop.trf.xlu0
  %v635 = vpop.trf.xlu0
  %v636 = vpop.trf.xlu0
  %v637 = vpop.trf.xlu0
  %v638 = vpop.trf.xlu0
  %639 = vxpose.xlu0.b32.start [1/16] %v246, 128
  %640 = vxpose.xlu0.b32.cont [2/16] 0.0, 128
  %641 = vxpose.xlu0.b32.cont [3/16] 0.0, 128
  %642 = vxpose.xlu0.b32.cont [4/16] 0.0, 128
  %643 = vxpose.xlu0.b32.cont [5/16] 0.0, 128
  %644 = vxpose.xlu0.b32.cont [6/16] 0.0, 128
  %645 = vxpose.xlu0.b32.cont [7/16] 0.0, 128
  %646 = vxpose.xlu0.b32.cont [8/16] 0.0, 128
  %647 = vxpose.xlu0.b32.cont [9/16] 0.0, 128
  %648 = vxpose.xlu0.b32.cont [10/16] 0.0, 128
  %649 = vxpose.xlu0.b32.cont [11/16] 0.0, 128
  %650 = vxpose.xlu0.b32.cont [12/16] 0.0, 128
  %651 = vxpose.xlu0.b32.cont [13/16] 0.0, 128
  %652 = vxpose.xlu0.b32.cont [14/16] 0.0, 128
  %653 = vxpose.xlu0.b32.cont [15/16] 0.0, 128
  %654 = vxpose.xlu0.b32.end [16/16] 0.0, 128
  %v655 = vpop.trf.xlu0
  %v656 = vpop.trf.xlu0
  %v657 = vpop.trf.xlu0
  %v658 = vpop.trf.xlu0
  %v659 = vpop.trf.xlu0
  %v660 = vpop.trf.xlu0
  %v661 = vpop.trf.xlu0
  %v662 = vpop.trf.xlu0
  %v663 = vpop.trf.xlu0
  %v664 = vpop.trf.xlu0
  %v665 = vpop.trf.xlu0
  %v666 = vpop.trf.xlu0
  %v667 = vpop.trf.xlu0
  %v668 = vpop.trf.xlu0
  %v669 = vpop.trf.xlu0
  %v670 = vpop.trf.xlu0
  %671 = vxpose.xlu0.b32.start [1/16] %v248, 128
  %672 = vxpose.xlu0.b32.cont [2/16] 0.0, 128
  %673 = vxpose.xlu0.b32.cont [3/16] 0.0, 128
  %674 = vxpose.xlu0.b32.cont [4/16] 0.0, 128
  %675 = vxpose.xlu0.b32.cont [5/16] 0.0, 128
  %676 = vxpose.xlu0.b32.cont [6/16] 0.0, 128
  %677 = vxpose.xlu0.b32.cont [7/16] 0.0, 128
  %678 = vxpose.xlu0.b32.cont [8/16] 0.0, 128
  %679 = vxpose.xlu0.b32.cont [9/16] 0.0, 128
  %680 = vxpose.xlu0.b32.cont [10/16] 0.0, 128
  %681 = vxpose.xlu0.b32.cont [11/16] 0.0, 128
  %682 = vxpose.xlu0.b32.cont [12/16] 0.0, 128
  %683 = vxpose.xlu0.b32.cont [13/16] 0.0, 128
  %684 = vxpose.xlu0.b32.cont [14/16] 0.0, 128
  %685 = vxpose.xlu0.b32.cont [15/16] 0.0, 128
  %686 = vxpose.xlu0.b32.end [16/16] 0.0, 128
  %v687 = vpop.trf.xlu0
  %v688 = vpop.trf.xlu0
  %v689 = vpop.trf.xlu0
  %v690 = vpop.trf.xlu0
  %v691 = vpop.trf.xlu0
  %v692 = vpop.trf.xlu0
  %v693 = vpop.trf.xlu0
  %v694 = vpop.trf.xlu0
  %v695 = vpop.trf.xlu0
  %v696 = vpop.trf.xlu0
  %v697 = vpop.trf.xlu0
  %v698 = vpop.trf.xlu0
  %v699 = vpop.trf.xlu0
  %v700 = vpop.trf.xlu0
  %v701 = vpop.trf.xlu0
  %v702 = vpop.trf.xlu0
  %703 = vxpose.xlu0.b32.start [1/16] %v251, 128
  %704 = vxpose.xlu0.b32.cont [2/16] 0.0, 128
  %705 = vxpose.xlu0.b32.cont [3/16] 0.0, 128
  %706 = vxpose.xlu0.b32.cont [4/16] 0.0, 128
  %707 = vxpose.xlu0.b32.cont [5/16] 0.0, 128
  %708 = vxpose.xlu0.b32.cont [6/16] 0.0, 128
  %709 = vxpose.xlu0.b32.cont [7/16] 0.0, 128
  %710 = vxpose.xlu0.b32.cont [8/16] 0.0, 128
  %711 = vxpose.xlu0.b32.cont [9/16] 0.0, 128
  %712 = vxpose.xlu0.b32.cont [10/16] 0.0, 128
  %713 = vxpose.xlu0.b32.cont [11/16] 0.0, 128
  %714 = vxpose.xlu0.b32.cont [12/16] 0.0, 128
  %715 = vxpose.xlu0.b32.cont [13/16] 0.0, 128
  %716 = vxpose.xlu0.b32.cont [14/16] 0.0, 128
  %717 = vxpose.xlu0.b32.cont [15/16] 0.0, 128
  %718 = vxpose.xlu0.b32.end [16/16] 0.0, 128
  %v719 = vpop.trf.xlu0
  %v720 = vpop.trf.xlu0
  %v721 = vpop.trf.xlu0
  %v722 = vpop.trf.xlu0
  %v723 = vpop.trf.xlu0
  %v724 = vpop.trf.xlu0
  %v725 = vpop.trf.xlu0
  %v726 = vpop.trf.xlu0
  %v727 = vpop.trf.xlu0
  %v728 = vpop.trf.xlu0
  %v729 = vpop.trf.xlu0
  %v730 = vpop.trf.xlu0
  %v731 = vpop.trf.xlu0
  %v732 = vpop.trf.xlu0
  %v733 = vpop.trf.xlu0
  %v734 = vpop.trf.xlu0
  %735 = vxpose.xlu0.b32.start [1/16] %v253, 128
  %736 = vxpose.xlu0.b32.cont [2/16] 0.0, 128
  %737 = vxpose.xlu0.b32.cont [3/16] 0.0, 128
  %738 = vxpose.xlu0.b32.cont [4/16] 0.0, 128
  %739 = vxpose.xlu0.b32.cont [5/16] 0.0, 128
  %740 = vxpose.xlu0.b32.cont [6/16] 0.0, 128
  %741 = vxpose.xlu0.b32.cont [7/16] 0.0, 128
  %742 = vxpose.xlu0.b32.cont [8/16] 0.0, 128
  %743 = vxpose.xlu0.b32.cont [9/16] 0.0, 128
  %744 = vxpose.xlu0.b32.cont [10/16] 0.0, 128
  %745 = vxpose.xlu0.b32.cont [11/16] 0.0, 128
  %746 = vxpose.xlu0.b32.cont [12/16] 0.0, 128
  %747 = vxpose.xlu0.b32.cont [13/16] 0.0, 128
  %748 = vxpose.xlu0.b32.cont [14/16] 0.0, 128
  %749 = vxpose.xlu0.b32.cont [15/16] 0.0, 128
  %750 = vxpose.xlu0.b32.end [16/16] 0.0, 128
  %v751 = vpop.trf.xlu0
  %v752 = vpop.trf.xlu0
  %v753 = vpop.trf.xlu0
  %v754 = vpop.trf.xlu0
  %v755 = vpop.trf.xlu0
  %v756 = vpop.trf.xlu0
  %v757 = vpop.trf.xlu0
  %v758 = vpop.trf.xlu0
  %v759 = vpop.trf.xlu0
  %v760 = vpop.trf.xlu0
  %v761 = vpop.trf.xlu0
  %v762 = vpop.trf.xlu0
  %v763 = vpop.trf.xlu0
  %v764 = vpop.trf.xlu0
  %v765 = vpop.trf.xlu0
  %v766 = vpop.trf.xlu0
  %v767 = vpack.c.bf16 %v271, %v271
  %v768 = vpack.c.bf16 %v272, %v272
  %v769 = vpack.c.bf16 %v273, %v273
  %v770 = vpack.c.bf16 %v274, %v274
  %v771 = vpack.c.bf16 %v275, %v275
  %v772 = vpack.c.bf16 %v303, %v303
  %v773 = vpack.c.bf16 %v304, %v304
  %v774 = vpack.c.bf16 %v305, %v305
  %v775 = vpack.c.bf16 %v306, %v306
  %v776 = vpack.c.bf16 %v307, %v307
  %v777 = vpack.c.bf16 %v335, %v335
  %v778 = vpack.c.bf16 %v336, %v336
  %v779 = vpack.c.bf16 %v337, %v337
  %v780 = vpack.c.bf16 %v338, %v338
  %v781 = vpack.c.bf16 %v339, %v339
  %v782 = vpack.c.bf16 %v367, %v367
  %v783 = vpack.c.bf16 %v368, %v368
  %v784 = vpack.c.bf16 %v369, %v369
  %v785 = vpack.c.bf16 %v370, %v370
  %v786 = vpack.c.bf16 %v371, %v371
  %v787 = vpack.c.bf16 %v399, %v399
  %v788 = vpack.c.bf16 %v400, %v400
  %v789 = vpack.c.bf16 %v401, %v401
  %v790 = vpack.c.bf16 %v402, %v402
  %v791 = vpack.c.bf16 %v403, %v403
  %v792 = vpack.c.bf16 %v431, %v431
  %v793 = vpack.c.bf16 %v432, %v432
  %v794 = vpack.c.bf16 %v433, %v433
  %v795 = vpack.c.bf16 %v434, %v434
  %v796 = vpack.c.bf16 %v435, %v435
  %v797 = vpack.c.bf16 %v463, %v463
  %v798 = vpack.c.bf16 %v464, %v464
  %v799 = vpack.c.bf16 %v465, %v465
  %v800 = vpack.c.bf16 %v466, %v466
  %v801 = vpack.c.bf16 %v467, %v467
  %v802 = vpack.c.bf16 %v495, %v495
  %v803 = vpack.c.bf16 %v496, %v496
  %v804 = vpack.c.bf16 %v497, %v497
  %v805 = vpack.c.bf16 %v498, %v498
  %v806 = vpack.c.bf16 %v499, %v499
  %v807 = vpack.c.bf16 %v527, %v527
  %v808 = vpack.c.bf16 %v528, %v528
  %v809 = vpack.c.bf16 %v529, %v529
  %v810 = vpack.c.bf16 %v530, %v530
  %v811 = vpack.c.bf16 %v531, %v531
  %v812 = vpack.c.bf16 %v559, %v559
  %v813 = vpack.c.bf16 %v560, %v560
  %v814 = vpack.c.bf16 %v561, %v561
  %v815 = vpack.c.bf16 %v562, %v562
  %v816 = vpack.c.bf16 %v563, %v563
  %v817 = vpack.c.bf16 %v591, %v591
  %v818 = vpack.c.bf16 %v592, %v592
  %v819 = vpack.c.bf16 %v593, %v593
  %v820 = vpack.c.bf16 %v594, %v594
  %v821 = vpack.c.bf16 %v595, %v595
  %v822 = vpack.c.bf16 %v623, %v623
  %v823 = vpack.c.bf16 %v624, %v624
  %v824 = vpack.c.bf16 %v625, %v625
  %v825 = vpack.c.bf16 %v626, %v626
  %v826 = vpack.c.bf16 %v627, %v627
  %v827 = vpack.c.bf16 %v655, %v655
  %v828 = vpack.c.bf16 %v656, %v656
  %v829 = vpack.c.bf16 %v657, %v657
  %v830 = vpack.c.bf16 %v658, %v658
  %v831 = vpack.c.bf16 %v659, %v659
  %v832 = vpack.c.bf16 %v687, %v687
  %v833 = vpack.c.bf16 %v688, %v688
  %v834 = vpack.c.bf16 %v689, %v689
  %v835 = vpack.c.bf16 %v690, %v690
  %v836 = vpack.c.bf16 %v691, %v691
  %v837 = vpack.c.bf16 %v719, %v719
  %v838 = vpack.c.bf16 %v720, %v720
  %v839 = vpack.c.bf16 %v721, %v721
  %v840 = vpack.c.bf16 %v722, %v722
  %v841 = vpack.c.bf16 %v723, %v723
  %v842 = vpack.c.bf16 %v751, %v751
  %v843 = vpack.c.bf16 %v752, %v752
  %v844 = vpack.c.bf16 %v753, %v753
  %v845 = vpack.c.bf16 %v754, %v754
  %v846 = vpack.c.bf16 %v755, %v755
  %v911 = vunpack.c.l.b16 %v767
  %v912 = vunpack.c.l.b16 %v768
  %v913 = vunpack.c.l.b16 %v769
  %v914 = vunpack.c.l.b16 %v770
  %v915 = vunpack.c.l.b16 %v772
  %v916 = vunpack.c.l.b16 %v773
  %v917 = vunpack.c.l.b16 %v774
  %v918 = vunpack.c.l.b16 %v775
  %v919 = vunpack.c.l.b16 %v777
  %v920 = vunpack.c.l.b16 %v778
  %v921 = vunpack.c.l.b16 %v779
  %v922 = vunpack.c.l.b16 %v780
  %v923 = vunpack.c.l.b16 %v782
  %v924 = vunpack.c.l.b16 %v783
  %v925 = vunpack.c.l.b16 %v784
  %v926 = vunpack.c.l.b16 %v785
  %v927 = vunpack.c.l.b16 %v787
  %v928 = vunpack.c.l.b16 %v788
  %v929 = vunpack.c.l.b16 %v789
  %v930 = vunpack.c.l.b16 %v790
  %v931 = vunpack.c.l.b16 %v792
  %v932 = vunpack.c.l.b16 %v793
  %v933 = vunpack.c.l.b16 %v794
  %v934 = vunpack.c.l.b16 %v795
  %v935 = vunpack.c.l.b16 %v797
  %v936 = vunpack.c.l.b16 %v798
  %v937 = vunpack.c.l.b16 %v799
  %v938 = vunpack.c.l.b16 %v800
  %v939 = vunpack.c.l.b16 %v802
  %v940 = vunpack.c.l.b16 %v803
  %v941 = vunpack.c.l.b16 %v804
  %v942 = vunpack.c.l.b16 %v805
  %v943 = vunpack.c.l.b16 %v807
  %v944 = vunpack.c.l.b16 %v808
  %v945 = vunpack.c.l.b16 %v809
  %v946 = vunpack.c.l.b16 %v810
  %v947 = vunpack.c.l.b16 %v812
  %v948 = vunpack.c.l.b16 %v813
  %v949 = vunpack.c.l.b16 %v814
  %v950 = vunpack.c.l.b16 %v815
  %v951 = vunpack.c.l.b16 %v817
  %v952 = vunpack.c.l.b16 %v818
  %v953 = vunpack.c.l.b16 %v819
  %v954 = vunpack.c.l.b16 %v820
  %v955 = vunpack.c.l.b16 %v822
  %v956 = vunpack.c.l.b16 %v823
  %v957 = vunpack.c.l.b16 %v824
  %v958 = vunpack.c.l.b16 %v825
  %v959 = vunpack.c.l.b16 %v827
  %v960 = vunpack.c.l.b16 %v828
  %v961 = vunpack.c.l.b16 %v829
  %v962 = vunpack.c.l.b16 %v830
  %v963 = vunpack.c.l.b16 %v832
  %v964 = vunpack.c.l.b16 %v833
  %v965 = vunpack.c.l.b16 %v834
  %v966 = vunpack.c.l.b16 %v835
  %v967 = vunpack.c.l.b16 %v837
  %v968 = vunpack.c.l.b16 %v838
  %v969 = vunpack.c.l.b16 %v839
  %v970 = vunpack.c.l.b16 %v840
  %v971 = vunpack.c.l.b16 %v842
  %v972 = vunpack.c.l.b16 %v843
  %v973 = vunpack.c.l.b16 %v844
  %v974 = vunpack.c.l.b16 %v845
  %v975 = vpack.c.b16 %v912, %v911
  %v976 = vpack.c.b16 %v914, %v913
  %v977 = vpack.c.b16 %v916, %v915
  %v978 = vpack.c.b16 %v918, %v917
  %v979 = vpack.c.b16 %v920, %v919
  %v980 = vpack.c.b16 %v922, %v921
  %v981 = vpack.c.b16 %v924, %v923
  %v982 = vpack.c.b16 %v926, %v925
  %v983 = vpack.c.b16 %v928, %v927
  %v984 = vpack.c.b16 %v930, %v929
  %v985 = vpack.c.b16 %v932, %v931
  %v986 = vpack.c.b16 %v934, %v933
  %v987 = vpack.c.b16 %v936, %v935
  %v988 = vpack.c.b16 %v938, %v937
  %v989 = vpack.c.b16 %v940, %v939
  %v990 = vpack.c.b16 %v942, %v941
  %v991 = vpack.c.b16 %v944, %v943
  %v992 = vpack.c.b16 %v946, %v945
  %v993 = vpack.c.b16 %v948, %v947
  %v994 = vpack.c.b16 %v950, %v949
  %v995 = vpack.c.b16 %v952, %v951
  %v996 = vpack.c.b16 %v954, %v953
  %v997 = vpack.c.b16 %v956, %v955
  %v998 = vpack.c.b16 %v958, %v957
  %v999 = vpack.c.b16 %v960, %v959
  %v1000 = vpack.c.b16 %v962, %v961
  %v1001 = vpack.c.b16 %v964, %v963
  %v1002 = vpack.c.b16 %v966, %v965
  %v1003 = vpack.c.b16 %v968, %v967
  %v1004 = vpack.c.b16 %v970, %v969
  %v1005 = vpack.c.b16 %v972, %v971
  %v1006 = vpack.c.b16 %v974, %v973
  %v1023 = vunpack.c.l.b16 %v771
  %v1024 = vunpack.c.l.b16 %v776
  %v1025 = vunpack.c.l.b16 %v781
  %v1026 = vunpack.c.l.b16 %v786
  %v1027 = vunpack.c.l.b16 %v791
  %v1028 = vunpack.c.l.b16 %v796
  %v1029 = vunpack.c.l.b16 %v801
  %v1030 = vunpack.c.l.b16 %v806
  %v1031 = vunpack.c.l.b16 %v811
  %v1032 = vunpack.c.l.b16 %v816
  %v1033 = vunpack.c.l.b16 %v821
  %v1034 = vunpack.c.l.b16 %v826
  %v1035 = vunpack.c.l.b16 %v831
  %v1036 = vunpack.c.l.b16 %v836
  %v1037 = vunpack.c.l.b16 %v841
  %v1038 = vunpack.c.l.b16 %v846
  %v1039 = vpack.c.b16 %v1023, %v1023
  %v1040 = vpack.c.b16 %v1024, %v1024
  %v1041 = vpack.c.b16 %v1025, %v1025
  %v1042 = vpack.c.b16 %v1026, %v1026
  %v1043 = vpack.c.b16 %v1027, %v1027
  %v1044 = vpack.c.b16 %v1028, %v1028
  %v1045 = vpack.c.b16 %v1029, %v1029
  %v1046 = vpack.c.b16 %v1030, %v1030
  %v1047 = vpack.c.b16 %v1031, %v1031
  %v1048 = vpack.c.b16 %v1032, %v1032
  %v1049 = vpack.c.b16 %v1033, %v1033
  %v1050 = vpack.c.b16 %v1034, %v1034
  %v1051 = vpack.c.b16 %v1035, %v1035
  %v1052 = vpack.c.b16 %v1036, %v1036
  %v1053 = vpack.c.b16 %v1037, %v1037
  %v1054 = vpack.c.b16 %v1038, %v1038
  %vm1055 = vsmask.f32 7424
  %v1057 = vshrl.u32 %v975, 16
  %v1059 = vshll.u32 %v975, 16
  %v1061 = vrot.slane %v1059, 1
  %v1062 = vor.u32 %v1057, %v1061
  %v1064 = vshll.u32 %v976, 16
  %v1066 = vrot.slane %v1064, 1
  %v1067 = vsel %vm1055, %v1062, %v1066
  %v1068 = vshrl.u32 %v976, 16
  %v1070 = vor.u32 %v1068, %v1066
  %v1072 = vshll.u32 %v1039, 16
  %v1074 = vrot.slane %v1072, 1
  %v1075 = vsel %vm1055, %v1070, %v1074
  %v1077 = vshrl.u32 %v977, 16
  %v1079 = vshll.u32 %v977, 16
  %v1081 = vrot.slane %v1079, 1
  %v1082 = vor.u32 %v1077, %v1081
  %v1084 = vshll.u32 %v978, 16
  %v1086 = vrot.slane %v1084, 1
  %v1087 = vsel %vm1055, %v1082, %v1086
  %v1088 = vshrl.u32 %v978, 16
  %v1090 = vor.u32 %v1088, %v1086
  %v1092 = vshll.u32 %v1040, 16
  %v1094 = vrot.slane %v1092, 1
  %v1095 = vsel %vm1055, %v1090, %v1094
  %v1097 = vshrl.u32 %v979, 16
  %v1099 = vshll.u32 %v979, 16
  %v1101 = vrot.slane %v1099, 1
  %v1102 = vor.u32 %v1097, %v1101
  %v1104 = vshll.u32 %v980, 16
  %v1106 = vrot.slane %v1104, 1
  %v1107 = vsel %vm1055, %v1102, %v1106
  %v1108 = vshrl.u32 %v980, 16
  %v1110 = vor.u32 %v1108, %v1106
  %v1112 = vshll.u32 %v1041, 16
  %v1114 = vrot.slane %v1112, 1
  %v1115 = vsel %vm1055, %v1110, %v1114
  %v1117 = vshrl.u32 %v981, 16
  %v1119 = vshll.u32 %v981, 16
  %v1121 = vrot.slane %v1119, 1
  %v1122 = vor.u32 %v1117, %v1121
  %v1124 = vshll.u32 %v982, 16
  %v1126 = vrot.slane %v1124, 1
  %v1127 = vsel %vm1055, %v1122, %v1126
  %v1128 = vshrl.u32 %v982, 16
  %v1130 = vor.u32 %v1128, %v1126
  %v1132 = vshll.u32 %v1042, 16
  %v1134 = vrot.slane %v1132, 1
  %v1135 = vsel %vm1055, %v1130, %v1134
  %v1137 = vshrl.u32 %v983, 16
  %v1139 = vshll.u32 %v983, 16
  %v1141 = vrot.slane %v1139, 1
  %v1142 = vor.u32 %v1137, %v1141
  %v1144 = vshll.u32 %v984, 16
  %v1146 = vrot.slane %v1144, 1
  %v1147 = vsel %vm1055, %v1142, %v1146
  %v1148 = vshrl.u32 %v984, 16
  %v1150 = vor.u32 %v1148, %v1146
  %v1152 = vshll.u32 %v1043, 16
  %v1154 = vrot.slane %v1152, 1
  %v1155 = vsel %vm1055, %v1150, %v1154
  %v1157 = vshrl.u32 %v985, 16
  %v1159 = vshll.u32 %v985, 16
  %v1161 = vrot.slane %v1159, 1
  %v1162 = vor.u32 %v1157, %v1161
  %v1164 = vshll.u32 %v986, 16
  %v1166 = vrot.slane %v1164, 1
  %v1167 = vsel %vm1055, %v1162, %v1166
  %v1168 = vshrl.u32 %v986, 16
  %v1170 = vor.u32 %v1168, %v1166
  %v1172 = vshll.u32 %v1044, 16
  %v1174 = vrot.slane %v1172, 1
  %v1175 = vsel %vm1055, %v1170, %v1174
  %v1177 = vshrl.u32 %v987, 16
  %v1179 = vshll.u32 %v987, 16
  %v1181 = vrot.slane %v1179, 1
  %v1182 = vor.u32 %v1177, %v1181
  %v1184 = vshll.u32 %v988, 16
  %v1186 = vrot.slane %v1184, 1
  %v1187 = vsel %vm1055, %v1182, %v1186
  %v1188 = vshrl.u32 %v988, 16
  %v1190 = vor.u32 %v1188, %v1186
  %v1192 = vshll.u32 %v1045, 16
  %v1194 = vrot.slane %v1192, 1
  %v1195 = vsel %vm1055, %v1190, %v1194
  %v1197 = vshrl.u32 %v989, 16
  %v1199 = vshll.u32 %v989, 16
  %v1201 = vrot.slane %v1199, 1
  %v1202 = vor.u32 %v1197, %v1201
  %v1204 = vshll.u32 %v990, 16
  %v1206 = vrot.slane %v1204, 1
  %v1207 = vsel %vm1055, %v1202, %v1206
  %v1208 = vshrl.u32 %v990, 16
  %v1210 = vor.u32 %v1208, %v1206
  %v1212 = vshll.u32 %v1046, 16
  %v1214 = vrot.slane %v1212, 1
  %v1215 = vsel %vm1055, %v1210, %v1214
  %v1217 = vshrl.u32 %v991, 16
  %v1219 = vshll.u32 %v991, 16
  %v1221 = vrot.slane %v1219, 1
  %v1222 = vor.u32 %v1217, %v1221
  %v1224 = vshll.u32 %v992, 16
  %v1226 = vrot.slane %v1224, 1
  %v1227 = vsel %vm1055, %v1222, %v1226
  %v1228 = vshrl.u32 %v992, 16
  %v1230 = vor.u32 %v1228, %v1226
  %v1232 = vshll.u32 %v1047, 16
  %v1234 = vrot.slane %v1232, 1
  %v1235 = vsel %vm1055, %v1230, %v1234
  %v1237 = vshrl.u32 %v993, 16
  %v1239 = vshll.u32 %v993, 16
  %v1241 = vrot.slane %v1239, 1
  %v1242 = vor.u32 %v1237, %v1241
  %v1244 = vshll.u32 %v994, 16
  %v1246 = vrot.slane %v1244, 1
  %v1247 = vsel %vm1055, %v1242, %v1246
  %v1248 = vshrl.u32 %v994, 16
  %v1250 = vor.u32 %v1248, %v1246
  %v1252 = vshll.u32 %v1048, 16
  %v1254 = vrot.slane %v1252, 1
  %v1255 = vsel %vm1055, %v1250, %v1254
  %v1257 = vshrl.u32 %v995, 16
  %v1259 = vshll.u32 %v995, 16
  %v1261 = vrot.slane %v1259, 1
  %v1262 = vor.u32 %v1257, %v1261
  %v1264 = vshll.u32 %v996, 16
  %v1266 = vrot.slane %v1264, 1
  %v1267 = vsel %vm1055, %v1262, %v1266
  %v1268 = vshrl.u32 %v996, 16
  %v1270 = vor.u32 %v1268, %v1266
  %v1272 = vshll.u32 %v1049, 16
  %v1274 = vrot.slane %v1272, 1
  %v1275 = vsel %vm1055, %v1270, %v1274
  %v1277 = vshrl.u32 %v997, 16
  %v1279 = vshll.u32 %v997, 16
  %v1281 = vrot.slane %v1279, 1
  %v1282 = vor.u32 %v1277, %v1281
  %v1284 = vshll.u32 %v998, 16
  %v1286 = vrot.slane %v1284, 1
  %v1287 = vsel %vm1055, %v1282, %v1286
  %v1288 = vshrl.u32 %v998, 16
  %v1290 = vor.u32 %v1288, %v1286
  %v1292 = vshll.u32 %v1050, 16
  %v1294 = vrot.slane %v1292, 1
  %v1295 = vsel %vm1055, %v1290, %v1294
  %v1297 = vshrl.u32 %v999, 16
  %v1299 = vshll.u32 %v999, 16
  %v1301 = vrot.slane %v1299, 1
  %v1302 = vor.u32 %v1297, %v1301
  %v1304 = vshll.u32 %v1000, 16
  %v1306 = vrot.slane %v1304, 1
  %v1307 = vsel %vm1055, %v1302, %v1306
  %v1308 = vshrl.u32 %v1000, 16
  %v1310 = vor.u32 %v1308, %v1306
  %v1312 = vshll.u32 %v1051, 16
  %v1314 = vrot.slane %v1312, 1
  %v1315 = vsel %vm1055, %v1310, %v1314
  %v1317 = vshrl.u32 %v1001, 16
  %v1319 = vshll.u32 %v1001, 16
  %v1321 = vrot.slane %v1319, 1
  %v1322 = vor.u32 %v1317, %v1321
  %v1324 = vshll.u32 %v1002, 16
  %v1326 = vrot.slane %v1324, 1
  %v1327 = vsel %vm1055, %v1322, %v1326
  %v1328 = vshrl.u32 %v1002, 16
  %v1330 = vor.u32 %v1328, %v1326
  %v1332 = vshll.u32 %v1052, 16
  %v1334 = vrot.slane %v1332, 1
  %v1335 = vsel %vm1055, %v1330, %v1334
  %v1337 = vshrl.u32 %v1003, 16
  %v1339 = vshll.u32 %v1003, 16
  %v1341 = vrot.slane %v1339, 1
  %v1342 = vor.u32 %v1337, %v1341
  %v1344 = vshll.u32 %v1004, 16
  %v1346 = vrot.slane %v1344, 1
  %v1347 = vsel %vm1055, %v1342, %v1346
  %v1348 = vshrl.u32 %v1004, 16
  %v1350 = vor.u32 %v1348, %v1346
  %v1352 = vshll.u32 %v1053, 16
  %v1354 = vrot.slane %v1352, 1
  %v1355 = vsel %vm1055, %v1350, %v1354
  %v1357 = vshrl.u32 %v1005, 16
  %v1359 = vshll.u32 %v1005, 16
  %v1361 = vrot.slane %v1359, 1
  %v1362 = vor.u32 %v1357, %v1361
  %v1364 = vshll.u32 %v1006, 16
  %v1366 = vrot.slane %v1364, 1
  %v1367 = vsel %vm1055, %v1362, %v1366
  %v1368 = vshrl.u32 %v1006, 16
  %v1370 = vor.u32 %v1368, %v1366
  %v1372 = vshll.u32 %v1054, 16
  %v1374 = vrot.slane %v1372, 1
  %v1375 = vsel %vm1055, %v1370, %v1374
  %1376 = vrot.lane.b32.xlu0 %v1067, 8
  %v1377 = vpop.permute.xlu0 %1376
  %1378 = vrot.lane.b32.xlu0 %v1075, 8
  %v1379 = vpop.permute.xlu0 %1378
  %1380 = vrot.lane.b32.xlu0 %v1087, 8
  %v1381 = vpop.permute.xlu0 %1380
  %1382 = vrot.lane.b32.xlu0 %v1095, 8
  %v1383 = vpop.permute.xlu0 %1382
  %1384 = vrot.lane.b32.xlu0 %v1107, 8
  %v1385 = vpop.permute.xlu0 %1384
  %1386 = vrot.lane.b32.xlu0 %v1115, 8
  %v1387 = vpop.permute.xlu0 %1386
  %1388 = vrot.lane.b32.xlu0 %v1127, 8
  %v1389 = vpop.permute.xlu0 %1388
  %1390 = vrot.lane.b32.xlu0 %v1135, 8
  %v1391 = vpop.permute.xlu0 %1390
  %1392 = vrot.lane.b32.xlu0 %v1147, 8
  %v1393 = vpop.permute.xlu0 %1392
  %1394 = vrot.lane.b32.xlu0 %v1155, 8
  %v1395 = vpop.permute.xlu0 %1394
  %1396 = vrot.lane.b32.xlu0 %v1167, 8
  %v1397 = vpop.permute.xlu0 %1396
  %1398 = vrot.lane.b32.xlu0 %v1175, 8
  %v1399 = vpop.permute.xlu0 %1398
  %1400 = vrot.lane.b32.xlu0 %v1187, 8
  %v1401 = vpop.permute.xlu0 %1400
  %1402 = vrot.lane.b32.xlu0 %v1195, 8
  %v1403 = vpop.permute.xlu0 %1402
  %1404 = vrot.lane.b32.xlu0 %v1207, 8
  %v1405 = vpop.permute.xlu0 %1404
  %1406 = vrot.lane.b32.xlu0 %v1215, 8
  %v1407 = vpop.permute.xlu0 %1406
  %1408 = vrot.lane.b32.xlu0 %v1227, 8
  %v1409 = vpop.permute.xlu0 %1408
  %1410 = vrot.lane.b32.xlu0 %v1235, 8
  %v1411 = vpop.permute.xlu0 %1410
  %1412 = vrot.lane.b32.xlu0 %v1247, 8
  %v1413 = vpop.permute.xlu0 %1412
  %1414 = vrot.lane.b32.xlu0 %v1255, 8
  %v1415 = vpop.permute.xlu0 %1414
  %1416 = vrot.lane.b32.xlu0 %v1267, 8
  %v1417 = vpop.permute.xlu0 %1416
  %1418 = vrot.lane.b32.xlu0 %v1275, 8
  %v1419 = vpop.permute.xlu0 %1418
  %1420 = vrot.lane.b32.xlu0 %v1287, 8
  %v1421 = vpop.permute.xlu0 %1420
  %1422 = vrot.lane.b32.xlu0 %v1295, 8
  %v1423 = vpop.permute.xlu0 %1422
  %1424 = vrot.lane.b32.xlu0 %v1307, 8
  %v1425 = vpop.permute.xlu0 %1424
  %1426 = vrot.lane.b32.xlu0 %v1315, 8
  %v1427 = vpop.permute.xlu0 %1426
  %1428 = vrot.lane.b32.xlu0 %v1327, 8
  %v1429 = vpop.permute.xlu0 %1428
  %1430 = vrot.lane.b32.xlu0 %v1335, 8
  %v1431 = vpop.permute.xlu0 %1430
  %1432 = vrot.lane.b32.xlu0 %v1347, 8
  %v1433 = vpop.permute.xlu0 %1432
  %1434 = vrot.lane.b32.xlu0 %v1355, 8
  %v1435 = vpop.permute.xlu0 %1434
  %1436 = vrot.lane.b32.xlu0 %v1367, 8
  %v1437 = vpop.permute.xlu0 %1436
  %1438 = vrot.lane.b32.xlu0 %v1375, 8
  %v1439 = vpop.permute.xlu0 %1438
  %vm1440 = vcmask 1046528
  %v1441 = vrot.slane %v975, 1
  %v1442 = vrot.slane %v976, 1
  %v1443 = vsel %vm1440, %v1441, %v1442
  %v1444 = vrot.slane %v1039, 1
  %v1445 = vsel %vm1440, %v1442, %v1444
  %v1446 = vrot.slane %v977, 1
  %v1447 = vrot.slane %v978, 1
  %v1448 = vsel %vm1440, %v1446, %v1447
  %v1449 = vrot.slane %v1040, 1
  %v1450 = vsel %vm1440, %v1447, %v1449
  %v1451 = vrot.slane %v979, 1
  %v1452 = vrot.slane %v980, 1
  %v1453 = vsel %vm1440, %v1451, %v1452
  %v1454 = vrot.slane %v1041, 1
  %v1455 = vsel %vm1440, %v1452, %v1454
  %v1456 = vrot.slane %v981, 1
  %v1457 = vrot.slane %v982, 1
  %v1458 = vsel %vm1440, %v1456, %v1457
  %v1459 = vrot.slane %v1042, 1
  %v1460 = vsel %vm1440, %v1457, %v1459
  %v1461 = vrot.slane %v983, 1
  %v1462 = vrot.slane %v984, 1
  %v1463 = vsel %vm1440, %v1461, %v1462
  %v1464 = vrot.slane %v1043, 1
  %v1465 = vsel %vm1440, %v1462, %v1464
  %v1466 = vrot.slane %v985, 1
  %v1467 = vrot.slane %v986, 1
  %v1468 = vsel %vm1440, %v1466, %v1467
  %v1469 = vrot.slane %v1044, 1
  %v1470 = vsel %vm1440, %v1467, %v1469
  %v1471 = vrot.slane %v987, 1
  %v1472 = vrot.slane %v988, 1
  %v1473 = vsel %vm1440, %v1471, %v1472
  %v1474 = vrot.slane %v1045, 1
  %v1475 = vsel %vm1440, %v1472, %v1474
  %v1476 = vrot.slane %v989, 1
  %v1477 = vrot.slane %v990, 1
  %v1478 = vsel %vm1440, %v1476, %v1477
  %v1479 = vrot.slane %v1046, 1
  %v1480 = vsel %vm1440, %v1477, %v1479
  %v1481 = vrot.slane %v991, 1
  %v1482 = vrot.slane %v992, 1
  %v1483 = vsel %vm1440, %v1481, %v1482
  %v1484 = vrot.slane %v1047, 1
  %v1485 = vsel %vm1440, %v1482, %v1484
  %v1486 = vrot.slane %v993, 1
  %v1487 = vrot.slane %v994, 1
  %v1488 = vsel %vm1440, %v1486, %v1487
  %v1489 = vrot.slane %v1048, 1
  %v1490 = vsel %vm1440, %v1487, %v1489
  %v1491 = vrot.slane %v995, 1
  %v1492 = vrot.slane %v996, 1
  %v1493 = vsel %vm1440, %v1491, %v1492
  %v1494 = vrot.slane %v1049, 1
  %v1495 = vsel %vm1440, %v1492, %v1494
  %v1496 = vrot.slane %v997, 1
  %v1497 = vrot.slane %v998, 1
  %v1498 = vsel %vm1440, %v1496, %v1497
  %v1499 = vrot.slane %v1050, 1
  %v1500 = vsel %vm1440, %v1497, %v1499
  %v1501 = vrot.slane %v999, 1
  %v1502 = vrot.slane %v1000, 1
  %v1503 = vsel %vm1440, %v1501, %v1502
  %v1504 = vrot.slane %v1051, 1
  %v1505 = vsel %vm1440, %v1502, %v1504
  %v1506 = vrot.slane %v1001, 1
  %v1507 = vrot.slane %v1002, 1
  %v1508 = vsel %vm1440, %v1506, %v1507
  %v1509 = vrot.slane %v1052, 1
  %v1510 = vsel %vm1440, %v1507, %v1509
  %v1511 = vrot.slane %v1003, 1
  %v1512 = vrot.slane %v1004, 1
  %v1513 = vsel %vm1440, %v1511, %v1512
  %v1514 = vrot.slane %v1053, 1
  %v1515 = vsel %vm1440, %v1512, %v1514
  %v1516 = vrot.slane %v1005, 1
  %v1517 = vrot.slane %v1006, 1
  %v1518 = vsel %vm1440, %v1516, %v1517
  %v1519 = vrot.slane %v1054, 1
  %v1520 = vsel %vm1440, %v1517, %v1519
  %1521 = vrot.lane.b32.xlu0 %v1443, 16
  %v1522 = vpop.permute.xlu0 %1521
  %1523 = vrot.lane.b32.xlu0 %v1445, 16
  %v1524 = vpop.permute.xlu0 %1523
  %1525 = vrot.lane.b32.xlu0 %v1448, 16
  %v1526 = vpop.permute.xlu0 %1525
  %1527 = vrot.lane.b32.xlu0 %v1450, 16
  %v1528 = vpop.permute.xlu0 %1527
  %1529 = vrot.lane.b32.xlu0 %v1453, 16
  %v1530 = vpop.permute.xlu0 %1529
  %1531 = vrot.lane.b32.xlu0 %v1455, 16
  %v1532 = vpop.permute.xlu0 %1531
  %1533 = vrot.lane.b32.xlu0 %v1458, 16
  %v1534 = vpop.permute.xlu0 %1533
  %1535 = vrot.lane.b32.xlu0 %v1460, 16
  %v1536 = vpop.permute.xlu0 %1535
  %1537 = vrot.lane.b32.xlu0 %v1463, 16
  %v1538 = vpop.permute.xlu0 %1537
  %1539 = vrot.lane.b32.xlu0 %v1465, 16
  %v1540 = vpop.permute.xlu0 %1539
  %1541 = vrot.lane.b32.xlu0 %v1468, 16
  %v1542 = vpop.permute.xlu0 %1541
  %1543 = vrot.lane.b32.xlu0 %v1470, 16
  %v1544 = vpop.permute.xlu0 %1543
  %1545 = vrot.lane.b32.xlu0 %v1473, 16
  %v1546 = vpop.permute.xlu0 %1545
  %1547 = vrot.lane.b32.xlu0 %v1475, 16
  %v1548 = vpop.permute.xlu0 %1547
  %1549 = vrot.lane.b32.xlu0 %v1478, 16
  %v1550 = vpop.permute.xlu0 %1549
  %1551 = vrot.lane.b32.xlu0 %v1480, 16
  %v1552 = vpop.permute.xlu0 %1551
  %1553 = vrot.lane.b32.xlu0 %v1483, 16
  %v1554 = vpop.permute.xlu0 %1553
  %1555 = vrot.lane.b32.xlu0 %v1485, 16
  %v1556 = vpop.permute.xlu0 %1555
  %1557 = vrot.lane.b32.xlu0 %v1488, 16
  %v1558 = vpop.permute.xlu0 %1557
  %1559 = vrot.lane.b32.xlu0 %v1490, 16
  %v1560 = vpop.permute.xlu0 %1559
  %1561 = vrot.lane.b32.xlu0 %v1493, 16
  %v1562 = vpop.permute.xlu0 %1561
  %1563 = vrot.lane.b32.xlu0 %v1495, 16
  %v1564 = vpop.permute.xlu0 %1563
  %1565 = vrot.lane.b32.xlu0 %v1498, 16
  %v1566 = vpop.permute.xlu0 %1565
  %1567 = vrot.lane.b32.xlu0 %v1500, 16
  %v1568 = vpop.permute.xlu0 %1567
  %1569 = vrot.lane.b32.xlu0 %v1503, 16
  %v1570 = vpop.permute.xlu0 %1569
  %1571 = vrot.lane.b32.xlu0 %v1505, 16
  %v1572 = vpop.permute.xlu0 %1571
  %1573 = vrot.lane.b32.xlu0 %v1508, 16
  %v1574 = vpop.permute.xlu0 %1573
  %1575 = vrot.lane.b32.xlu0 %v1510, 16
  %v1576 = vpop.permute.xlu0 %1575
  %1577 = vrot.lane.b32.xlu0 %v1513, 16
  %v1578 = vpop.permute.xlu0 %1577
  %1579 = vrot.lane.b32.xlu0 %v1515, 16
  %v1580 = vpop.permute.xlu0 %1579
  %1581 = vrot.lane.b32.xlu0 %v1518, 16
  %v1582 = vpop.permute.xlu0 %1581
  %1583 = vrot.lane.b32.xlu0 %v1520, 16
  %v1584 = vpop.permute.xlu0 %1583
  %vm1585 = vsmask.f32 6400
  %v1586 = vrot.slane %v1057, 1
  %v1587 = vrot.slane %v1059, 2
  %v1588 = vor.u32 %v1586, %v1587
  %v1589 = vrot.slane %v1068, 1
  %v1590 = vrot.slane %v1064, 2
  %v1591 = vor.u32 %v1589, %v1590
  %v1592 = vsel %vm1585, %v1588, %v1591
  %v1593 = vshrl.u32 %v1039, 16
  %v1595 = vrot.slane %v1593, 1
  %v1596 = vrot.slane %v1072, 2
  %v1597 = vor.u32 %v1595, %v1596
  %v1598 = vsel %vm1585, %v1591, %v1597
  %v1599 = vrot.slane %v1077, 1
  %v1600 = vrot.slane %v1079, 2
  %v1601 = vor.u32 %v1599, %v1600
  %v1602 = vrot.slane %v1088, 1
  %v1603 = vrot.slane %v1084, 2
  %v1604 = vor.u32 %v1602, %v1603
  %v1605 = vsel %vm1585, %v1601, %v1604
  %v1606 = vshrl.u32 %v1040, 16
  %v1608 = vrot.slane %v1606, 1
  %v1609 = vrot.slane %v1092, 2
  %v1610 = vor.u32 %v1608, %v1609
  %v1611 = vsel %vm1585, %v1604, %v1610
  %v1612 = vrot.slane %v1097, 1
  %v1613 = vrot.slane %v1099, 2
  %v1614 = vor.u32 %v1612, %v1613
  %v1615 = vrot.slane %v1108, 1
  %v1616 = vrot.slane %v1104, 2
  %v1617 = vor.u32 %v1615, %v1616
  %v1618 = vsel %vm1585, %v1614, %v1617
  %v1619 = vshrl.u32 %v1041, 16
  %v1621 = vrot.slane %v1619, 1
  %v1622 = vrot.slane %v1112, 2
  %v1623 = vor.u32 %v1621, %v1622
  %v1624 = vsel %vm1585, %v1617, %v1623
  %v1625 = vrot.slane %v1117, 1
  %v1626 = vrot.slane %v1119, 2
  %v1627 = vor.u32 %v1625, %v1626
  %v1628 = vrot.slane %v1128, 1
  %v1629 = vrot.slane %v1124, 2
  %v1630 = vor.u32 %v1628, %v1629
  %v1631 = vsel %vm1585, %v1627, %v1630
  %v1632 = vshrl.u32 %v1042, 16
  %v1634 = vrot.slane %v1632, 1
  %v1635 = vrot.slane %v1132, 2
  %v1636 = vor.u32 %v1634, %v1635
  %v1637 = vsel %vm1585, %v1630, %v1636
  %v1638 = vrot.slane %v1137, 1
  %v1639 = vrot.slane %v1139, 2
  %v1640 = vor.u32 %v1638, %v1639
  %v1641 = vrot.slane %v1148, 1
  %v1642 = vrot.slane %v1144, 2
  %v1643 = vor.u32 %v1641, %v1642
  %v1644 = vsel %vm1585, %v1640, %v1643
  %v1645 = vshrl.u32 %v1043, 16
  %v1647 = vrot.slane %v1645, 1
  %v1648 = vrot.slane %v1152, 2
  %v1649 = vor.u32 %v1647, %v1648
  %v1650 = vsel %vm1585, %v1643, %v1649
  %v1651 = vrot.slane %v1157, 1
  %v1652 = vrot.slane %v1159, 2
  %v1653 = vor.u32 %v1651, %v1652
  %v1654 = vrot.slane %v1168, 1
  %v1655 = vrot.slane %v1164, 2
  %v1656 = vor.u32 %v1654, %v1655
  %v1657 = vsel %vm1585, %v1653, %v1656
  %v1658 = vshrl.u32 %v1044, 16
  %v1660 = vrot.slane %v1658, 1
  %v1661 = vrot.slane %v1172, 2
  %v1662 = vor.u32 %v1660, %v1661
  %v1663 = vsel %vm1585, %v1656, %v1662
  %v1664 = vrot.slane %v1177, 1
  %v1665 = vrot.slane %v1179, 2
  %v1666 = vor.u32 %v1664, %v1665
  %v1667 = vrot.slane %v1188, 1
  %v1668 = vrot.slane %v1184, 2
  %v1669 = vor.u32 %v1667, %v1668
  %v1670 = vsel %vm1585, %v1666, %v1669
  %v1671 = vshrl.u32 %v1045, 16
  %v1673 = vrot.slane %v1671, 1
  %v1674 = vrot.slane %v1192, 2
  %v1675 = vor.u32 %v1673, %v1674
  %v1676 = vsel %vm1585, %v1669, %v1675
  %v1677 = vrot.slane %v1197, 1
  %v1678 = vrot.slane %v1199, 2
  %v1679 = vor.u32 %v1677, %v1678
  %v1680 = vrot.slane %v1208, 1
  %v1681 = vrot.slane %v1204, 2
  %v1682 = vor.u32 %v1680, %v1681
  %v1683 = vsel %vm1585, %v1679, %v1682
  %v1684 = vshrl.u32 %v1046, 16
  %v1686 = vrot.slane %v1684, 1
  %v1687 = vrot.slane %v1212, 2
  %v1688 = vor.u32 %v1686, %v1687
  %v1689 = vsel %vm1585, %v1682, %v1688
  %v1690 = vrot.slane %v1217, 1
  %v1691 = vrot.slane %v1219, 2
  %v1692 = vor.u32 %v1690, %v1691
  %v1693 = vrot.slane %v1228, 1
  %v1694 = vrot.slane %v1224, 2
  %v1695 = vor.u32 %v1693, %v1694
  %v1696 = vsel %vm1585, %v1692, %v1695
  %v1697 = vshrl.u32 %v1047, 16
  %v1699 = vrot.slane %v1697, 1
  %v1700 = vrot.slane %v1232, 2
  %v1701 = vor.u32 %v1699, %v1700
  %v1702 = vsel %vm1585, %v1695, %v1701
  %v1703 = vrot.slane %v1237, 1
  %v1704 = vrot.slane %v1239, 2
  %v1705 = vor.u32 %v1703, %v1704
  %v1706 = vrot.slane %v1248, 1
  %v1707 = vrot.slane %v1244, 2
  %v1708 = vor.u32 %v1706, %v1707
  %v1709 = vsel %vm1585, %v1705, %v1708
  %v1710 = vshrl.u32 %v1048, 16
  %v1712 = vrot.slane %v1710, 1
  %v1713 = vrot.slane %v1252, 2
  %v1714 = vor.u32 %v1712, %v1713
  %v1715 = vsel %vm1585, %v1708, %v1714
  %v1716 = vrot.slane %v1257, 1
  %v1717 = vrot.slane %v1259, 2
  %v1718 = vor.u32 %v1716, %v1717
  %v1719 = vrot.slane %v1268, 1
  %v1720 = vrot.slane %v1264, 2
  %v1721 = vor.u32 %v1719, %v1720
  %v1722 = vsel %vm1585, %v1718, %v1721
  %v1723 = vshrl.u32 %v1049, 16
  %v1725 = vrot.slane %v1723, 1
  %v1726 = vrot.slane %v1272, 2
  %v1727 = vor.u32 %v1725, %v1726
  %v1728 = vsel %vm1585, %v1721, %v1727
  %v1729 = vrot.slane %v1277, 1
  %v1730 = vrot.slane %v1279, 2
  %v1731 = vor.u32 %v1729, %v1730
  %v1732 = vrot.slane %v1288, 1
  %v1733 = vrot.slane %v1284, 2
  %v1734 = vor.u32 %v1732, %v1733
  %v1735 = vsel %vm1585, %v1731, %v1734
  %v1736 = vshrl.u32 %v1050, 16
  %v1738 = vrot.slane %v1736, 1
  %v1739 = vrot.slane %v1292, 2
  %v1740 = vor.u32 %v1738, %v1739
  %v1741 = vsel %vm1585, %v1734, %v1740
  %v1742 = vrot.slane %v1297, 1
  %v1743 = vrot.slane %v1299, 2
  %v1744 = vor.u32 %v1742, %v1743
  %v1745 = vrot.slane %v1308, 1
  %v1746 = vrot.slane %v1304, 2
  %v1747 = vor.u32 %v1745, %v1746
  %v1748 = vsel %vm1585, %v1744, %v1747
  %v1749 = vshrl.u32 %v1051, 16
  %v1751 = vrot.slane %v1749, 1
  %v1752 = vrot.slane %v1312, 2
  %v1753 = vor.u32 %v1751, %v1752
  %v1754 = vsel %vm1585, %v1747, %v1753
  %v1755 = vrot.slane %v1317, 1
  %v1756 = vrot.slane %v1319, 2
  %v1757 = vor.u32 %v1755, %v1756
  %v1758 = vrot.slane %v1328, 1
  %v1759 = vrot.slane %v1324, 2
  %v1760 = vor.u32 %v1758, %v1759
  %v1761 = vsel %vm1585, %v1757, %v1760
  %v1762 = vshrl.u32 %v1052, 16
  %v1764 = vrot.slane %v1762, 1
  %v1765 = vrot.slane %v1332, 2
  %v1766 = vor.u32 %v1764, %v1765
  %v1767 = vsel %vm1585, %v1760, %v1766
  %v1768 = vrot.slane %v1337, 1
  %v1769 = vrot.slane %v1339, 2
  %v1770 = vor.u32 %v1768, %v1769
  %v1771 = vrot.slane %v1348, 1
  %v1772 = vrot.slane %v1344, 2
  %v1773 = vor.u32 %v1771, %v1772
  %v1774 = vsel %vm1585, %v1770, %v1773
  %v1775 = vshrl.u32 %v1053, 16
  %v1777 = vrot.slane %v1775, 1
  %v1778 = vrot.slane %v1352, 2
  %v1779 = vor.u32 %v1777, %v1778
  %v1780 = vsel %vm1585, %v1773, %v1779
  %v1781 = vrot.slane %v1357, 1
  %v1782 = vrot.slane %v1359, 2
  %v1783 = vor.u32 %v1781, %v1782
  %v1784 = vrot.slane %v1368, 1
  %v1785 = vrot.slane %v1364, 2
  %v1786 = vor.u32 %v1784, %v1785
  %v1787 = vsel %vm1585, %v1783, %v1786
  %v1788 = vshrl.u32 %v1054, 16
  %v1790 = vrot.slane %v1788, 1
  %v1791 = vrot.slane %v1372, 2
  %v1792 = vor.u32 %v1790, %v1791
  %v1793 = vsel %vm1585, %v1786, %v1792
  %1794 = vrot.lane.b32.xlu0 %v1592, 24
  %v1795 = vpop.permute.xlu0 %1794
  %1796 = vrot.lane.b32.xlu0 %v1598, 24
  %v1797 = vpop.permute.xlu0 %1796
  %1798 = vrot.lane.b32.xlu0 %v1605, 24
  %v1799 = vpop.permute.xlu0 %1798
  %1800 = vrot.lane.b32.xlu0 %v1611, 24
  %v1801 = vpop.permute.xlu0 %1800
  %1802 = vrot.lane.b32.xlu0 %v1618, 24
  %v1803 = vpop.permute.xlu0 %1802
  %1804 = vrot.lane.b32.xlu0 %v1624, 24
  %v1805 = vpop.permute.xlu0 %1804
  %1806 = vrot.lane.b32.xlu0 %v1631, 24
  %v1807 = vpop.permute.xlu0 %1806
  %1808 = vrot.lane.b32.xlu0 %v1637, 24
  %v1809 = vpop.permute.xlu0 %1808
  %1810 = vrot.lane.b32.xlu0 %v1644, 24
  %v1811 = vpop.permute.xlu0 %1810
  %1812 = vrot.lane.b32.xlu0 %v1650, 24
  %v1813 = vpop.permute.xlu0 %1812
  %1814 = vrot.lane.b32.xlu0 %v1657, 24
  %v1815 = vpop.permute.xlu0 %1814
  %1816 = vrot.lane.b32.xlu0 %v1663, 24
  %v1817 = vpop.permute.xlu0 %1816
  %1818 = vrot.lane.b32.xlu0 %v1670, 24
  %v1819 = vpop.permute.xlu0 %1818
  %1820 = vrot.lane.b32.xlu0 %v1676, 24
  %v1821 = vpop.permute.xlu0 %1820
  %1822 = vrot.lane.b32.xlu0 %v1683, 24
  %v1823 = vpop.permute.xlu0 %1822
  %1824 = vrot.lane.b32.xlu0 %v1689, 24
  %v1825 = vpop.permute.xlu0 %1824
  %1826 = vrot.lane.b32.xlu0 %v1696, 24
  %v1827 = vpop.permute.xlu0 %1826
  %1828 = vrot.lane.b32.xlu0 %v1702, 24
  %v1829 = vpop.permute.xlu0 %1828
  %1830 = vrot.lane.b32.xlu0 %v1709, 24
  %v1831 = vpop.permute.xlu0 %1830
  %1832 = vrot.lane.b32.xlu0 %v1715, 24
  %v1833 = vpop.permute.xlu0 %1832
  %1834 = vrot.lane.b32.xlu0 %v1722, 24
  %v1835 = vpop.permute.xlu0 %1834
  %1836 = vrot.lane.b32.xlu0 %v1728, 24
  %v1837 = vpop.permute.xlu0 %1836
  %1838 = vrot.lane.b32.xlu0 %v1735, 24
  %v1839 = vpop.permute.xlu0 %1838
  %1840 = vrot.lane.b32.xlu0 %v1741, 24
  %v1841 = vpop.permute.xlu0 %1840
  %1842 = vrot.lane.b32.xlu0 %v1748, 24
  %v1843 = vpop.permute.xlu0 %1842
  %1844 = vrot.lane.b32.xlu0 %v1754, 24
  %v1845 = vpop.permute.xlu0 %1844
  %1846 = vrot.lane.b32.xlu0 %v1761, 24
  %v1847 = vpop.permute.xlu0 %1846
  %1848 = vrot.lane.b32.xlu0 %v1767, 24
  %v1849 = vpop.permute.xlu0 %1848
  %1850 = vrot.lane.b32.xlu0 %v1774, 24
  %v1851 = vpop.permute.xlu0 %1850
  %1852 = vrot.lane.b32.xlu0 %v1780, 24
  %v1853 = vpop.permute.xlu0 %1852
  %1854 = vrot.lane.b32.xlu0 %v1787, 24
  %v1855 = vpop.permute.xlu0 %1854
  %1856 = vrot.lane.b32.xlu0 %v1793, 24
  %v1857 = vpop.permute.xlu0 %1856
  %vm1858 = vcmask 1045504
  %v1859 = vrot.slane %v975, 2
  %v1860 = vrot.slane %v976, 2
  %v1861 = vsel %vm1858, %v1859, %v1860
  %v1862 = vrot.slane %v1039, 2
  %v1863 = vsel %vm1858, %v1860, %v1862
  %v1864 = vrot.slane %v977, 2
  %v1865 = vrot.slane %v978, 2
  %v1866 = vsel %vm1858, %v1864, %v1865
  %v1867 = vrot.slane %v1040, 2
  %v1868 = vsel %vm1858, %v1865, %v1867
  %v1869 = vrot.slane %v979, 2
  %v1870 = vrot.slane %v980, 2
  %v1871 = vsel %vm1858, %v1869, %v1870
  %v1872 = vrot.slane %v1041, 2
  %v1873 = vsel %vm1858, %v1870, %v1872
  %v1874 = vrot.slane %v981, 2
  %v1875 = vrot.slane %v982, 2
  %v1876 = vsel %vm1858, %v1874, %v1875
  %v1877 = vrot.slane %v1042, 2
  %v1878 = vsel %vm1858, %v1875, %v1877
  %v1879 = vrot.slane %v983, 2
  %v1880 = vrot.slane %v984, 2
  %v1881 = vsel %vm1858, %v1879, %v1880
  %v1882 = vrot.slane %v1043, 2
  %v1883 = vsel %vm1858, %v1880, %v1882
  %v1884 = vrot.slane %v985, 2
  %v1885 = vrot.slane %v986, 2
  %v1886 = vsel %vm1858, %v1884, %v1885
  %v1887 = vrot.slane %v1044, 2
  %v1888 = vsel %vm1858, %v1885, %v1887
  %v1889 = vrot.slane %v987, 2
  %v1890 = vrot.slane %v988, 2
  %v1891 = vsel %vm1858, %v1889, %v1890
  %v1892 = vrot.slane %v1045, 2
  %v1893 = vsel %vm1858, %v1890, %v1892
  %v1894 = vrot.slane %v989, 2
  %v1895 = vrot.slane %v990, 2
  %v1896 = vsel %vm1858, %v1894, %v1895
  %v1897 = vrot.slane %v1046, 2
  %v1898 = vsel %vm1858, %v1895, %v1897
  %v1899 = vrot.slane %v991, 2
  %v1900 = vrot.slane %v992, 2
  %v1901 = vsel %vm1858, %v1899, %v1900
  %v1902 = vrot.slane %v1047, 2
  %v1903 = vsel %vm1858, %v1900, %v1902
  %v1904 = vrot.slane %v993, 2
  %v1905 = vrot.slane %v994, 2
  %v1906 = vsel %vm1858, %v1904, %v1905
  %v1907 = vrot.slane %v1048, 2
  %v1908 = vsel %vm1858, %v1905, %v1907
  %v1909 = vrot.slane %v995, 2
  %v1910 = vrot.slane %v996, 2
  %v1911 = vsel %vm1858, %v1909, %v1910
  %v1912 = vrot.slane %v1049, 2
  %v1913 = vsel %vm1858, %v1910, %v1912
  %v1914 = vrot.slane %v997, 2
  %v1915 = vrot.slane %v998, 2
  %v1916 = vsel %vm1858, %v1914, %v1915
  %v1917 = vrot.slane %v1050, 2
  %v1918 = vsel %vm1858, %v1915, %v1917
  %v1919 = vrot.slane %v999, 2
  %v1920 = vrot.slane %v1000, 2
  %v1921 = vsel %vm1858, %v1919, %v1920
  %v1922 = vrot.slane %v1051, 2
  %v1923 = vsel %vm1858, %v1920, %v1922
  %v1924 = vrot.slane %v1001, 2
  %v1925 = vrot.slane %v1002, 2
  %v1926 = vsel %vm1858, %v1924, %v1925
  %v1927 = vrot.slane %v1052, 2
  %v1928 = vsel %vm1858, %v1925, %v1927
  %v1929 = vrot.slane %v1003, 2
  %v1930 = vrot.slane %v1004, 2
  %v1931 = vsel %vm1858, %v1929, %v1930
  %v1932 = vrot.slane %v1053, 2
  %v1933 = vsel %vm1858, %v1930, %v1932
  %v1934 = vrot.slane %v1005, 2
  %v1935 = vrot.slane %v1006, 2
  %v1936 = vsel %vm1858, %v1934, %v1935
  %v1937 = vrot.slane %v1054, 2
  %v1938 = vsel %vm1858, %v1935, %v1937
  %1939 = vrot.lane.b32.xlu0 %v1861, 32
  %v1940 = vpop.permute.xlu0 %1939
  %1941 = vrot.lane.b32.xlu0 %v1863, 32
  %v1942 = vpop.permute.xlu0 %1941
  %1943 = vrot.lane.b32.xlu0 %v1866, 32
  %v1944 = vpop.permute.xlu0 %1943
  %1945 = vrot.lane.b32.xlu0 %v1868, 32
  %v1946 = vpop.permute.xlu0 %1945
  %1947 = vrot.lane.b32.xlu0 %v1871, 32
  %v1948 = vpop.permute.xlu0 %1947
  %1949 = vrot.lane.b32.xlu0 %v1873, 32
  %v1950 = vpop.permute.xlu0 %1949
  %1951 = vrot.lane.b32.xlu0 %v1876, 32
  %v1952 = vpop.permute.xlu0 %1951
  %1953 = vrot.lane.b32.xlu0 %v1878, 32
  %v1954 = vpop.permute.xlu0 %1953
  %1955 = vrot.lane.b32.xlu0 %v1881, 32
  %v1956 = vpop.permute.xlu0 %1955
  %1957 = vrot.lane.b32.xlu0 %v1883, 32
  %v1958 = vpop.permute.xlu0 %1957
  %1959 = vrot.lane.b32.xlu0 %v1886, 32
  %v1960 = vpop.permute.xlu0 %1959
  %1961 = vrot.lane.b32.xlu0 %v1888, 32
  %v1962 = vpop.permute.xlu0 %1961
  %1963 = vrot.lane.b32.xlu0 %v1891, 32
  %v1964 = vpop.permute.xlu0 %1963
  %1965 = vrot.lane.b32.xlu0 %v1893, 32
  %v1966 = vpop.permute.xlu0 %1965
  %1967 = vrot.lane.b32.xlu0 %v1896, 32
  %v1968 = vpop.permute.xlu0 %1967
  %1969 = vrot.lane.b32.xlu0 %v1898, 32
  %v1970 = vpop.permute.xlu0 %1969
  %1971 = vrot.lane.b32.xlu0 %v1901, 32
  %v1972 = vpop.permute.xlu0 %1971
  %1973 = vrot.lane.b32.xlu0 %v1903, 32
  %v1974 = vpop.permute.xlu0 %1973
  %1975 = vrot.lane.b32.xlu0 %v1906, 32
  %v1976 = vpop.permute.xlu0 %1975
  %1977 = vrot.lane.b32.xlu0 %v1908, 32
  %v1978 = vpop.permute.xlu0 %1977
  %1979 = vrot.lane.b32.xlu0 %v1911, 32
  %v1980 = vpop.permute.xlu0 %1979
  %1981 = vrot.lane.b32.xlu0 %v1913, 32
  %v1982 = vpop.permute.xlu0 %1981
  %1983 = vrot.lane.b32.xlu0 %v1916, 32
  %v1984 = vpop.permute.xlu0 %1983
  %1985 = vrot.lane.b32.xlu0 %v1918, 32
  %v1986 = vpop.permute.xlu0 %1985
  %1987 = vrot.lane.b32.xlu0 %v1921, 32
  %v1988 = vpop.permute.xlu0 %1987
  %1989 = vrot.lane.b32.xlu0 %v1923, 32
  %v1990 = vpop.permute.xlu0 %1989
  %1991 = vrot.lane.b32.xlu0 %v1926, 32
  %v1992 = vpop.permute.xlu0 %1991
  %1993 = vrot.lane.b32.xlu0 %v1928, 32
  %v1994 = vpop.permute.xlu0 %1993
  %1995 = vrot.lane.b32.xlu0 %v1931, 32
  %v1996 = vpop.permute.xlu0 %1995
  %1997 = vrot.lane.b32.xlu0 %v1933, 32
  %v1998 = vpop.permute.xlu0 %1997
  %1999 = vrot.lane.b32.xlu0 %v1936, 32
  %v2000 = vpop.permute.xlu0 %1999
  %2001 = vrot.lane.b32.xlu0 %v1938, 32
  %v2002 = vpop.permute.xlu0 %2001
  %vm2003 = vcmask 64512
  %v2005 = vsel %vm2003, %v975, %v1377
  %v2007 = vsel %vm2003, %v976, %v1379
  %v2009 = vsel %vm2003, %v977, %v1381
  %v2011 = vsel %vm2003, %v978, %v1383
  %v2013 = vsel %vm2003, %v979, %v1385
  %v2015 = vsel %vm2003, %v980, %v1387
  %v2017 = vsel %vm2003, %v981, %v1389
  %v2019 = vsel %vm2003, %v982, %v1391
  %v2021 = vsel %vm2003, %v983, %v1393
  %v2023 = vsel %vm2003, %v984, %v1395
  %v2025 = vsel %vm2003, %v985, %v1397
  %v2027 = vsel %vm2003, %v986, %v1399
  %v2029 = vsel %vm2003, %v987, %v1401
  %v2031 = vsel %vm2003, %v988, %v1403
  %v2033 = vsel %vm2003, %v989, %v1405
  %v2035 = vsel %vm2003, %v990, %v1407
  %v2037 = vsel %vm2003, %v991, %v1409
  %v2039 = vsel %vm2003, %v992, %v1411
  %v2041 = vsel %vm2003, %v993, %v1413
  %v2043 = vsel %vm2003, %v994, %v1415
  %v2045 = vsel %vm2003, %v995, %v1417
  %v2047 = vsel %vm2003, %v996, %v1419
  %v2049 = vsel %vm2003, %v997, %v1421
  %v2051 = vsel %vm2003, %v998, %v1423
  %v2053 = vsel %vm2003, %v999, %v1425
  %v2055 = vsel %vm2003, %v1000, %v1427
  %v2057 = vsel %vm2003, %v1001, %v1429
  %v2059 = vsel %vm2003, %v1002, %v1431
  %v2061 = vsel %vm2003, %v1003, %v1433
  %v2063 = vsel %vm2003, %v1004, %v1435
  %v2065 = vsel %vm2003, %v1005, %v1437
  %v2067 = vsel %vm2003, %v1006, %v1439
  %vm2068 = vcmask 130048
  %v2070 = vsel %vm2068, %v2005, %v1522
  %v2072 = vsel %vm2068, %v2007, %v1524
  %v2074 = vsel %vm2068, %v2009, %v1526
  %v2076 = vsel %vm2068, %v2011, %v1528
  %v2078 = vsel %vm2068, %v2013, %v1530
  %v2080 = vsel %vm2068, %v2015, %v1532
  %v2082 = vsel %vm2068, %v2017, %v1534
  %v2084 = vsel %vm2068, %v2019, %v1536
  %v2086 = vsel %vm2068, %v2021, %v1538
  %v2088 = vsel %vm2068, %v2023, %v1540
  %v2090 = vsel %vm2068, %v2025, %v1542
  %v2092 = vsel %vm2068, %v2027, %v1544
  %v2094 = vsel %vm2068, %v2029, %v1546
  %v2096 = vsel %vm2068, %v2031, %v1548
  %v2098 = vsel %vm2068, %v2033, %v1550
  %v2100 = vsel %vm2068, %v2035, %v1552
  %v2102 = vsel %vm2068, %v2037, %v1554
  %v2104 = vsel %vm2068, %v2039, %v1556
  %v2106 = vsel %vm2068, %v2041, %v1558
  %v2108 = vsel %vm2068, %v2043, %v1560
  %v2110 = vsel %vm2068, %v2045, %v1562
  %v2112 = vsel %vm2068, %v2047, %v1564
  %v2114 = vsel %vm2068, %v2049, %v1566
  %v2116 = vsel %vm2068, %v2051, %v1568
  %v2118 = vsel %vm2068, %v2053, %v1570
  %v2120 = vsel %vm2068, %v2055, %v1572
  %v2122 = vsel %vm2068, %v2057, %v1574
  %v2124 = vsel %vm2068, %v2059, %v1576
  %v2126 = vsel %vm2068, %v2061, %v1578
  %v2128 = vsel %vm2068, %v2063, %v1580
  %v2130 = vsel %vm2068, %v2065, %v1582
  %v2132 = vsel %vm2068, %v2067, %v1584
  %vm2133 = vcmask 195584
  %v2135 = vsel %vm2133, %v2070, %v1795
  %v2137 = vsel %vm2133, %v2072, %v1797
  %v2139 = vsel %vm2133, %v2074, %v1799
  %v2141 = vsel %vm2133, %v2076, %v1801
  %v2143 = vsel %vm2133, %v2078, %v1803
  %v2145 = vsel %vm2133, %v2080, %v1805
  %v2147 = vsel %vm2133, %v2082, %v1807
  %v2149 = vsel %vm2133, %v2084, %v1809
  %v2151 = vsel %vm2133, %v2086, %v1811
  %v2153 = vsel %vm2133, %v2088, %v1813
  %v2155 = vsel %vm2133, %v2090, %v1815
  %v2157 = vsel %vm2133, %v2092, %v1817
  %v2159 = vsel %vm2133, %v2094, %v1819
  %v2161 = vsel %vm2133, %v2096, %v1821
  %v2163 = vsel %vm2133, %v2098, %v1823
  %v2165 = vsel %vm2133, %v2100, %v1825
  %v2167 = vsel %vm2133, %v2102, %v1827
  %v2169 = vsel %vm2133, %v2104, %v1829
  %v2171 = vsel %vm2133, %v2106, %v1831
  %v2173 = vsel %vm2133, %v2108, %v1833
  %v2175 = vsel %vm2133, %v2110, %v1835
  %v2177 = vsel %vm2133, %v2112, %v1837
  %v2179 = vsel %vm2133, %v2114, %v1839
  %v2181 = vsel %vm2133, %v2116, %v1841
  %v2183 = vsel %vm2133, %v2118, %v1843
  %v2185 = vsel %vm2133, %v2120, %v1845
  %v2187 = vsel %vm2133, %v2122, %v1847
  %v2189 = vsel %vm2133, %v2124, %v1849
  %v2191 = vsel %vm2133, %v2126, %v1851
  %v2193 = vsel %vm2133, %v2128, %v1853
  %v2195 = vsel %vm2133, %v2130, %v1855
  %v2197 = vsel %vm2133, %v2132, %v1857
  %vm2198 = vcmask 261120
  %v2200 = vsel %vm2198, %v2135, %v1940
  %v2202 = vsel %vm2198, %v2137, %v1942
  %v2204 = vsel %vm2198, %v2139, %v1944
  %v2206 = vsel %vm2198, %v2141, %v1946
  %v2208 = vsel %vm2198, %v2143, %v1948
  %v2210 = vsel %vm2198, %v2145, %v1950
  %v2212 = vsel %vm2198, %v2147, %v1952
  %v2214 = vsel %vm2198, %v2149, %v1954
  %v2216 = vsel %vm2198, %v2151, %v1956
  %v2218 = vsel %vm2198, %v2153, %v1958
  %v2220 = vsel %vm2198, %v2155, %v1960
  %v2222 = vsel %vm2198, %v2157, %v1962
  %v2224 = vsel %vm2198, %v2159, %v1964
  %v2226 = vsel %vm2198, %v2161, %v1966
  %v2228 = vsel %vm2198, %v2163, %v1968
  %v2230 = vsel %vm2198, %v2165, %v1970
  %v2232 = vsel %vm2198, %v2167, %v1972
  %v2234 = vsel %vm2198, %v2169, %v1974
  %v2236 = vsel %vm2198, %v2171, %v1976
  %v2238 = vsel %vm2198, %v2173, %v1978
  %v2240 = vsel %vm2198, %v2175, %v1980
  %v2242 = vsel %vm2198, %v2177, %v1982
  %v2244 = vsel %vm2198, %v2179, %v1984
  %v2246 = vsel %vm2198, %v2181, %v1986
  %v2248 = vsel %vm2198, %v2183, %v1988
  %v2250 = vsel %vm2198, %v2185, %v1990
  %v2252 = vsel %vm2198, %v2187, %v1992
  %v2254 = vsel %vm2198, %v2189, %v1994
  %v2256 = vsel %vm2198, %v2191, %v1996
  %v2258 = vsel %vm2198, %v2193, %v1998
  %v2260 = vsel %vm2198, %v2195, %v2000
  %v2262 = vsel %vm2198, %v2197, %v2002
  %v2263 = vld [vmem:[%s2] sm:$0xff]
  %v2264 = vld [vmem:[%s2 + $0x8] sm:$0xf]
  %v2265 = vld [vmem:[%s2 + $0xc] sm:$0xff]
  %v2266 = vld [vmem:[%s2 + $0x14] sm:$0xf]
  %v2267 = vld [vmem:[%s2 + $0x18] sm:$0xff]
  %v2268 = vld [vmem:[%s2 + $0x20] sm:$0xf]
  %v2269 = vld [vmem:[%s2 + $0x24] sm:$0xff]
  %v2270 = vld [vmem:[%s2 + $0x2c] sm:$0xf]
  %v2271 = vld [vmem:[%s2 + $0x30] sm:$0xff]
  %v2272 = vld [vmem:[%s2 + $0x38] sm:$0xf]
  %v2273 = vld [vmem:[%s3] sm:$0x7]
  %v2275 = vperm.slane %v2273, 0
  %v2276 = vperm.slane %v2273, 1
  %v2277 = vperm.slane %v2273, 2
  %v2291 = vunpack.c.l.b16 %v2263
  %v2292 = vunpack.c.h.b16 %v2263
  %v2293 = vunpack.c.l.b16 %v2264
  %v2294 = vunpack.c.l.b16 %v2265
  %v2295 = vunpack.c.h.b16 %v2265
  %v2296 = vunpack.c.l.b16 %v2266
  %v2297 = vunpack.c.l.b16 %v2267
  %v2298 = vunpack.c.h.b16 %v2267
  %v2299 = vunpack.c.l.b16 %v2268
  %v2300 = vunpack.c.l.b16 %v2269
  %v2301 = vunpack.c.h.b16 %v2269
  %v2302 = vunpack.c.l.b16 %v2270
  %v2303 = vunpack.c.l.b16 %v2271
  %v2304 = vunpack.c.h.b16 %v2271
  %v2305 = vunpack.c.l.b16 %v2272
  %v2306 = vpack.c.b16 %v2294, %v2291
  %v2307 = vpack.c.b16 %v2295, %v2292
  %v2308 = vpack.c.b16 %v2296, %v2293
  %v2309 = vpack.c.b16 %v2300, %v2297
  %v2310 = vpack.c.b16 %v2301, %v2298
  %v2311 = vpack.c.b16 %v2302, %v2299
  %v2312 = vpack.c.b16 %v2303, %v2303
  %v2313 = vpack.c.b16 %v2304, %v2304
  %v2314 = vpack.c.b16 %v2305, %v2305
  %vm2321 = vcmask 326656
  %v2322 = vsel %vm2321, %v2200, 0
  %v2324 = vsel %vm2321, %v2202, 0
  %v2326 = vsel %vm2321, %v2204, 0
  %v2328 = vsel %vm2321, %v2206, 0
  %v2330 = vsel %vm2321, %v2208, 0
  %v2332 = vsel %vm2321, %v2210, 0
  %v2334 = vsel %vm2321, %v2212, 0
  %v2336 = vsel %vm2321, %v2214, 0
  %v2338 = vsel %vm2321, %v2216, 0
  %v2340 = vsel %vm2321, %v2218, 0
  %v2342 = vsel %vm2321, %v2220, 0
  %v2344 = vsel %vm2321, %v2222, 0
  %v2346 = vsel %vm2321, %v2224, 0
  %v2348 = vsel %vm2321, %v2226, 0
  %v2350 = vsel %vm2321, %v2228, 0
  %v2352 = vsel %vm2321, %v2230, 0
  %v2354 = vsel %vm2321, %v2232, 0
  %v2356 = vsel %vm2321, %v2234, 0
  %v2358 = vsel %vm2321, %v2236, 0
  %v2360 = vsel %vm2321, %v2238, 0
  %v2362 = vsel %vm2321, %v2240, 0
  %v2364 = vsel %vm2321, %v2242, 0
  %v2366 = vsel %vm2321, %v2244, 0
  %v2368 = vsel %vm2321, %v2246, 0
  %v2370 = vsel %vm2321, %v2248, 0
  %v2372 = vsel %vm2321, %v2250, 0
  %v2374 = vsel %vm2321, %v2252, 0
  %v2376 = vsel %vm2321, %v2254, 0
  %v2378 = vsel %vm2321, %v2256, 0
  %v2380 = vsel %vm2321, %v2258, 0
  %v2382 = vsel %vm2321, %v2260, 0
  %v2384 = vsel %vm2321, %v2262, 0
  %vm2386 = vcmask 1043456
  %v2388 = vsel %vm2386, %v2312, 0
  %v2391 = vsel %vm2386, %v2313, 0
  %v2394 = vsel %vm2386, %v2314, 0
  %2396 = vmatpush.bf16.msra.mxu0 0
  %2397 = vmatpush.bf16.msra.mxu0 0
  %2398 = vmatpush.bf16.msra.mxu0 0
  %2399 = vmatpush.bf16.msra.mxu0 0
  %2400 = vmatpush.bf16.msra.mxu0 0
  %2401 = vmatpush.bf16.msra.mxu0 %v2388
  %2402 = vmatpush.bf16.msra.mxu0 %v2309
  %2403 = vmatpush.bf16.msra.mxu0 %v2306
  %2404 = vmatmul.bf16.gmra.mxu0 %v2322
  %v2405 = vpop.f32.mrf.mxu0
  %v2406 = vadd.f32 %v2275, %v2405
  %v2407 = vpop.f32.mrf.mxu0
  %v2408 = vadd.f32 %v2275, %v2407
  %2409 = vmatmul.bf16.gmra.mxu0 %v2324
  %v2410 = vpop.f32.mrf.mxu0
  %v2411 = vadd.f32 %v2275, %v2410
  %v2412 = vpop.f32.mrf.mxu0
  %v2413 = vadd.f32 %v2275, %v2412
  %2414 = vmatmul.bf16.gmra.mxu0 %v2326
  %v2415 = vpop.f32.mrf.mxu0
  %v2416 = vadd.f32 %v2275, %v2415
  %v2417 = vpop.f32.mrf.mxu0
  %v2418 = vadd.f32 %v2275, %v2417
  %2419 = vmatmul.bf16.gmra.mxu0 %v2328
  %v2420 = vpop.f32.mrf.mxu0
  %v2421 = vadd.f32 %v2275, %v2420
  %v2422 = vpop.f32.mrf.mxu0
  %v2423 = vadd.f32 %v2275, %v2422
  %2424 = vmatmul.bf16.gmra.mxu0 %v2330
  %v2425 = vpop.f32.mrf.mxu0
  %v2426 = vadd.f32 %v2275, %v2425
  %v2427 = vpop.f32.mrf.mxu0
  %v2428 = vadd.f32 %v2275, %v2427
  %2429 = vmatmul.bf16.gmra.mxu0 %v2332
  %v2430 = vpop.f32.mrf.mxu0
  %v2431 = vadd.f32 %v2275, %v2430
  %v2432 = vpop.f32.mrf.mxu0
  %v2433 = vadd.f32 %v2275, %v2432
  %2434 = vmatmul.bf16.gmra.mxu0 %v2334
  %v2435 = vpop.f32.mrf.mxu0
  %v2436 = vadd.f32 %v2275, %v2435
  %v2437 = vpop.f32.mrf.mxu0
  %v2438 = vadd.f32 %v2275, %v2437
  %2439 = vmatmul.bf16.gmra.mxu0 %v2336
  %v2440 = vpop.f32.mrf.mxu0
  %v2441 = vadd.f32 %v2275, %v2440
  %v2442 = vpop.f32.mrf.mxu0
  %v2443 = vadd.f32 %v2275, %v2442
  %2444 = vmatmul.bf16.gmra.mxu0 %v2338
  %v2445 = vpop.f32.mrf.mxu0
  %v2446 = vadd.f32 %v2275, %v2445
  %v2447 = vpop.f32.mrf.mxu0
  %v2448 = vadd.f32 %v2275, %v2447
  %2449 = vmatmul.bf16.gmra.mxu0 %v2340
  %v2450 = vpop.f32.mrf.mxu0
  %v2451 = vadd.f32 %v2275, %v2450
  %v2452 = vpop.f32.mrf.mxu0
  %v2453 = vadd.f32 %v2275, %v2452
  %2454 = vmatmul.bf16.gmra.mxu0 %v2342
  %v2455 = vpop.f32.mrf.mxu0
  %v2456 = vadd.f32 %v2275, %v2455
  %v2457 = vpop.f32.mrf.mxu0
  %v2458 = vadd.f32 %v2275, %v2457
  %2459 = vmatmul.bf16.gmra.mxu0 %v2344
  %v2460 = vpop.f32.mrf.mxu0
  %v2461 = vadd.f32 %v2275, %v2460
  %v2462 = vpop.f32.mrf.mxu0
  %v2463 = vadd.f32 %v2275, %v2462
  %2464 = vmatmul.bf16.gmra.mxu0 %v2346
  %v2465 = vpop.f32.mrf.mxu0
  %v2466 = vadd.f32 %v2275, %v2465
  %v2467 = vpop.f32.mrf.mxu0
  %v2468 = vadd.f32 %v2275, %v2467
  %2469 = vmatmul.bf16.gmra.mxu0 %v2348
  %v2470 = vpop.f32.mrf.mxu0
  %v2471 = vadd.f32 %v2275, %v2470
  %v2472 = vpop.f32.mrf.mxu0
  %v2473 = vadd.f32 %v2275, %v2472
  %2474 = vmatmul.bf16.gmra.mxu0 %v2350
  %v2475 = vpop.f32.mrf.mxu0
  %v2476 = vadd.f32 %v2275, %v2475
  %v2477 = vpop.f32.mrf.mxu0
  %v2478 = vadd.f32 %v2275, %v2477
  %2479 = vmatmul.bf16.gmra.mxu0 %v2352
  %v2480 = vpop.f32.mrf.mxu0
  %v2481 = vadd.f32 %v2275, %v2480
  %v2482 = vpop.f32.mrf.mxu0
  %v2483 = vadd.f32 %v2275, %v2482
  %2484 = vmatmul.bf16.gmra.mxu0 %v2354
  %v2485 = vpop.f32.mrf.mxu0
  %v2486 = vadd.f32 %v2275, %v2485
  %v2487 = vpop.f32.mrf.mxu0
  %v2488 = vadd.f32 %v2275, %v2487
  %2489 = vmatmul.bf16.gmra.mxu0 %v2356
  %v2490 = vpop.f32.mrf.mxu0
  %v2491 = vadd.f32 %v2275, %v2490
  %v2492 = vpop.f32.mrf.mxu0
  %v2493 = vadd.f32 %v2275, %v2492
  %2494 = vmatmul.bf16.gmra.mxu0 %v2358
  %v2495 = vpop.f32.mrf.mxu0
  %v2496 = vadd.f32 %v2275, %v2495
  %v2497 = vpop.f32.mrf.mxu0
  %v2498 = vadd.f32 %v2275, %v2497
  %2499 = vmatmul.bf16.gmra.mxu0 %v2360
  %v2500 = vpop.f32.mrf.mxu0
  %v2501 = vadd.f32 %v2275, %v2500
  %v2502 = vpop.f32.mrf.mxu0
  %v2503 = vadd.f32 %v2275, %v2502
  %2504 = vmatmul.bf16.gmra.mxu0 %v2362
  %v2505 = vpop.f32.mrf.mxu0
  %v2506 = vadd.f32 %v2275, %v2505
  %v2507 = vpop.f32.mrf.mxu0
  %v2508 = vadd.f32 %v2275, %v2507
  %2509 = vmatmul.bf16.gmra.mxu0 %v2364
  %v2510 = vpop.f32.mrf.mxu0
  %v2511 = vadd.f32 %v2275, %v2510
  %v2512 = vpop.f32.mrf.mxu0
  %v2513 = vadd.f32 %v2275, %v2512
  %2514 = vmatmul.bf16.gmra.mxu0 %v2366
  %v2515 = vpop.f32.mrf.mxu0
  %v2516 = vadd.f32 %v2275, %v2515
  %v2517 = vpop.f32.mrf.mxu0
  %v2518 = vadd.f32 %v2275, %v2517
  %2519 = vmatmul.bf16.gmra.mxu0 %v2368
  %v2520 = vpop.f32.mrf.mxu0
  %v2521 = vadd.f32 %v2275, %v2520
  %v2522 = vpop.f32.mrf.mxu0
  %v2523 = vadd.f32 %v2275, %v2522
  %2524 = vmatmul.bf16.gmra.mxu0 %v2370
  %v2525 = vpop.f32.mrf.mxu0
  %v2526 = vadd.f32 %v2275, %v2525
  %v2527 = vpop.f32.mrf.mxu0
  %v2528 = vadd.f32 %v2275, %v2527
  %2529 = vmatmul.bf16.gmra.mxu0 %v2372
  %v2530 = vpop.f32.mrf.mxu0
  %v2531 = vadd.f32 %v2275, %v2530
  %v2532 = vpop.f32.mrf.mxu0
  %v2533 = vadd.f32 %v2275, %v2532
  %2534 = vmatmul.bf16.gmra.mxu0 %v2374
  %v2535 = vpop.f32.mrf.mxu0
  %v2536 = vadd.f32 %v2275, %v2535
  %v2537 = vpop.f32.mrf.mxu0
  %v2538 = vadd.f32 %v2275, %v2537
  %2539 = vmatmul.bf16.gmra.mxu0 %v2376
  %v2540 = vpop.f32.mrf.mxu0
  %v2541 = vadd.f32 %v2275, %v2540
  %v2542 = vpop.f32.mrf.mxu0
  %v2543 = vadd.f32 %v2275, %v2542
  %2544 = vmatmul.bf16.gmra.mxu0 %v2378
  %v2545 = vpop.f32.mrf.mxu0
  %v2546 = vadd.f32 %v2275, %v2545
  %v2547 = vpop.f32.mrf.mxu0
  %v2548 = vadd.f32 %v2275, %v2547
  %2549 = vmatmul.bf16.gmra.mxu0 %v2380
  %v2550 = vpop.f32.mrf.mxu0
  %v2551 = vadd.f32 %v2275, %v2550
  %v2552 = vpop.f32.mrf.mxu0
  %v2553 = vadd.f32 %v2275, %v2552
  %2554 = vmatmul.bf16.gmra.mxu0 %v2382
  %v2555 = vpop.f32.mrf.mxu0
  %v2556 = vadd.f32 %v2275, %v2555
  %v2557 = vpop.f32.mrf.mxu0
  %v2558 = vadd.f32 %v2275, %v2557
  %2559 = vmatmul.bf16.gmra.mxu0 %v2384
  %v2560 = vpop.f32.mrf.mxu0
  %v2561 = vadd.f32 %v2275, %v2560
  %v2562 = vpop.f32.mrf.mxu0
  %v2563 = vadd.f32 %v2275, %v2562
  %2564 = vdwg.mxu0
  %2565 = vmatpush.bf16.msra.mxu0 0
  %2566 = vmatpush.bf16.msra.mxu0 0
  %2567 = vmatpush.bf16.msra.mxu0 0
  %2568 = vmatpush.bf16.msra.mxu0 0
  %2569 = vmatpush.bf16.msra.mxu0 0
  %2570 = vmatpush.bf16.msra.mxu0 %v2391
  %2571 = vmatpush.bf16.msra.mxu0 %v2310
  %2572 = vmatpush.bf16.msra.mxu0 %v2307
  %2573 = vmatmul.bf16.gmra.mxu0 %v2322
  %v2574 = vpop.f32.mrf.mxu0
  %v2575 = vadd.f32 %v2276, %v2574
  %v2576 = vpop.f32.mrf.mxu0
  %v2577 = vadd.f32 %v2276, %v2576
  %2578 = vmatmul.bf16.gmra.mxu0 %v2324
  %v2579 = vpop.f32.mrf.mxu0
  %v2580 = vadd.f32 %v2276, %v2579
  %v2581 = vpop.f32.mrf.mxu0
  %v2582 = vadd.f32 %v2276, %v2581
  %2583 = vmatmul.bf16.gmra.mxu0 %v2326
  %v2584 = vpop.f32.mrf.mxu0
  %v2585 = vadd.f32 %v2276, %v2584
  %v2586 = vpop.f32.mrf.mxu0
  %v2587 = vadd.f32 %v2276, %v2586
  %2588 = vmatmul.bf16.gmra.mxu0 %v2328
  %v2589 = vpop.f32.mrf.mxu0
  %v2590 = vadd.f32 %v2276, %v2589
  %v2591 = vpop.f32.mrf.mxu0
  %v2592 = vadd.f32 %v2276, %v2591
  %2593 = vmatmul.bf16.gmra.mxu0 %v2330
  %v2594 = vpop.f32.mrf.mxu0
  %v2595 = vadd.f32 %v2276, %v2594
  %v2596 = vpop.f32.mrf.mxu0
  %v2597 = vadd.f32 %v2276, %v2596
  %2598 = vmatmul.bf16.gmra.mxu0 %v2332
  %v2599 = vpop.f32.mrf.mxu0
  %v2600 = vadd.f32 %v2276, %v2599
  %v2601 = vpop.f32.mrf.mxu0
  %v2602 = vadd.f32 %v2276, %v2601
  %2603 = vmatmul.bf16.gmra.mxu0 %v2334
  %v2604 = vpop.f32.mrf.mxu0
  %v2605 = vadd.f32 %v2276, %v2604
  %v2606 = vpop.f32.mrf.mxu0
  %v2607 = vadd.f32 %v2276, %v2606
  %2608 = vmatmul.bf16.gmra.mxu0 %v2336
  %v2609 = vpop.f32.mrf.mxu0
  %v2610 = vadd.f32 %v2276, %v2609
  %v2611 = vpop.f32.mrf.mxu0
  %v2612 = vadd.f32 %v2276, %v2611
  %2613 = vmatmul.bf16.gmra.mxu0 %v2338
  %v2614 = vpop.f32.mrf.mxu0
  %v2615 = vadd.f32 %v2276, %v2614
  %v2616 = vpop.f32.mrf.mxu0
  %v2617 = vadd.f32 %v2276, %v2616
  %2618 = vmatmul.bf16.gmra.mxu0 %v2340
  %v2619 = vpop.f32.mrf.mxu0
  %v2620 = vadd.f32 %v2276, %v2619
  %v2621 = vpop.f32.mrf.mxu0
  %v2622 = vadd.f32 %v2276, %v2621
  %2623 = vmatmul.bf16.gmra.mxu0 %v2342
  %v2624 = vpop.f32.mrf.mxu0
  %v2625 = vadd.f32 %v2276, %v2624
  %v2626 = vpop.f32.mrf.mxu0
  %v2627 = vadd.f32 %v2276, %v2626
  %2628 = vmatmul.bf16.gmra.mxu0 %v2344
  %v2629 = vpop.f32.mrf.mxu0
  %v2630 = vadd.f32 %v2276, %v2629
  %v2631 = vpop.f32.mrf.mxu0
  %v2632 = vadd.f32 %v2276, %v2631
  %2633 = vmatmul.bf16.gmra.mxu0 %v2346
  %v2634 = vpop.f32.mrf.mxu0
  %v2635 = vadd.f32 %v2276, %v2634
  %v2636 = vpop.f32.mrf.mxu0
  %v2637 = vadd.f32 %v2276, %v2636
  %2638 = vmatmul.bf16.gmra.mxu0 %v2348
  %v2639 = vpop.f32.mrf.mxu0
  %v2640 = vadd.f32 %v2276, %v2639
  %v2641 = vpop.f32.mrf.mxu0
  %v2642 = vadd.f32 %v2276, %v2641
  %2643 = vmatmul.bf16.gmra.mxu0 %v2350
  %v2644 = vpop.f32.mrf.mxu0
  %v2645 = vadd.f32 %v2276, %v2644
  %v2646 = vpop.f32.mrf.mxu0
  %v2647 = vadd.f32 %v2276, %v2646
  %2648 = vmatmul.bf16.gmra.mxu0 %v2352
  %v2649 = vpop.f32.mrf.mxu0
  %v2650 = vadd.f32 %v2276, %v2649
  %v2651 = vpop.f32.mrf.mxu0
  %v2652 = vadd.f32 %v2276, %v2651
  %2653 = vmatmul.bf16.gmra.mxu0 %v2354
  %v2654 = vpop.f32.mrf.mxu0
  %v2655 = vadd.f32 %v2276, %v2654
  %v2656 = vpop.f32.mrf.mxu0
  %v2657 = vadd.f32 %v2276, %v2656
  %2658 = vmatmul.bf16.gmra.mxu0 %v2356
  %v2659 = vpop.f32.mrf.mxu0
  %v2660 = vadd.f32 %v2276, %v2659
  %v2661 = vpop.f32.mrf.mxu0
  %v2662 = vadd.f32 %v2276, %v2661
  %2663 = vmatmul.bf16.gmra.mxu0 %v2358
  %v2664 = vpop.f32.mrf.mxu0
  %v2665 = vadd.f32 %v2276, %v2664
  %v2666 = vpop.f32.mrf.mxu0
  %v2667 = vadd.f32 %v2276, %v2666
  %2668 = vmatmul.bf16.gmra.mxu0 %v2360
  %v2669 = vpop.f32.mrf.mxu0
  %v2670 = vadd.f32 %v2276, %v2669
  %v2671 = vpop.f32.mrf.mxu0
  %v2672 = vadd.f32 %v2276, %v2671
  %2673 = vmatmul.bf16.gmra.mxu0 %v2362
  %v2674 = vpop.f32.mrf.mxu0
  %v2675 = vadd.f32 %v2276, %v2674
  %v2676 = vpop.f32.mrf.mxu0
  %v2677 = vadd.f32 %v2276, %v2676
  %2678 = vmatmul.bf16.gmra.mxu0 %v2364
  %v2679 = vpop.f32.mrf.mxu0
  %v2680 = vadd.f32 %v2276, %v2679
  %v2681 = vpop.f32.mrf.mxu0
  %v2682 = vadd.f32 %v2276, %v2681
  %2683 = vmatmul.bf16.gmra.mxu0 %v2366
  %v2684 = vpop.f32.mrf.mxu0
  %v2685 = vadd.f32 %v2276, %v2684
  %v2686 = vpop.f32.mrf.mxu0
  %v2687 = vadd.f32 %v2276, %v2686
  %2688 = vmatmul.bf16.gmra.mxu0 %v2368
  %v2689 = vpop.f32.mrf.mxu0
  %v2690 = vadd.f32 %v2276, %v2689
  %v2691 = vpop.f32.mrf.mxu0
  %v2692 = vadd.f32 %v2276, %v2691
  %2693 = vmatmul.bf16.gmra.mxu0 %v2370
  %v2694 = vpop.f32.mrf.mxu0
  %v2695 = vadd.f32 %v2276, %v2694
  %v2696 = vpop.f32.mrf.mxu0
  %v2697 = vadd.f32 %v2276, %v2696
  %2698 = vmatmul.bf16.gmra.mxu0 %v2372
  %v2699 = vpop.f32.mrf.mxu0
  %v2700 = vadd.f32 %v2276, %v2699
  %v2701 = vpop.f32.mrf.mxu0
  %v2702 = vadd.f32 %v2276, %v2701
  %2703 = vmatmul.bf16.gmra.mxu0 %v2374
  %v2704 = vpop.f32.mrf.mxu0
  %v2705 = vadd.f32 %v2276, %v2704
  %v2706 = vpop.f32.mrf.mxu0
  %v2707 = vadd.f32 %v2276, %v2706
  %2708 = vmatmul.bf16.gmra.mxu0 %v2376
  %v2709 = vpop.f32.mrf.mxu0
  %v2710 = vadd.f32 %v2276, %v2709
  %v2711 = vpop.f32.mrf.mxu0
  %v2712 = vadd.f32 %v2276, %v2711
  %2713 = vmatmul.bf16.gmra.mxu0 %v2378
  %v2714 = vpop.f32.mrf.mxu0
  %v2715 = vadd.f32 %v2276, %v2714
  %v2716 = vpop.f32.mrf.mxu0
  %v2717 = vadd.f32 %v2276, %v2716
  %2718 = vmatmul.bf16.gmra.mxu0 %v2380
  %v2719 = vpop.f32.mrf.mxu0
  %v2720 = vadd.f32 %v2276, %v2719
  %v2721 = vpop.f32.mrf.mxu0
  %v2722 = vadd.f32 %v2276, %v2721
  %2723 = vmatmul.bf16.gmra.mxu0 %v2382
  %v2724 = vpop.f32.mrf.mxu0
  %v2725 = vadd.f32 %v2276, %v2724
  %v2726 = vpop.f32.mrf.mxu0
  %v2727 = vadd.f32 %v2276, %v2726
  %2728 = vmatmul.bf16.gmra.mxu0 %v2384
  %v2729 = vpop.f32.mrf.mxu0
  %v2730 = vadd.f32 %v2276, %v2729
  %v2731 = vpop.f32.mrf.mxu0
  %v2732 = vadd.f32 %v2276, %v2731
  %2733 = vdwg.mxu0
  %2734 = vmatpush.bf16.msra.mxu0 0
  %2735 = vmatpush.bf16.msra.mxu0 0
  %2736 = vmatpush.bf16.msra.mxu0 0
  %2737 = vmatpush.bf16.msra.mxu0 0
  %2738 = vmatpush.bf16.msra.mxu0 0
  %2739 = vmatpush.bf16.msra.mxu0 %v2394
  %2740 = vmatpush.bf16.msra.mxu0 %v2311
  %2741 = vmatpush.bf16.msra.mxu0 %v2308
  %2742 = vmatmul.bf16.gmra.mxu0 %v2322
  %v2743 = vpop.f32.mrf.mxu0
  %v2744 = vadd.f32 %v2277, %v2743
  %v2745 = vpop.f32.mrf.mxu0
  %v2746 = vadd.f32 %v2277, %v2745
  %2747 = vmatmul.bf16.gmra.mxu0 %v2324
  %v2748 = vpop.f32.mrf.mxu0
  %v2749 = vadd.f32 %v2277, %v2748
  %v2750 = vpop.f32.mrf.mxu0
  %v2751 = vadd.f32 %v2277, %v2750
  %2752 = vmatmul.bf16.gmra.mxu0 %v2326
  %v2753 = vpop.f32.mrf.mxu0
  %v2754 = vadd.f32 %v2277, %v2753
  %v2755 = vpop.f32.mrf.mxu0
  %v2756 = vadd.f32 %v2277, %v2755
  %2757 = vmatmul.bf16.gmra.mxu0 %v2328
  %v2758 = vpop.f32.mrf.mxu0
  %v2759 = vadd.f32 %v2277, %v2758
  %v2760 = vpop.f32.mrf.mxu0
  %v2761 = vadd.f32 %v2277, %v2760
  %2762 = vmatmul.bf16.gmra.mxu0 %v2330
  %v2763 = vpop.f32.mrf.mxu0
  %v2764 = vadd.f32 %v2277, %v2763
  %v2765 = vpop.f32.mrf.mxu0
  %v2766 = vadd.f32 %v2277, %v2765
  %2767 = vmatmul.bf16.gmra.mxu0 %v2332
  %v2768 = vpop.f32.mrf.mxu0
  %v2769 = vadd.f32 %v2277, %v2768
  %v2770 = vpop.f32.mrf.mxu0
  %v2771 = vadd.f32 %v2277, %v2770
  %2772 = vmatmul.bf16.gmra.mxu0 %v2334
  %v2773 = vpop.f32.mrf.mxu0
  %v2774 = vadd.f32 %v2277, %v2773
  %v2775 = vpop.f32.mrf.mxu0
  %v2776 = vadd.f32 %v2277, %v2775
  %2777 = vmatmul.bf16.gmra.mxu0 %v2336
  %v2778 = vpop.f32.mrf.mxu0
  %v2779 = vadd.f32 %v2277, %v2778
  %v2780 = vpop.f32.mrf.mxu0
  %v2781 = vadd.f32 %v2277, %v2780
  %2782 = vmatmul.bf16.gmra.mxu0 %v2338
  %v2783 = vpop.f32.mrf.mxu0
  %v2784 = vadd.f32 %v2277, %v2783
  %v2785 = vpop.f32.mrf.mxu0
  %v2786 = vadd.f32 %v2277, %v2785
  %2787 = vmatmul.bf16.gmra.mxu0 %v2340
  %v2788 = vpop.f32.mrf.mxu0
  %v2789 = vadd.f32 %v2277, %v2788
  %v2790 = vpop.f32.mrf.mxu0
  %v2791 = vadd.f32 %v2277, %v2790
  %2792 = vmatmul.bf16.gmra.mxu0 %v2342
  %v2793 = vpop.f32.mrf.mxu0
  %v2794 = vadd.f32 %v2277, %v2793
  %v2795 = vpop.f32.mrf.mxu0
  %v2796 = vadd.f32 %v2277, %v2795
  %2797 = vmatmul.bf16.gmra.mxu0 %v2344
  %v2798 = vpop.f32.mrf.mxu0
  %v2799 = vadd.f32 %v2277, %v2798
  %v2800 = vpop.f32.mrf.mxu0
  %v2801 = vadd.f32 %v2277, %v2800
  %2802 = vmatmul.bf16.gmra.mxu0 %v2346
  %v2803 = vpop.f32.mrf.mxu0
  %v2804 = vadd.f32 %v2277, %v2803
  %v2805 = vpop.f32.mrf.mxu0
  %v2806 = vadd.f32 %v2277, %v2805
  %2807 = vmatmul.bf16.gmra.mxu0 %v2348
  %v2808 = vpop.f32.mrf.mxu0
  %v2809 = vadd.f32 %v2277, %v2808
  %v2810 = vpop.f32.mrf.mxu0
  %v2811 = vadd.f32 %v2277, %v2810
  %2812 = vmatmul.bf16.gmra.mxu0 %v2350
  %v2813 = vpop.f32.mrf.mxu0
  %v2814 = vadd.f32 %v2277, %v2813
  %v2815 = vpop.f32.mrf.mxu0
  %v2816 = vadd.f32 %v2277, %v2815
  %2817 = vmatmul.bf16.gmra.mxu0 %v2352
  %v2818 = vpop.f32.mrf.mxu0
  %v2819 = vadd.f32 %v2277, %v2818
  %v2820 = vpop.f32.mrf.mxu0
  %v2821 = vadd.f32 %v2277, %v2820
  %2822 = vmatmul.bf16.gmra.mxu0 %v2354
  %v2823 = vpop.f32.mrf.mxu0
  %v2824 = vadd.f32 %v2277, %v2823
  %v2825 = vpop.f32.mrf.mxu0
  %v2826 = vadd.f32 %v2277, %v2825
  %2827 = vmatmul.bf16.gmra.mxu0 %v2356
  %v2828 = vpop.f32.mrf.mxu0
  %v2829 = vadd.f32 %v2277, %v2828
  %v2830 = vpop.f32.mrf.mxu0
  %v2831 = vadd.f32 %v2277, %v2830
  %2832 = vmatmul.bf16.gmra.mxu0 %v2358
  %v2833 = vpop.f32.mrf.mxu0
  %v2834 = vadd.f32 %v2277, %v2833
  %v2835 = vpop.f32.mrf.mxu0
  %v2836 = vadd.f32 %v2277, %v2835
  %2837 = vmatmul.bf16.gmra.mxu0 %v2360
  %v2838 = vpop.f32.mrf.mxu0
  %v2839 = vadd.f32 %v2277, %v2838
  %v2840 = vpop.f32.mrf.mxu0
  %v2841 = vadd.f32 %v2277, %v2840
  %2842 = vmatmul.bf16.gmra.mxu0 %v2362
  %v2843 = vpop.f32.mrf.mxu0
  %v2844 = vadd.f32 %v2277, %v2843
  %v2845 = vpop.f32.mrf.mxu0
  %v2846 = vadd.f32 %v2277, %v2845
  %2847 = vmatmul.bf16.gmra.mxu0 %v2364
  %v2848 = vpop.f32.mrf.mxu0
  %v2849 = vadd.f32 %v2277, %v2848
  %v2850 = vpop.f32.mrf.mxu0
  %v2851 = vadd.f32 %v2277, %v2850
  %2852 = vmatmul.bf16.gmra.mxu0 %v2366
  %v2853 = vpop.f32.mrf.mxu0
  %v2854 = vadd.f32 %v2277, %v2853
  %v2855 = vpop.f32.mrf.mxu0
  %v2856 = vadd.f32 %v2277, %v2855
  %2857 = vmatmul.bf16.gmra.mxu0 %v2368
  %v2858 = vpop.f32.mrf.mxu0
  %v2859 = vadd.f32 %v2277, %v2858
  %v2860 = vpop.f32.mrf.mxu0
  %v2861 = vadd.f32 %v2277, %v2860
  %2862 = vmatmul.bf16.gmra.mxu0 %v2370
  %v2863 = vpop.f32.mrf.mxu0
  %v2864 = vadd.f32 %v2277, %v2863
  %v2865 = vpop.f32.mrf.mxu0
  %v2866 = vadd.f32 %v2277, %v2865
  %2867 = vmatmul.bf16.gmra.mxu0 %v2372
  %v2868 = vpop.f32.mrf.mxu0
  %v2869 = vadd.f32 %v2277, %v2868
  %v2870 = vpop.f32.mrf.mxu0
  %v2871 = vadd.f32 %v2277, %v2870
  %2872 = vmatmul.bf16.gmra.mxu0 %v2374
  %v2873 = vpop.f32.mrf.mxu0
  %v2874 = vadd.f32 %v2277, %v2873
  %v2875 = vpop.f32.mrf.mxu0
  %v2876 = vadd.f32 %v2277, %v2875
  %2877 = vmatmul.bf16.gmra.mxu0 %v2376
  %v2878 = vpop.f32.mrf.mxu0
  %v2879 = vadd.f32 %v2277, %v2878
  %v2880 = vpop.f32.mrf.mxu0
  %v2881 = vadd.f32 %v2277, %v2880
  %2882 = vmatmul.bf16.gmra.mxu0 %v2378
  %v2883 = vpop.f32.mrf.mxu0
  %v2884 = vadd.f32 %v2277, %v2883
  %v2885 = vpop.f32.mrf.mxu0
  %v2886 = vadd.f32 %v2277, %v2885
  %2887 = vmatmul.bf16.gmra.mxu0 %v2380
  %v2888 = vpop.f32.mrf.mxu0
  %v2889 = vadd.f32 %v2277, %v2888
  %v2890 = vpop.f32.mrf.mxu0
  %v2891 = vadd.f32 %v2277, %v2890
  %2892 = vmatmul.bf16.gmra.mxu0 %v2382
  %v2893 = vpop.f32.mrf.mxu0
  %v2894 = vadd.f32 %v2277, %v2893
  %v2895 = vpop.f32.mrf.mxu0
  %v2896 = vadd.f32 %v2277, %v2895
  %2897 = vmatmul.bf16.gmra.mxu0 %v2384
  %v2898 = vpop.f32.mrf.mxu0
  %v2899 = vadd.f32 %v2277, %v2898
  %v2900 = vpop.f32.mrf.mxu0
  %v2901 = vadd.f32 %v2277, %v2900
  %2902 = vdwg.mxu0
  %v2903 = vmax.f32 %v2406, 0.0
  %v2904 = vmax.f32 %v2575, 0.0
  %v2905 = vmax.f32 %v2744, 0.0
  %v2906 = vmax.f32 %v2408, 0.0
  %v2907 = vmax.f32 %v2577, 0.0
  %v2908 = vmax.f32 %v2746, 0.0
  %v2909 = vmax.f32 %v2411, 0.0
  %v2910 = vmax.f32 %v2580, 0.0
  %v2911 = vmax.f32 %v2749, 0.0
  %v2912 = vmax.f32 %v2413, 0.0
  %v2913 = vmax.f32 %v2582, 0.0
  %v2914 = vmax.f32 %v2751, 0.0
  %v2915 = vmax.f32 %v2416, 0.0
  %v2916 = vmax.f32 %v2585, 0.0
  %v2917 = vmax.f32 %v2754, 0.0
  %v2918 = vmax.f32 %v2418, 0.0
  %v2919 = vmax.f32 %v2587, 0.0
  %v2920 = vmax.f32 %v2756, 0.0
  %v2921 = vmax.f32 %v2421, 0.0
  %v2922 = vmax.f32 %v2590, 0.0
  %v2923 = vmax.f32 %v2759, 0.0
  %v2924 = vmax.f32 %v2423, 0.0
  %v2925 = vmax.f32 %v2592, 0.0
  %v2926 = vmax.f32 %v2761, 0.0
  %v2927 = vmax.f32 %v2426, 0.0
  %v2928 = vmax.f32 %v2595, 0.0
  %v2929 = vmax.f32 %v2764, 0.0
  %v2930 = vmax.f32 %v2428, 0.0
  %v2931 = vmax.f32 %v2597, 0.0
  %v2932 = vmax.f32 %v2766, 0.0
  %v2933 = vmax.f32 %v2431, 0.0
  %v2934 = vmax.f32 %v2600, 0.0
  %v2935 = vmax.f32 %v2769, 0.0
  %v2936 = vmax.f32 %v2433, 0.0
  %v2937 = vmax.f32 %v2602, 0.0
  %v2938 = vmax.f32 %v2771, 0.0
  %v2939 = vmax.f32 %v2436, 0.0
  %v2940 = vmax.f32 %v2605, 0.0
  %v2941 = vmax.f32 %v2774, 0.0
  %v2942 = vmax.f32 %v2438, 0.0
  %v2943 = vmax.f32 %v2607, 0.0
  %v2944 = vmax.f32 %v2776, 0.0
  %v2945 = vmax.f32 %v2441, 0.0
  %v2946 = vmax.f32 %v2610, 0.0
  %v2947 = vmax.f32 %v2779, 0.0
  %v2948 = vmax.f32 %v2443, 0.0
  %v2949 = vmax.f32 %v2612, 0.0
  %v2950 = vmax.f32 %v2781, 0.0
  %v2951 = vmax.f32 %v2446, 0.0
  %v2952 = vmax.f32 %v2615, 0.0
  %v2953 = vmax.f32 %v2784, 0.0
  %v2954 = vmax.f32 %v2448, 0.0
  %v2955 = vmax.f32 %v2617, 0.0
  %v2956 = vmax.f32 %v2786, 0.0
  %v2957 = vmax.f32 %v2451, 0.0
  %v2958 = vmax.f32 %v2620, 0.0
  %v2959 = vmax.f32 %v2789, 0.0
  %v2960 = vmax.f32 %v2453, 0.0
  %v2961 = vmax.f32 %v2622, 0.0
  %v2962 = vmax.f32 %v2791, 0.0
  %v2963 = vmax.f32 %v2456, 0.0
  %v2964 = vmax.f32 %v2625, 0.0
  %v2965 = vmax.f32 %v2794, 0.0
  %v2966 = vmax.f32 %v2458, 0.0
  %v2967 = vmax.f32 %v2627, 0.0
  %v2968 = vmax.f32 %v2796, 0.0
  %v2969 = vmax.f32 %v2461, 0.0
  %v2970 = vmax.f32 %v2630, 0.0
  %v2971 = vmax.f32 %v2799, 0.0
  %v2972 = vmax.f32 %v2463, 0.0
  %v2973 = vmax.f32 %v2632, 0.0
  %v2974 = vmax.f32 %v2801, 0.0
  %v2975 = vmax.f32 %v2466, 0.0
  %v2976 = vmax.f32 %v2635, 0.0
  %v2977 = vmax.f32 %v2804, 0.0
  %v2978 = vmax.f32 %v2468, 0.0
  %v2979 = vmax.f32 %v2637, 0.0
  %v2980 = vmax.f32 %v2806, 0.0
  %v2981 = vmax.f32 %v2471, 0.0
  %v2982 = vmax.f32 %v2640, 0.0
  %v2983 = vmax.f32 %v2809, 0.0
  %v2984 = vmax.f32 %v2473, 0.0
  %v2985 = vmax.f32 %v2642, 0.0
  %v2986 = vmax.f32 %v2811, 0.0
  %v2987 = vmax.f32 %v2476, 0.0
  %v2988 = vmax.f32 %v2645, 0.0
  %v2989 = vmax.f32 %v2814, 0.0
  %v2990 = vmax.f32 %v2478, 0.0
  %v2991 = vmax.f32 %v2647, 0.0
  %v2992 = vmax.f32 %v2816, 0.0
  %v2993 = vmax.f32 %v2481, 0.0
  %v2994 = vmax.f32 %v2650, 0.0
  %v2995 = vmax.f32 %v2819, 0.0
  %v2996 = vmax.f32 %v2483, 0.0
  %v2997 = vmax.f32 %v2652, 0.0
  %v2998 = vmax.f32 %v2821, 0.0
  %v2999 = vmax.f32 %v2486, 0.0
  %v3000 = vmax.f32 %v2655, 0.0
  %v3001 = vmax.f32 %v2824, 0.0
  %v3002 = vmax.f32 %v2488, 0.0
  %v3003 = vmax.f32 %v2657, 0.0
  %v3004 = vmax.f32 %v2826, 0.0
  %v3005 = vmax.f32 %v2491, 0.0
  %v3006 = vmax.f32 %v2660, 0.0
  %v3007 = vmax.f32 %v2829, 0.0
  %v3008 = vmax.f32 %v2493, 0.0
  %v3009 = vmax.f32 %v2662, 0.0
  %v3010 = vmax.f32 %v2831, 0.0
  %v3011 = vmax.f32 %v2496, 0.0
  %v3012 = vmax.f32 %v2665, 0.0
  %v3013 = vmax.f32 %v2834, 0.0
  %v3014 = vmax.f32 %v2498, 0.0
  %v3015 = vmax.f32 %v2667, 0.0
  %v3016 = vmax.f32 %v2836, 0.0
  %v3017 = vmax.f32 %v2501, 0.0
  %v3018 = vmax.f32 %v2670, 0.0
  %v3019 = vmax.f32 %v2839, 0.0
  %v3020 = vmax.f32 %v2503, 0.0
  %v3021 = vmax.f32 %v2672, 0.0
  %v3022 = vmax.f32 %v2841, 0.0
  %v3023 = vmax.f32 %v2506, 0.0
  %v3024 = vmax.f32 %v2675, 0.0
  %v3025 = vmax.f32 %v2844, 0.0
  %v3026 = vmax.f32 %v2508, 0.0
  %v3027 = vmax.f32 %v2677, 0.0
  %v3028 = vmax.f32 %v2846, 0.0
  %v3029 = vmax.f32 %v2511, 0.0
  %v3030 = vmax.f32 %v2680, 0.0
  %v3031 = vmax.f32 %v2849, 0.0
  %v3032 = vmax.f32 %v2513, 0.0
  %v3033 = vmax.f32 %v2682, 0.0
  %v3034 = vmax.f32 %v2851, 0.0
  %v3035 = vmax.f32 %v2516, 0.0
  %v3036 = vmax.f32 %v2685, 0.0
  %v3037 = vmax.f32 %v2854, 0.0
  %v3038 = vmax.f32 %v2518, 0.0
  %v3039 = vmax.f32 %v2687, 0.0
  %v3040 = vmax.f32 %v2856, 0.0
  %v3041 = vmax.f32 %v2521, 0.0
  %v3042 = vmax.f32 %v2690, 0.0
  %v3043 = vmax.f32 %v2859, 0.0
  %v3044 = vmax.f32 %v2523, 0.0
  %v3045 = vmax.f32 %v2692, 0.0
  %v3046 = vmax.f32 %v2861, 0.0
  %v3047 = vmax.f32 %v2526, 0.0
  %v3048 = vmax.f32 %v2695, 0.0
  %v3049 = vmax.f32 %v2864, 0.0
  %v3050 = vmax.f32 %v2528, 0.0
  %v3051 = vmax.f32 %v2697, 0.0
  %v3052 = vmax.f32 %v2866, 0.0
  %v3053 = vmax.f32 %v2531, 0.0
  %v3054 = vmax.f32 %v2700, 0.0
  %v3055 = vmax.f32 %v2869, 0.0
  %v3056 = vmax.f32 %v2533, 0.0
  %v3057 = vmax.f32 %v2702, 0.0
  %v3058 = vmax.f32 %v2871, 0.0
  %v3059 = vmax.f32 %v2536, 0.0
  %v3060 = vmax.f32 %v2705, 0.0
  %v3061 = vmax.f32 %v2874, 0.0
  %v3062 = vmax.f32 %v2538, 0.0
  %v3063 = vmax.f32 %v2707, 0.0
  %v3064 = vmax.f32 %v2876, 0.0
  %v3065 = vmax.f32 %v2541, 0.0
  %v3066 = vmax.f32 %v2710, 0.0
  %v3067 = vmax.f32 %v2879, 0.0
  %v3068 = vmax.f32 %v2543, 0.0
  %v3069 = vmax.f32 %v2712, 0.0
  %v3070 = vmax.f32 %v2881, 0.0
  %v3071 = vmax.f32 %v2546, 0.0
  %v3072 = vmax.f32 %v2715, 0.0
  %v3073 = vmax.f32 %v2884, 0.0
  %v3074 = vmax.f32 %v2548, 0.0
  %v3075 = vmax.f32 %v2717, 0.0
  %v3076 = vmax.f32 %v2886, 0.0
  %v3077 = vmax.f32 %v2551, 0.0
  %v3078 = vmax.f32 %v2720, 0.0
  %v3079 = vmax.f32 %v2889, 0.0
  %v3080 = vmax.f32 %v2553, 0.0
  %v3081 = vmax.f32 %v2722, 0.0
  %v3082 = vmax.f32 %v2891, 0.0
  %v3083 = vmax.f32 %v2556, 0.0
  %v3084 = vmax.f32 %v2725, 0.0
  %v3085 = vmax.f32 %v2894, 0.0
  %v3086 = vmax.f32 %v2558, 0.0
  %v3087 = vmax.f32 %v2727, 0.0
  %v3088 = vmax.f32 %v2896, 0.0
  %v3089 = vmax.f32 %v2561, 0.0
  %v3090 = vmax.f32 %v2730, 0.0
  %v3091 = vmax.f32 %v2899, 0.0
  %v3092 = vmax.f32 %v2563, 0.0
  %v3093 = vmax.f32 %v2732, 0.0
  %v3094 = vmax.f32 %v2901, 0.0
  %v3095 = vld [vmem:[%s4] sm:$0xff]
  %v3096 = vld [vmem:[%s4 + $0x8] sm:$0xff]
  %v3097 = vld [vmem:[%s4 + $0x10] sm:$0xff]
  %v3098 = vld [vmem:[%s4 + $0x18] sm:$0xff]
  %v3099 = vld [vmem:[%s4 + $0x20] sm:$0xff]
  %v3100 = vld [vmem:[%s4 + $0x28] sm:$0xff]
  %v3101 = vld [vmem:[%s4 + $0x30] sm:$0xff]
  %v3102 = vld [vmem:[%s4 + $0x38] sm:$0xff]
  %v3103 = vld [vmem:[%s4 + $0x40] sm:$0xff]
  %v3104 = vld [vmem:[%s4 + $0x48] sm:$0xff]
  %v3105 = vld [vmem:[%s4 + $0x50] sm:$0xff]
  %v3106 = vld [vmem:[%s4 + $0x58] sm:$0xff]
  %v3107 = vmul.f32 %v2903, %v3095
  %v3108 = vmul.f32 %v2904, %v3096
  %v3109 = vmul.f32 %v2905, %v3097
  %v3110 = vmul.f32 %v2906, %v3098
  %v3111 = vmul.f32 %v2907, %v3099
  %v3112 = vmul.f32 %v2908, %v3100
  %v3113 = vmul.f32 %v2909, %v3101
  %v3114 = vmul.f32 %v2910, %v3102
  %v3115 = vmul.f32 %v2911, %v3103
  %v3116 = vmul.f32 %v2912, %v3104
  %v3117 = vmul.f32 %v2913, %v3105
  %v3118 = vmul.f32 %v2914, %v3106
  %v3119 = vmul.f32 %v2915, %v3095
  %v3120 = vmul.f32 %v2916, %v3096
  %v3121 = vmul.f32 %v2917, %v3097
  %v3122 = vmul.f32 %v2918, %v3098
  %v3123 = vmul.f32 %v2919, %v3099
  %v3124 = vmul.f32 %v2920, %v3100
  %v3125 = vmul.f32 %v2921, %v3101
  %v3126 = vmul.f32 %v2922, %v3102
  %v3127 = vmul.f32 %v2923, %v3103
  %v3128 = vmul.f32 %v2924, %v3104
  %v3129 = vmul.f32 %v2925, %v3105
  %v3130 = vmul.f32 %v2926, %v3106
  %v3131 = vmul.f32 %v2927, %v3095
  %v3132 = vmul.f32 %v2928, %v3096
  %v3133 = vmul.f32 %v2929, %v3097
  %v3134 = vmul.f32 %v2930, %v3098
  %v3135 = vmul.f32 %v2931, %v3099
  %v3136 = vmul.f32 %v2932, %v3100
  %v3137 = vmul.f32 %v2933, %v3101
  %v3138 = vmul.f32 %v2934, %v3102
  %v3139 = vmul.f32 %v2935, %v3103
  %v3140 = vmul.f32 %v2936, %v3104
  %v3141 = vmul.f32 %v2937, %v3105
  %v3142 = vmul.f32 %v2938, %v3106
  %v3143 = vmul.f32 %v2939, %v3095
  %v3144 = vmul.f32 %v2940, %v3096
  %v3145 = vmul.f32 %v2941, %v3097
  %v3146 = vmul.f32 %v2942, %v3098
  %v3147 = vmul.f32 %v2943, %v3099
  %v3148 = vmul.f32 %v2944, %v3100
  %v3149 = vmul.f32 %v2945, %v3101
  %v3150 = vmul.f32 %v2946, %v3102
  %v3151 = vmul.f32 %v2947, %v3103
  %v3152 = vmul.f32 %v2948, %v3104
  %v3153 = vmul.f32 %v2949, %v3105
  %v3154 = vmul.f32 %v2950, %v3106
  %v3155 = vmul.f32 %v2951, %v3095
  %v3156 = vmul.f32 %v2952, %v3096
  %v3157 = vmul.f32 %v2953, %v3097
  %v3158 = vmul.f32 %v2954, %v3098
  %v3159 = vmul.f32 %v2955, %v3099
  %v3160 = vmul.f32 %v2956, %v3100
  %v3161 = vmul.f32 %v2957, %v3101
  %v3162 = vmul.f32 %v2958, %v3102
  %v3163 = vmul.f32 %v2959, %v3103
  %v3164 = vmul.f32 %v2960, %v3104
  %v3165 = vmul.f32 %v2961, %v3105
  %v3166 = vmul.f32 %v2962, %v3106
  %v3167 = vmul.f32 %v2963, %v3095
  %v3168 = vmul.f32 %v2964, %v3096
  %v3169 = vmul.f32 %v2965, %v3097
  %v3170 = vmul.f32 %v2966, %v3098
  %v3171 = vmul.f32 %v2967, %v3099
  %v3172 = vmul.f32 %v2968, %v3100
  %v3173 = vmul.f32 %v2969, %v3101
  %v3174 = vmul.f32 %v2970, %v3102
  %v3175 = vmul.f32 %v2971, %v3103
  %v3176 = vmul.f32 %v2972, %v3104
  %v3177 = vmul.f32 %v2973, %v3105
  %v3178 = vmul.f32 %v2974, %v3106
  %v3179 = vmul.f32 %v2975, %v3095
  %v3180 = vmul.f32 %v2976, %v3096
  %v3181 = vmul.f32 %v2977, %v3097
  %v3182 = vmul.f32 %v2978, %v3098
  %v3183 = vmul.f32 %v2979, %v3099
  %v3184 = vmul.f32 %v2980, %v3100
  %v3185 = vmul.f32 %v2981, %v3101
  %v3186 = vmul.f32 %v2982, %v3102
  %v3187 = vmul.f32 %v2983, %v3103
  %v3188 = vmul.f32 %v2984, %v3104
  %v3189 = vmul.f32 %v2985, %v3105
  %v3190 = vmul.f32 %v2986, %v3106
  %v3191 = vmul.f32 %v2987, %v3095
  %v3192 = vmul.f32 %v2988, %v3096
  %v3193 = vmul.f32 %v2989, %v3097
  %v3194 = vmul.f32 %v2990, %v3098
  %v3195 = vmul.f32 %v2991, %v3099
  %v3196 = vmul.f32 %v2992, %v3100
  %v3197 = vmul.f32 %v2993, %v3101
  %v3198 = vmul.f32 %v2994, %v3102
  %v3199 = vmul.f32 %v2995, %v3103
  %v3200 = vmul.f32 %v2996, %v3104
  %v3201 = vmul.f32 %v2997, %v3105
  %v3202 = vmul.f32 %v2998, %v3106
  %v3203 = vmul.f32 %v2999, %v3095
  %v3204 = vmul.f32 %v3000, %v3096
  %v3205 = vmul.f32 %v3001, %v3097
  %v3206 = vmul.f32 %v3002, %v3098
  %v3207 = vmul.f32 %v3003, %v3099
  %v3208 = vmul.f32 %v3004, %v3100
  %v3209 = vmul.f32 %v3005, %v3101
  %v3210 = vmul.f32 %v3006, %v3102
  %v3211 = vmul.f32 %v3007, %v3103
  %v3212 = vmul.f32 %v3008, %v3104
  %v3213 = vmul.f32 %v3009, %v3105
  %v3214 = vmul.f32 %v3010, %v3106
  %v3215 = vmul.f32 %v3011, %v3095
  %v3216 = vmul.f32 %v3012, %v3096
  %v3217 = vmul.f32 %v3013, %v3097
  %v3218 = vmul.f32 %v3014, %v3098
  %v3219 = vmul.f32 %v3015, %v3099
  %v3220 = vmul.f32 %v3016, %v3100
  %v3221 = vmul.f32 %v3017, %v3101
  %v3222 = vmul.f32 %v3018, %v3102
  %v3223 = vmul.f32 %v3019, %v3103
  %v3224 = vmul.f32 %v3020, %v3104
  %v3225 = vmul.f32 %v3021, %v3105
  %v3226 = vmul.f32 %v3022, %v3106
  %v3227 = vmul.f32 %v3023, %v3095
  %v3228 = vmul.f32 %v3024, %v3096
  %v3229 = vmul.f32 %v3025, %v3097
  %v3230 = vmul.f32 %v3026, %v3098
  %v3231 = vmul.f32 %v3027, %v3099
  %v3232 = vmul.f32 %v3028, %v3100
  %v3233 = vmul.f32 %v3029, %v3101
  %v3234 = vmul.f32 %v3030, %v3102
  %v3235 = vmul.f32 %v3031, %v3103
  %v3236 = vmul.f32 %v3032, %v3104
  %v3237 = vmul.f32 %v3033, %v3105
  %v3238 = vmul.f32 %v3034, %v3106
  %v3239 = vmul.f32 %v3035, %v3095
  %v3240 = vmul.f32 %v3036, %v3096
  %v3241 = vmul.f32 %v3037, %v3097
  %v3242 = vmul.f32 %v3038, %v3098
  %v3243 = vmul.f32 %v3039, %v3099
  %v3244 = vmul.f32 %v3040, %v3100
  %v3245 = vmul.f32 %v3041, %v3101
  %v3246 = vmul.f32 %v3042, %v3102
  %v3247 = vmul.f32 %v3043, %v3103
  %v3248 = vmul.f32 %v3044, %v3104
  %v3249 = vmul.f32 %v3045, %v3105
  %v3250 = vmul.f32 %v3046, %v3106
  %v3251 = vmul.f32 %v3047, %v3095
  %v3252 = vmul.f32 %v3048, %v3096
  %v3253 = vmul.f32 %v3049, %v3097
  %v3254 = vmul.f32 %v3050, %v3098
  %v3255 = vmul.f32 %v3051, %v3099
  %v3256 = vmul.f32 %v3052, %v3100
  %v3257 = vmul.f32 %v3053, %v3101
  %v3258 = vmul.f32 %v3054, %v3102
  %v3259 = vmul.f32 %v3055, %v3103
  %v3260 = vmul.f32 %v3056, %v3104
  %v3261 = vmul.f32 %v3057, %v3105
  %v3262 = vmul.f32 %v3058, %v3106
  %v3263 = vmul.f32 %v3059, %v3095
  %v3264 = vmul.f32 %v3060, %v3096
  %v3265 = vmul.f32 %v3061, %v3097
  %v3266 = vmul.f32 %v3062, %v3098
  %v3267 = vmul.f32 %v3063, %v3099
  %v3268 = vmul.f32 %v3064, %v3100
  %v3269 = vmul.f32 %v3065, %v3101
  %v3270 = vmul.f32 %v3066, %v3102
  %v3271 = vmul.f32 %v3067, %v3103
  %v3272 = vmul.f32 %v3068, %v3104
  %v3273 = vmul.f32 %v3069, %v3105
  %v3274 = vmul.f32 %v3070, %v3106
  %v3275 = vmul.f32 %v3071, %v3095
  %v3276 = vmul.f32 %v3072, %v3096
  %v3277 = vmul.f32 %v3073, %v3097
  %v3278 = vmul.f32 %v3074, %v3098
  %v3279 = vmul.f32 %v3075, %v3099
  %v3280 = vmul.f32 %v3076, %v3100
  %v3281 = vmul.f32 %v3077, %v3101
  %v3282 = vmul.f32 %v3078, %v3102
  %v3283 = vmul.f32 %v3079, %v3103
  %v3284 = vmul.f32 %v3080, %v3104
  %v3285 = vmul.f32 %v3081, %v3105
  %v3286 = vmul.f32 %v3082, %v3106
  %v3287 = vmul.f32 %v3083, %v3095
  %v3288 = vmul.f32 %v3084, %v3096
  %v3289 = vmul.f32 %v3085, %v3097
  %v3290 = vmul.f32 %v3086, %v3098
  %v3291 = vmul.f32 %v3087, %v3099
  %v3292 = vmul.f32 %v3088, %v3100
  %v3293 = vmul.f32 %v3089, %v3101
  %v3294 = vmul.f32 %v3090, %v3102
  %v3295 = vmul.f32 %v3091, %v3103
  %v3296 = vmul.f32 %v3092, %v3104
  %v3297 = vmul.f32 %v3093, %v3105
  %v3298 = vmul.f32 %v3094, %v3106
  %v3299 = vmax.f32 %v3107, %v3110
  %v3300 = vmax.f32 %v3299, %v3113
  %v3301 = vmax.f32 %v3300, %v3116
  %v3302 = vrot.slane %v3301, 4
  %v3303 = vmax.f32 %v3301, %v3302
  %v3304 = vrot.slane %v3303, 2
  %v3305 = vmax.f32 %v3303, %v3304
  %v3306 = vrot.slane %v3305, 1
  %v3307 = vmax.f32 %v3305, %v3306
  %v3308 = vmax.f32 %v3108, %v3111
  %v3309 = vmax.f32 %v3308, %v3114
  %v3310 = vmax.f32 %v3309, %v3117
  %v3311 = vrot.slane %v3310, 4
  %v3312 = vmax.f32 %v3310, %v3311
  %v3313 = vrot.slane %v3312, 2
  %v3314 = vmax.f32 %v3312, %v3313
  %v3315 = vrot.slane %v3314, 1
  %v3316 = vmax.f32 %v3314, %v3315
  %v3317 = vmax.f32 %v3109, %v3112
  %v3318 = vmax.f32 %v3317, %v3115
  %v3319 = vmax.f32 %v3318, %v3118
  %v3320 = vrot.slane %v3319, 4
  %v3321 = vmax.f32 %v3319, %v3320
  %v3322 = vrot.slane %v3321, 2
  %v3323 = vmax.f32 %v3321, %v3322
  %v3324 = vrot.slane %v3323, 1
  %v3325 = vmax.f32 %v3323, %v3324
  %v3326 = vmax.f32 %v3119, %v3122
  %v3327 = vmax.f32 %v3326, %v3125
  %v3328 = vmax.f32 %v3327, %v3128
  %v3329 = vrot.slane %v3328, 4
  %v3330 = vmax.f32 %v3328, %v3329
  %v3331 = vrot.slane %v3330, 2
  %v3332 = vmax.f32 %v3330, %v3331
  %v3333 = vrot.slane %v3332, 1
  %v3334 = vmax.f32 %v3332, %v3333
  %v3335 = vmax.f32 %v3120, %v3123
  %v3336 = vmax.f32 %v3335, %v3126
  %v3337 = vmax.f32 %v3336, %v3129
  %v3338 = vrot.slane %v3337, 4
  %v3339 = vmax.f32 %v3337, %v3338
  %v3340 = vrot.slane %v3339, 2
  %v3341 = vmax.f32 %v3339, %v3340
  %v3342 = vrot.slane %v3341, 1
  %v3343 = vmax.f32 %v3341, %v3342
  %v3344 = vmax.f32 %v3121, %v3124
  %v3345 = vmax.f32 %v3344, %v3127
  %v3346 = vmax.f32 %v3345, %v3130
  %v3347 = vrot.slane %v3346, 4
  %v3348 = vmax.f32 %v3346, %v3347
  %v3349 = vrot.slane %v3348, 2
  %v3350 = vmax.f32 %v3348, %v3349
  %v3351 = vrot.slane %v3350, 1
  %v3352 = vmax.f32 %v3350, %v3351
  %v3353 = vmax.f32 %v3131, %v3134
  %v3354 = vmax.f32 %v3353, %v3137
  %v3355 = vmax.f32 %v3354, %v3140
  %v3356 = vrot.slane %v3355, 4
  %v3357 = vmax.f32 %v3355, %v3356
  %v3358 = vrot.slane %v3357, 2
  %v3359 = vmax.f32 %v3357, %v3358
  %v3360 = vrot.slane %v3359, 1
  %v3361 = vmax.f32 %v3359, %v3360
  %v3362 = vmax.f32 %v3132, %v3135
  %v3363 = vmax.f32 %v3362, %v3138
  %v3364 = vmax.f32 %v3363, %v3141
  %v3365 = vrot.slane %v3364, 4
  %v3366 = vmax.f32 %v3364, %v3365
  %v3367 = vrot.slane %v3366, 2
  %v3368 = vmax.f32 %v3366, %v3367
  %v3369 = vrot.slane %v3368, 1
  %v3370 = vmax.f32 %v3368, %v3369
  %v3371 = vmax.f32 %v3133, %v3136
  %v3372 = vmax.f32 %v3371, %v3139
  %v3373 = vmax.f32 %v3372, %v3142
  %v3374 = vrot.slane %v3373, 4
  %v3375 = vmax.f32 %v3373, %v3374
  %v3376 = vrot.slane %v3375, 2
  %v3377 = vmax.f32 %v3375, %v3376
  %v3378 = vrot.slane %v3377, 1
  %v3379 = vmax.f32 %v3377, %v3378
  %v3380 = vmax.f32 %v3143, %v3146
  %v3381 = vmax.f32 %v3380, %v3149
  %v3382 = vmax.f32 %v3381, %v3152
  %v3383 = vrot.slane %v3382, 4
  %v3384 = vmax.f32 %v3382, %v3383
  %v3385 = vrot.slane %v3384, 2
  %v3386 = vmax.f32 %v3384, %v3385
  %v3387 = vrot.slane %v3386, 1
  %v3388 = vmax.f32 %v3386, %v3387
  %v3389 = vmax.f32 %v3144, %v3147
  %v3390 = vmax.f32 %v3389, %v3150
  %v3391 = vmax.f32 %v3390, %v3153
  %v3392 = vrot.slane %v3391, 4
  %v3393 = vmax.f32 %v3391, %v3392
  %v3394 = vrot.slane %v3393, 2
  %v3395 = vmax.f32 %v3393, %v3394
  %v3396 = vrot.slane %v3395, 1
  %v3397 = vmax.f32 %v3395, %v3396
  %v3398 = vmax.f32 %v3145, %v3148
  %v3399 = vmax.f32 %v3398, %v3151
  %v3400 = vmax.f32 %v3399, %v3154
  %v3401 = vrot.slane %v3400, 4
  %v3402 = vmax.f32 %v3400, %v3401
  %v3403 = vrot.slane %v3402, 2
  %v3404 = vmax.f32 %v3402, %v3403
  %v3405 = vrot.slane %v3404, 1
  %v3406 = vmax.f32 %v3404, %v3405
  %v3407 = vmax.f32 %v3155, %v3158
  %v3408 = vmax.f32 %v3407, %v3161
  %v3409 = vmax.f32 %v3408, %v3164
  %v3410 = vrot.slane %v3409, 4
  %v3411 = vmax.f32 %v3409, %v3410
  %v3412 = vrot.slane %v3411, 2
  %v3413 = vmax.f32 %v3411, %v3412
  %v3414 = vrot.slane %v3413, 1
  %v3415 = vmax.f32 %v3413, %v3414
  %v3416 = vmax.f32 %v3156, %v3159
  %v3417 = vmax.f32 %v3416, %v3162
  %v3418 = vmax.f32 %v3417, %v3165
  %v3419 = vrot.slane %v3418, 4
  %v3420 = vmax.f32 %v3418, %v3419
  %v3421 = vrot.slane %v3420, 2
  %v3422 = vmax.f32 %v3420, %v3421
  %v3423 = vrot.slane %v3422, 1
  %v3424 = vmax.f32 %v3422, %v3423
  %v3425 = vmax.f32 %v3157, %v3160
  %v3426 = vmax.f32 %v3425, %v3163
  %v3427 = vmax.f32 %v3426, %v3166
  %v3428 = vrot.slane %v3427, 4
  %v3429 = vmax.f32 %v3427, %v3428
  %v3430 = vrot.slane %v3429, 2
  %v3431 = vmax.f32 %v3429, %v3430
  %v3432 = vrot.slane %v3431, 1
  %v3433 = vmax.f32 %v3431, %v3432
  %v3434 = vmax.f32 %v3167, %v3170
  %v3435 = vmax.f32 %v3434, %v3173
  %v3436 = vmax.f32 %v3435, %v3176
  %v3437 = vrot.slane %v3436, 4
  %v3438 = vmax.f32 %v3436, %v3437
  %v3439 = vrot.slane %v3438, 2
  %v3440 = vmax.f32 %v3438, %v3439
  %v3441 = vrot.slane %v3440, 1
  %v3442 = vmax.f32 %v3440, %v3441
  %v3443 = vmax.f32 %v3168, %v3171
  %v3444 = vmax.f32 %v3443, %v3174
  %v3445 = vmax.f32 %v3444, %v3177
  %v3446 = vrot.slane %v3445, 4
  %v3447 = vmax.f32 %v3445, %v3446
  %v3448 = vrot.slane %v3447, 2
  %v3449 = vmax.f32 %v3447, %v3448
  %v3450 = vrot.slane %v3449, 1
  %v3451 = vmax.f32 %v3449, %v3450
  %v3452 = vmax.f32 %v3169, %v3172
  %v3453 = vmax.f32 %v3452, %v3175
  %v3454 = vmax.f32 %v3453, %v3178
  %v3455 = vrot.slane %v3454, 4
  %v3456 = vmax.f32 %v3454, %v3455
  %v3457 = vrot.slane %v3456, 2
  %v3458 = vmax.f32 %v3456, %v3457
  %v3459 = vrot.slane %v3458, 1
  %v3460 = vmax.f32 %v3458, %v3459
  %v3461 = vmax.f32 %v3179, %v3182
  %v3462 = vmax.f32 %v3461, %v3185
  %v3463 = vmax.f32 %v3462, %v3188
  %v3464 = vrot.slane %v3463, 4
  %v3465 = vmax.f32 %v3463, %v3464
  %v3466 = vrot.slane %v3465, 2
  %v3467 = vmax.f32 %v3465, %v3466
  %v3468 = vrot.slane %v3467, 1
  %v3469 = vmax.f32 %v3467, %v3468
  %v3470 = vmax.f32 %v3180, %v3183
  %v3471 = vmax.f32 %v3470, %v3186
  %v3472 = vmax.f32 %v3471, %v3189
  %v3473 = vrot.slane %v3472, 4
  %v3474 = vmax.f32 %v3472, %v3473
  %v3475 = vrot.slane %v3474, 2
  %v3476 = vmax.f32 %v3474, %v3475
  %v3477 = vrot.slane %v3476, 1
  %v3478 = vmax.f32 %v3476, %v3477
  %v3479 = vmax.f32 %v3181, %v3184
  %v3480 = vmax.f32 %v3479, %v3187
  %v3481 = vmax.f32 %v3480, %v3190
  %v3482 = vrot.slane %v3481, 4
  %v3483 = vmax.f32 %v3481, %v3482
  %v3484 = vrot.slane %v3483, 2
  %v3485 = vmax.f32 %v3483, %v3484
  %v3486 = vrot.slane %v3485, 1
  %v3487 = vmax.f32 %v3485, %v3486
  %v3488 = vmax.f32 %v3191, %v3194
  %v3489 = vmax.f32 %v3488, %v3197
  %v3490 = vmax.f32 %v3489, %v3200
  %v3491 = vrot.slane %v3490, 4
  %v3492 = vmax.f32 %v3490, %v3491
  %v3493 = vrot.slane %v3492, 2
  %v3494 = vmax.f32 %v3492, %v3493
  %v3495 = vrot.slane %v3494, 1
  %v3496 = vmax.f32 %v3494, %v3495
  %v3497 = vmax.f32 %v3192, %v3195
  %v3498 = vmax.f32 %v3497, %v3198
  %v3499 = vmax.f32 %v3498, %v3201
  %v3500 = vrot.slane %v3499, 4
  %v3501 = vmax.f32 %v3499, %v3500
  %v3502 = vrot.slane %v3501, 2
  %v3503 = vmax.f32 %v3501, %v3502
  %v3504 = vrot.slane %v3503, 1
  %v3505 = vmax.f32 %v3503, %v3504
  %v3506 = vmax.f32 %v3193, %v3196
  %v3507 = vmax.f32 %v3506, %v3199
  %v3508 = vmax.f32 %v3507, %v3202
  %v3509 = vrot.slane %v3508, 4
  %v3510 = vmax.f32 %v3508, %v3509
  %v3511 = vrot.slane %v3510, 2
  %v3512 = vmax.f32 %v3510, %v3511
  %v3513 = vrot.slane %v3512, 1
  %v3514 = vmax.f32 %v3512, %v3513
  %v3515 = vmax.f32 %v3203, %v3206
  %v3516 = vmax.f32 %v3515, %v3209
  %v3517 = vmax.f32 %v3516, %v3212
  %v3518 = vrot.slane %v3517, 4
  %v3519 = vmax.f32 %v3517, %v3518
  %v3520 = vrot.slane %v3519, 2
  %v3521 = vmax.f32 %v3519, %v3520
  %v3522 = vrot.slane %v3521, 1
  %v3523 = vmax.f32 %v3521, %v3522
  %v3524 = vmax.f32 %v3204, %v3207
  %v3525 = vmax.f32 %v3524, %v3210
  %v3526 = vmax.f32 %v3525, %v3213
  %v3527 = vrot.slane %v3526, 4
  %v3528 = vmax.f32 %v3526, %v3527
  %v3529 = vrot.slane %v3528, 2
  %v3530 = vmax.f32 %v3528, %v3529
  %v3531 = vrot.slane %v3530, 1
  %v3532 = vmax.f32 %v3530, %v3531
  %v3533 = vmax.f32 %v3205, %v3208
  %v3534 = vmax.f32 %v3533, %v3211
  %v3535 = vmax.f32 %v3534, %v3214
  %v3536 = vrot.slane %v3535, 4
  %v3537 = vmax.f32 %v3535, %v3536
  %v3538 = vrot.slane %v3537, 2
  %v3539 = vmax.f32 %v3537, %v3538
  %v3540 = vrot.slane %v3539, 1
  %v3541 = vmax.f32 %v3539, %v3540
  %v3542 = vmax.f32 %v3215, %v3218
  %v3543 = vmax.f32 %v3542, %v3221
  %v3544 = vmax.f32 %v3543, %v3224
  %v3545 = vrot.slane %v3544, 4
  %v3546 = vmax.f32 %v3544, %v3545
  %v3547 = vrot.slane %v3546, 2
  %v3548 = vmax.f32 %v3546, %v3547
  %v3549 = vrot.slane %v3548, 1
  %v3550 = vmax.f32 %v3548, %v3549
  %v3551 = vmax.f32 %v3216, %v3219
  %v3552 = vmax.f32 %v3551, %v3222
  %v3553 = vmax.f32 %v3552, %v3225
  %v3554 = vrot.slane %v3553, 4
  %v3555 = vmax.f32 %v3553, %v3554
  %v3556 = vrot.slane %v3555, 2
  %v3557 = vmax.f32 %v3555, %v3556
  %v3558 = vrot.slane %v3557, 1
  %v3559 = vmax.f32 %v3557, %v3558
  %v3560 = vmax.f32 %v3217, %v3220
  %v3561 = vmax.f32 %v3560, %v3223
  %v3562 = vmax.f32 %v3561, %v3226
  %v3563 = vrot.slane %v3562, 4
  %v3564 = vmax.f32 %v3562, %v3563
  %v3565 = vrot.slane %v3564, 2
  %v3566 = vmax.f32 %v3564, %v3565
  %v3567 = vrot.slane %v3566, 1
  %v3568 = vmax.f32 %v3566, %v3567
  %v3569 = vmax.f32 %v3227, %v3230
  %v3570 = vmax.f32 %v3569, %v3233
  %v3571 = vmax.f32 %v3570, %v3236
  %v3572 = vrot.slane %v3571, 4
  %v3573 = vmax.f32 %v3571, %v3572
  %v3574 = vrot.slane %v3573, 2
  %v3575 = vmax.f32 %v3573, %v3574
  %v3576 = vrot.slane %v3575, 1
  %v3577 = vmax.f32 %v3575, %v3576
  %v3578 = vmax.f32 %v3228, %v3231
  %v3579 = vmax.f32 %v3578, %v3234
  %v3580 = vmax.f32 %v3579, %v3237
  %v3581 = vrot.slane %v3580, 4
  %v3582 = vmax.f32 %v3580, %v3581
  %v3583 = vrot.slane %v3582, 2
  %v3584 = vmax.f32 %v3582, %v3583
  %v3585 = vrot.slane %v3584, 1
  %v3586 = vmax.f32 %v3584, %v3585
  %v3587 = vmax.f32 %v3229, %v3232
  %v3588 = vmax.f32 %v3587, %v3235
  %v3589 = vmax.f32 %v3588, %v3238
  %v3590 = vrot.slane %v3589, 4
  %v3591 = vmax.f32 %v3589, %v3590
  %v3592 = vrot.slane %v3591, 2
  %v3593 = vmax.f32 %v3591, %v3592
  %v3594 = vrot.slane %v3593, 1
  %v3595 = vmax.f32 %v3593, %v3594
  %v3596 = vmax.f32 %v3239, %v3242
  %v3597 = vmax.f32 %v3596, %v3245
  %v3598 = vmax.f32 %v3597, %v3248
  %v3599 = vrot.slane %v3598, 4
  %v3600 = vmax.f32 %v3598, %v3599
  %v3601 = vrot.slane %v3600, 2
  %v3602 = vmax.f32 %v3600, %v3601
  %v3603 = vrot.slane %v3602, 1
  %v3604 = vmax.f32 %v3602, %v3603
  %v3605 = vmax.f32 %v3240, %v3243
  %v3606 = vmax.f32 %v3605, %v3246
  %v3607 = vmax.f32 %v3606, %v3249
  %v3608 = vrot.slane %v3607, 4
  %v3609 = vmax.f32 %v3607, %v3608
  %v3610 = vrot.slane %v3609, 2
  %v3611 = vmax.f32 %v3609, %v3610
  %v3612 = vrot.slane %v3611, 1
  %v3613 = vmax.f32 %v3611, %v3612
  %v3614 = vmax.f32 %v3241, %v3244
  %v3615 = vmax.f32 %v3614, %v3247
  %v3616 = vmax.f32 %v3615, %v3250
  %v3617 = vrot.slane %v3616, 4
  %v3618 = vmax.f32 %v3616, %v3617
  %v3619 = vrot.slane %v3618, 2
  %v3620 = vmax.f32 %v3618, %v3619
  %v3621 = vrot.slane %v3620, 1
  %v3622 = vmax.f32 %v3620, %v3621
  %v3623 = vmax.f32 %v3251, %v3254
  %v3624 = vmax.f32 %v3623, %v3257
  %v3625 = vmax.f32 %v3624, %v3260
  %v3626 = vrot.slane %v3625, 4
  %v3627 = vmax.f32 %v3625, %v3626
  %v3628 = vrot.slane %v3627, 2
  %v3629 = vmax.f32 %v3627, %v3628
  %v3630 = vrot.slane %v3629, 1
  %v3631 = vmax.f32 %v3629, %v3630
  %v3632 = vmax.f32 %v3252, %v3255
  %v3633 = vmax.f32 %v3632, %v3258
  %v3634 = vmax.f32 %v3633, %v3261
  %v3635 = vrot.slane %v3634, 4
  %v3636 = vmax.f32 %v3634, %v3635
  %v3637 = vrot.slane %v3636, 2
  %v3638 = vmax.f32 %v3636, %v3637
  %v3639 = vrot.slane %v3638, 1
  %v3640 = vmax.f32 %v3638, %v3639
  %v3641 = vmax.f32 %v3253, %v3256
  %v3642 = vmax.f32 %v3641, %v3259
  %v3643 = vmax.f32 %v3642, %v3262
  %v3644 = vrot.slane %v3643, 4
  %v3645 = vmax.f32 %v3643, %v3644
  %v3646 = vrot.slane %v3645, 2
  %v3647 = vmax.f32 %v3645, %v3646
  %v3648 = vrot.slane %v3647, 1
  %v3649 = vmax.f32 %v3647, %v3648
  %v3650 = vmax.f32 %v3263, %v3266
  %v3651 = vmax.f32 %v3650, %v3269
  %v3652 = vmax.f32 %v3651, %v3272
  %v3653 = vrot.slane %v3652, 4
  %v3654 = vmax.f32 %v3652, %v3653
  %v3655 = vrot.slane %v3654, 2
  %v3656 = vmax.f32 %v3654, %v3655
  %v3657 = vrot.slane %v3656, 1
  %v3658 = vmax.f32 %v3656, %v3657
  %v3659 = vmax.f32 %v3264, %v3267
  %v3660 = vmax.f32 %v3659, %v3270
  %v3661 = vmax.f32 %v3660, %v3273
  %v3662 = vrot.slane %v3661, 4
  %v3663 = vmax.f32 %v3661, %v3662
  %v3664 = vrot.slane %v3663, 2
  %v3665 = vmax.f32 %v3663, %v3664
  %v3666 = vrot.slane %v3665, 1
  %v3667 = vmax.f32 %v3665, %v3666
  %v3668 = vmax.f32 %v3265, %v3268
  %v3669 = vmax.f32 %v3668, %v3271
  %v3670 = vmax.f32 %v3669, %v3274
  %v3671 = vrot.slane %v3670, 4
  %v3672 = vmax.f32 %v3670, %v3671
  %v3673 = vrot.slane %v3672, 2
  %v3674 = vmax.f32 %v3672, %v3673
  %v3675 = vrot.slane %v3674, 1
  %v3676 = vmax.f32 %v3674, %v3675
  %v3677 = vmax.f32 %v3275, %v3278
  %v3678 = vmax.f32 %v3677, %v3281
  %v3679 = vmax.f32 %v3678, %v3284
  %v3680 = vrot.slane %v3679, 4
  %v3681 = vmax.f32 %v3679, %v3680
  %v3682 = vrot.slane %v3681, 2
  %v3683 = vmax.f32 %v3681, %v3682
  %v3684 = vrot.slane %v3683, 1
  %v3685 = vmax.f32 %v3683, %v3684
  %v3686 = vmax.f32 %v3276, %v3279
  %v3687 = vmax.f32 %v3686, %v3282
  %v3688 = vmax.f32 %v3687, %v3285
  %v3689 = vrot.slane %v3688, 4
  %v3690 = vmax.f32 %v3688, %v3689
  %v3691 = vrot.slane %v3690, 2
  %v3692 = vmax.f32 %v3690, %v3691
  %v3693 = vrot.slane %v3692, 1
  %v3694 = vmax.f32 %v3692, %v3693
  %v3695 = vmax.f32 %v3277, %v3280
  %v3696 = vmax.f32 %v3695, %v3283
  %v3697 = vmax.f32 %v3696, %v3286
  %v3698 = vrot.slane %v3697, 4
  %v3699 = vmax.f32 %v3697, %v3698
  %v3700 = vrot.slane %v3699, 2
  %v3701 = vmax.f32 %v3699, %v3700
  %v3702 = vrot.slane %v3701, 1
  %v3703 = vmax.f32 %v3701, %v3702
  %v3704 = vmax.f32 %v3287, %v3290
  %v3705 = vmax.f32 %v3704, %v3293
  %v3706 = vmax.f32 %v3705, %v3296
  %v3707 = vrot.slane %v3706, 4
  %v3708 = vmax.f32 %v3706, %v3707
  %v3709 = vrot.slane %v3708, 2
  %v3710 = vmax.f32 %v3708, %v3709
  %v3711 = vrot.slane %v3710, 1
  %v3712 = vmax.f32 %v3710, %v3711
  %v3713 = vmax.f32 %v3288, %v3291
  %v3714 = vmax.f32 %v3713, %v3294
  %v3715 = vmax.f32 %v3714, %v3297
  %v3716 = vrot.slane %v3715, 4
  %v3717 = vmax.f32 %v3715, %v3716
  %v3718 = vrot.slane %v3717, 2
  %v3719 = vmax.f32 %v3717, %v3718
  %v3720 = vrot.slane %v3719, 1
  %v3721 = vmax.f32 %v3719, %v3720
  %v3722 = vmax.f32 %v3289, %v3292
  %v3723 = vmax.f32 %v3722, %v3295
  %v3724 = vmax.f32 %v3723, %v3298
  %v3725 = vrot.slane %v3724, 4
  %v3726 = vmax.f32 %v3724, %v3725
  %v3727 = vrot.slane %v3726, 2
  %v3728 = vmax.f32 %v3726, %v3727
  %v3729 = vrot.slane %v3728, 1
  %v3730 = vmax.f32 %v3728, %v3729
  %v3731 = vpack.c.bf16 %v3307, %v3307
  %v3732 = vpack.c.bf16 %v3316, %v3316
  %v3733 = vpack.c.bf16 %v3325, %v3325
  %v3734 = vpack.c.bf16 %v3334, %v3334
  %v3735 = vpack.c.bf16 %v3343, %v3343
  %v3736 = vpack.c.bf16 %v3352, %v3352
  %v3737 = vpack.c.bf16 %v3361, %v3361
  %v3738 = vpack.c.bf16 %v3370, %v3370
  %v3739 = vpack.c.bf16 %v3379, %v3379
  %v3740 = vpack.c.bf16 %v3388, %v3388
  %v3741 = vpack.c.bf16 %v3397, %v3397
  %v3742 = vpack.c.bf16 %v3406, %v3406
  %v3743 = vpack.c.bf16 %v3415, %v3415
  %v3744 = vpack.c.bf16 %v3424, %v3424
  %v3745 = vpack.c.bf16 %v3433, %v3433
  %v3746 = vpack.c.bf16 %v3442, %v3442
  %v3747 = vpack.c.bf16 %v3451, %v3451
  %v3748 = vpack.c.bf16 %v3460, %v3460
  %v3749 = vpack.c.bf16 %v3469, %v3469
  %v3750 = vpack.c.bf16 %v3478, %v3478
  %v3751 = vpack.c.bf16 %v3487, %v3487
  %v3752 = vpack.c.bf16 %v3496, %v3496
  %v3753 = vpack.c.bf16 %v3505, %v3505
  %v3754 = vpack.c.bf16 %v3514, %v3514
  %v3755 = vpack.c.bf16 %v3523, %v3523
  %v3756 = vpack.c.bf16 %v3532, %v3532
  %v3757 = vpack.c.bf16 %v3541, %v3541
  %v3758 = vpack.c.bf16 %v3550, %v3550
  %v3759 = vpack.c.bf16 %v3559, %v3559
  %v3760 = vpack.c.bf16 %v3568, %v3568
  %v3761 = vpack.c.bf16 %v3577, %v3577
  %v3762 = vpack.c.bf16 %v3586, %v3586
  %v3763 = vpack.c.bf16 %v3595, %v3595
  %v3764 = vpack.c.bf16 %v3604, %v3604
  %v3765 = vpack.c.bf16 %v3613, %v3613
  %v3766 = vpack.c.bf16 %v3622, %v3622
  %v3767 = vpack.c.bf16 %v3631, %v3631
  %v3768 = vpack.c.bf16 %v3640, %v3640
  %v3769 = vpack.c.bf16 %v3649, %v3649
  %v3770 = vpack.c.bf16 %v3658, %v3658
  %v3771 = vpack.c.bf16 %v3667, %v3667
  %v3772 = vpack.c.bf16 %v3676, %v3676
  %v3773 = vpack.c.bf16 %v3685, %v3685
  %v3774 = vpack.c.bf16 %v3694, %v3694
  %v3775 = vpack.c.bf16 %v3703, %v3703
  %v3776 = vpack.c.bf16 %v3712, %v3712
  %v3777 = vpack.c.bf16 %v3721, %v3721
  %v3778 = vpack.c.bf16 %v3730, %v3730
  %v3779 = vld [vmem:[%s5] sm:$0xf]
  %v3780 = vld [vmem:[%s5 + $0x4] sm:$0xf]
  %v3781 = vld [vmem:[%s5 + $0x8] sm:$0xf]
  %v3782 = vld [vmem:[%s5 + $0xc] sm:$0xf]
  %v3783 = vld [vmem:[%s5 + $0x10] sm:$0xf]
  %v3784 = vld [vmem:[%s5 + $0x14] sm:$0xf]
  %v3785 = vld [vmem:[%s5 + $0x18] sm:$0xf]
  %v3786 = vld [vmem:[%s5 + $0x1c] sm:$0xf]
  %v3787 = vld [vmem:[%s5 + $0x20] sm:$0xf]
  %v3788 = vld [vmem:[%s5 + $0x24] sm:$0xf]
  %v3789 = vld [vmem:[%s5 + $0x28] sm:$0xf]
  %v3790 = vld [vmem:[%s5 + $0x2c] sm:$0xf]
  %v3791 = vld [vmem:[%s5 + $0x30] sm:$0xf]
  %v3792 = vld [vmem:[%s5 + $0x34] sm:$0xf]
  %v3793 = vld [vmem:[%s5 + $0x38] sm:$0xf]
  %v3794 = vld [vmem:[%s5 + $0x3c] sm:$0xf]
  %v3795 = vld [vmem:[%s5 + $0x40] sm:$0xf]
  %v3796 = vld [vmem:[%s5 + $0x44] sm:$0xf]
  %v3797 = vld [vmem:[%s5 + $0x48] sm:$0xf]
  %v3798 = vld [vmem:[%s5 + $0x4c] sm:$0xf]
  %v3799 = vld [vmem:[%s5 + $0x50] sm:$0xf]
  %v3800 = vld [vmem:[%s5 + $0x54] sm:$0xf]
  %v3801 = vld [vmem:[%s5 + $0x58] sm:$0xf]
  %v3802 = vld [vmem:[%s5 + $0x5c] sm:$0xf]
  %v3803 = vld [vmem:[%s5 + $0x60] sm:$0xf]
  %v3804 = vld [vmem:[%s5 + $0x64] sm:$0xf]
  %v3805 = vld [vmem:[%s5 + $0x68] sm:$0xf]
  %v3806 = vld [vmem:[%s5 + $0x6c] sm:$0xf]
  %v3807 = vld [vmem:[%s5 + $0x70] sm:$0xf]
  %v3808 = vld [vmem:[%s5 + $0x74] sm:$0xf]
  %v3809 = vld [vmem:[%s5 + $0x78] sm:$0xf]
  %v3810 = vld [vmem:[%s5 + $0x7c] sm:$0xf]
  %v3811 = vld [vmem:[%s5 + $0x80] sm:$0xf]
  %v3812 = vld [vmem:[%s5 + $0x84] sm:$0xf]
  %v3813 = vld [vmem:[%s5 + $0x88] sm:$0xf]
  %v3814 = vld [vmem:[%s5 + $0x8c] sm:$0xf]
  %v3815 = vld [vmem:[%s5 + $0x90] sm:$0xf]
  %v3816 = vld [vmem:[%s5 + $0x94] sm:$0xf]
  %v3817 = vld [vmem:[%s5 + $0x98] sm:$0xf]
  %v3818 = vld [vmem:[%s5 + $0x9c] sm:$0xf]
  %v3819 = vld [vmem:[%s5 + $0xa0] sm:$0xf]
  %v3820 = vld [vmem:[%s5 + $0xa4] sm:$0xf]
  %v3821 = vld [vmem:[%s5 + $0xa8] sm:$0xf]
  %v3822 = vld [vmem:[%s5 + $0xac] sm:$0xf]
  %v3823 = vld [vmem:[%s5 + $0xb0] sm:$0xf]
  %v3824 = vld [vmem:[%s5 + $0xb4] sm:$0xf]
  %v3825 = vld [vmem:[%s5 + $0xb8] sm:$0xf]
  %v3826 = vld [vmem:[%s5 + $0xbc] sm:$0xf]
  %v3827 = vld [vmem:[%s6] sm:$0x1]
  %v3829 = vperm.slane %v3827, 0
  %v3879 = vunpack.c.l.b16 %v3731
  %v3880 = vunpack.c.l.b16 %v3732
  %v3881 = vunpack.c.l.b16 %v3733
  %v3882 = vunpack.c.l.b16 %v3734
  %v3883 = vunpack.c.l.b16 %v3735
  %v3884 = vunpack.c.l.b16 %v3736
  %v3885 = vunpack.c.l.b16 %v3737
  %v3886 = vunpack.c.l.b16 %v3738
  %v3887 = vunpack.c.l.b16 %v3739
  %v3888 = vunpack.c.l.b16 %v3740
  %v3889 = vunpack.c.l.b16 %v3741
  %v3890 = vunpack.c.l.b16 %v3742
  %v3891 = vunpack.c.l.b16 %v3743
  %v3892 = vunpack.c.l.b16 %v3744
  %v3893 = vunpack.c.l.b16 %v3745
  %v3894 = vunpack.c.l.b16 %v3746
  %v3895 = vunpack.c.l.b16 %v3747
  %v3896 = vunpack.c.l.b16 %v3748
  %v3897 = vunpack.c.l.b16 %v3749
  %v3898 = vunpack.c.l.b16 %v3750
  %v3899 = vunpack.c.l.b16 %v3751
  %v3900 = vunpack.c.l.b16 %v3752
  %v3901 = vunpack.c.l.b16 %v3753
  %v3902 = vunpack.c.l.b16 %v3754
  %v3903 = vunpack.c.l.b16 %v3755
  %v3904 = vunpack.c.l.b16 %v3756
  %v3905 = vunpack.c.l.b16 %v3757
  %v3906 = vunpack.c.l.b16 %v3758
  %v3907 = vunpack.c.l.b16 %v3759
  %v3908 = vunpack.c.l.b16 %v3760
  %v3909 = vunpack.c.l.b16 %v3761
  %v3910 = vunpack.c.l.b16 %v3762
  %v3911 = vunpack.c.l.b16 %v3763
  %v3912 = vunpack.c.l.b16 %v3764
  %v3913 = vunpack.c.l.b16 %v3765
  %v3914 = vunpack.c.l.b16 %v3766
  %v3915 = vunpack.c.l.b16 %v3767
  %v3916 = vunpack.c.l.b16 %v3768
  %v3917 = vunpack.c.l.b16 %v3769
  %v3918 = vunpack.c.l.b16 %v3770
  %v3919 = vunpack.c.l.b16 %v3771
  %v3920 = vunpack.c.l.b16 %v3772
  %v3921 = vunpack.c.l.b16 %v3773
  %v3922 = vunpack.c.l.b16 %v3774
  %v3923 = vunpack.c.l.b16 %v3775
  %v3924 = vunpack.c.l.b16 %v3776
  %v3925 = vunpack.c.l.b16 %v3777
  %v3926 = vunpack.c.l.b16 %v3778
  %vm3927 = vcmask 1041409
  %v3928 = vsel %vm3927, %v3882, %v3879
  %vm3929 = vcmask 1042434
  %v3930 = vsel %vm3929, %v3885, %v3928
  %vm3931 = vcmask 1043459
  %v3932 = vsel %vm3931, %v3888, %v3930
  %vm3933 = vcmask 1044484
  %v3934 = vsel %vm3933, %v3891, %v3932
  %vm3935 = vcmask 1045509
  %v3936 = vsel %vm3935, %v3894, %v3934
  %vm3937 = vcmask 1046534
  %v3938 = vsel %vm3937, %v3897, %v3936
  %vm3939 = vcmask 1047559
  %v3940 = vsel %vm3939, %v3900, %v3938
  %v3941 = vsel %vm3927, %v3883, %v3880
  %v3942 = vsel %vm3929, %v3886, %v3941
  %v3943 = vsel %vm3931, %v3889, %v3942
  %v3944 = vsel %vm3933, %v3892, %v3943
  %v3945 = vsel %vm3935, %v3895, %v3944
  %v3946 = vsel %vm3937, %v3898, %v3945
  %v3947 = vsel %vm3939, %v3901, %v3946
  %v3948 = vsel %vm3927, %v3884, %v3881
  %v3949 = vsel %vm3929, %v3887, %v3948
  %v3950 = vsel %vm3931, %v3890, %v3949
  %v3951 = vsel %vm3933, %v3893, %v3950
  %v3952 = vsel %vm3935, %v3896, %v3951
  %v3953 = vsel %vm3937, %v3899, %v3952
  %v3954 = vsel %vm3939, %v3902, %v3953
  %v3955 = vsel %vm3927, %v3906, %v3903
  %v3956 = vsel %vm3929, %v3909, %v3955
  %v3957 = vsel %vm3931, %v3912, %v3956
  %v3958 = vsel %vm3933, %v3915, %v3957
  %v3959 = vsel %vm3935, %v3918, %v3958
  %v3960 = vsel %vm3937, %v3921, %v3959
  %v3961 = vsel %vm3939, %v3924, %v3960
  %v3962 = vsel %vm3927, %v3907, %v3904
  %v3963 = vsel %vm3929, %v3910, %v3962
  %v3964 = vsel %vm3931, %v3913, %v3963
  %v3965 = vsel %vm3933, %v3916, %v3964
  %v3966 = vsel %vm3935, %v3919, %v3965
  %v3967 = vsel %vm3937, %v3922, %v3966
  %v3968 = vsel %vm3939, %v3925, %v3967
  %v3969 = vsel %vm3927, %v3908, %v3905
  %v3970 = vsel %vm3929, %v3911, %v3969
  %v3971 = vsel %vm3931, %v3914, %v3970
  %v3972 = vsel %vm3933, %v3917, %v3971
  %v3973 = vsel %vm3935, %v3920, %v3972
  %v3974 = vsel %vm3937, %v3923, %v3973
  %v3975 = vsel %vm3939, %v3926, %v3974
  %v3976 = vpack.c.b16 %v3961, %v3940
  %v3977 = vpack.c.b16 %v3968, %v3947
  %v3978 = vpack.c.b16 %v3975, %v3954
  %v4030 = vunpack.c.l.b16 %v3779
  %v4031 = vunpack.c.l.b16 %v3780
  %v4032 = vunpack.c.l.b16 %v3781
  %v4033 = vunpack.c.l.b16 %v3782
  %v4034 = vunpack.c.l.b16 %v3783
  %v4035 = vunpack.c.l.b16 %v3784
  %v4036 = vunpack.c.l.b16 %v3785
  %v4037 = vunpack.c.l.b16 %v3786
  %v4038 = vunpack.c.l.b16 %v3787
  %v4039 = vunpack.c.l.b16 %v3788
  %v4040 = vunpack.c.l.b16 %v3789
  %v4041 = vunpack.c.l.b16 %v3790
  %v4042 = vunpack.c.l.b16 %v3791
  %v4043 = vunpack.c.l.b16 %v3792
  %v4044 = vunpack.c.l.b16 %v3793
  %v4045 = vunpack.c.l.b16 %v3794
  %v4046 = vunpack.c.l.b16 %v3795
  %v4047 = vunpack.c.l.b16 %v3796
  %v4048 = vunpack.c.l.b16 %v3797
  %v4049 = vunpack.c.l.b16 %v3798
  %v4050 = vunpack.c.l.b16 %v3799
  %v4051 = vunpack.c.l.b16 %v3800
  %v4052 = vunpack.c.l.b16 %v3801
  %v4053 = vunpack.c.l.b16 %v3802
  %v4054 = vunpack.c.l.b16 %v3803
  %v4055 = vunpack.c.l.b16 %v3804
  %v4056 = vunpack.c.l.b16 %v3805
  %v4057 = vunpack.c.l.b16 %v3806
  %v4058 = vunpack.c.l.b16 %v3807
  %v4059 = vunpack.c.l.b16 %v3808
  %v4060 = vunpack.c.l.b16 %v3809
  %v4061 = vunpack.c.l.b16 %v3810
  %v4062 = vunpack.c.l.b16 %v3811
  %v4063 = vunpack.c.l.b16 %v3812
  %v4064 = vunpack.c.l.b16 %v3813
  %v4065 = vunpack.c.l.b16 %v3814
  %v4066 = vunpack.c.l.b16 %v3815
  %v4067 = vunpack.c.l.b16 %v3816
  %v4068 = vunpack.c.l.b16 %v3817
  %v4069 = vunpack.c.l.b16 %v3818
  %v4070 = vunpack.c.l.b16 %v3819
  %v4071 = vunpack.c.l.b16 %v3820
  %v4072 = vunpack.c.l.b16 %v3821
  %v4073 = vunpack.c.l.b16 %v3822
  %v4074 = vunpack.c.l.b16 %v3823
  %v4075 = vunpack.c.l.b16 %v3824
  %v4076 = vunpack.c.l.b16 %v3825
  %v4077 = vunpack.c.l.b16 %v3826
  %v4078 = vpack.c.b16 %v4031, %v4030
  %v4079 = vpack.c.b16 %v4033, %v4032
  %v4080 = vpack.c.b16 %v4035, %v4034
  %v4081 = vpack.c.b16 %v4037, %v4036
  %v4082 = vpack.c.b16 %v4039, %v4038
  %v4083 = vpack.c.b16 %v4041, %v4040
  %v4084 = vpack.c.b16 %v4043, %v4042
  %v4085 = vpack.c.b16 %v4045, %v4044
  %v4086 = vpack.c.b16 %v4047, %v4046
  %v4087 = vpack.c.b16 %v4049, %v4048
  %v4088 = vpack.c.b16 %v4051, %v4050
  %v4089 = vpack.c.b16 %v4053, %v4052
  %v4090 = vpack.c.b16 %v4055, %v4054
  %v4091 = vpack.c.b16 %v4057, %v4056
  %v4092 = vpack.c.b16 %v4059, %v4058
  %v4093 = vpack.c.b16 %v4061, %v4060
  %v4094 = vpack.c.b16 %v4063, %v4062
  %v4095 = vpack.c.b16 %v4065, %v4064
  %v4096 = vpack.c.b16 %v4067, %v4066
  %v4097 = vpack.c.b16 %v4069, %v4068
  %v4098 = vpack.c.b16 %v4071, %v4070
  %v4099 = vpack.c.b16 %v4073, %v4072
  %v4100 = vpack.c.b16 %v4075, %v4074
  %v4101 = vpack.c.b16 %v4077, %v4076
  %4126 = vmatpush.bf16.msra.mxu0 %v4085
  %4127 = vmatpush.bf16.msra.mxu0 %v4084
  %4128 = vmatpush.bf16.msra.mxu0 %v4083
  %4129 = vmatpush.bf16.msra.mxu0 %v4082
  %4130 = vmatpush.bf16.msra.mxu0 %v4081
  %4131 = vmatpush.bf16.msra.mxu0 %v4080
  %4132 = vmatpush.bf16.msra.mxu0 %v4079
  %4133 = vmatpush.bf16.msra.mxu0 %v4078
  %4134 = vmatmul.bf16.gmra.mxu0 %v3976
  %v4135 = vpop.f32.mrf.mxu0
  %v4136 = vadd.f32 %v3829, %v4135
  %v4137 = vpop.f32.mrf.mxu0
  %v4138 = vadd.f32 %v3829, %v4137
  %4139 = vdwg.mxu0
  %4140 = vmatpush.bf16.msra.mxu0 %v4093
  %4141 = vmatpush.bf16.msra.mxu0 %v4092
  %4142 = vmatpush.bf16.msra.mxu0 %v4091
  %4143 = vmatpush.bf16.msra.mxu0 %v4090
  %4144 = vmatpush.bf16.msra.mxu0 %v4089
  %4145 = vmatpush.bf16.msra.mxu0 %v4088
  %4146 = vmatpush.bf16.msra.mxu0 %v4087
  %4147 = vmatpush.bf16.msra.mxu0 %v4086
  %4148 = vmatmul.bf16.gmra.mxu0 %v3977
  %v4149 = vpop.f32.mrf.mxu0
  %v4150 = vadd.f32 %v4136, %v4149
  %v4151 = vpop.f32.mrf.mxu0
  %v4152 = vadd.f32 %v4138, %v4151
  %4153 = vdwg.mxu0
  %4154 = vmatpush.bf16.msra.mxu0 %v4101
  %4155 = vmatpush.bf16.msra.mxu0 %v4100
  %4156 = vmatpush.bf16.msra.mxu0 %v4099
  %4157 = vmatpush.bf16.msra.mxu0 %v4098
  %4158 = vmatpush.bf16.msra.mxu0 %v4097
  %4159 = vmatpush.bf16.msra.mxu0 %v4096
  %4160 = vmatpush.bf16.msra.mxu0 %v4095
  %4161 = vmatpush.bf16.msra.mxu0 %v4094
  %4162 = vmatmul.bf16.gmra.mxu0 %v3978
  %v4163 = vpop.f32.mrf.mxu0
  %v4164 = vadd.f32 %v4150, %v4163
  %v4165 = vpop.f32.mrf.mxu0
  %v4166 = vadd.f32 %v4152, %v4165
  %4167 = vdwg.mxu0
  %v4168 = vxor.u32 %v4164, 2147483648
  %v4169 = vxor.u32 %v4166, 2147483648
  %v4170 = vmul.f32 %v4168, 1.442695
  %v4171 = vpow.pop %v4170
  %v4172 = vmul.f32 %v4169, 1.442695
  %v4173 = vpow.pop %v4172
  %v4174 = vadd.f32 %v4171, 1.0
  %v4175 = vadd.f32 %v4173, 1.0
  %v4176 = vrcp.pop %v4174
  %v4177 = vmul.f32 %v4174, %v4176
  %v4178 = vsub.f32 1.0, %v4177
  %v4179 = vmul.f32 %v4176, %v4178
  %v4180 = vadd.f32 %v4176, %v4179
  %vm4181 = vweird.f32 %v4174
  %vm4182 = vweird.f32 %v4176
  %vm4183 = vmor %vm4181, %vm4182
  %v4184 = vsel %vm4183, %v4176, %v4180
  %v4185 = vand.u32 2147483647, %v4174
  %vm4186 = vcmp.eq.f32.partialorder %v4185, 8.507059e+37
  %v4187 = vand.u32 %v4174, 2147483648
  %v4188 = vor.u32 1.1754944e-38, %v4187
  %v4189 = vsel %vm4186, %v4188, %v4184
  %v4190 = vmul.f32 1.0, %v4189
  %v4191 = vrcp.pop %v4175
  %v4192 = vmul.f32 %v4175, %v4191
  %v4193 = vsub.f32 1.0, %v4192
  %v4194 = vmul.f32 %v4191, %v4193
  %v4195 = vadd.f32 %v4191, %v4194
  %vm4196 = vweird.f32 %v4175
  %vm4197 = vweird.f32 %v4191
  %vm4198 = vmor %vm4196, %vm4197
  %v4199 = vsel %vm4198, %v4191, %v4195
  %v4200 = vand.u32 2147483647, %v4175
  %vm4201 = vcmp.eq.f32.partialorder %v4200, 8.507059e+37
  %v4202 = vand.u32 %v4175, 2147483648
  %v4203 = vor.u32 1.1754944e-38, %v4202
  %v4204 = vsel %vm4201, %v4203, %v4199
  %v4205 = vmul.f32 1.0, %v4204
  %vm4206 = vcmask 31744
  %4207 = vst.msk [vmem:[%s7] sm:$0xff] %vm4206, %v4190
  %4208 = vst.msk [vmem:[%s7 + $0x8] sm:$0xff] %vm4206, %v4205
  // Predicated region
  $region30: #{textcnn_forward.1} parent=0 // pred_check
    _
  $region31: #{textcnn_forward.1} parent=0 // pred_check_branch
    %4210 = sbr.rel (0) target = $region33
  $region32: #{textcnn_forward.1} parent=0 // pred_region
    _
  $region33: #{textcnn_forward.1} parent=0 // pred_fallthru
    _
  // Predicated region
  $region34: #{textcnn_forward.1} parent=0 // pred_check
    _
  $region35: #{textcnn_forward.1} parent=0 // pred_check_branch
    %4212 = sbr.rel (0) target = $region37
  $region36: #{textcnn_forward.1} parent=0 // pred_region
    _
  $region37: #{textcnn_forward.1} parent=0 // pred_fallthru
    _

</llo_original>
